<compile_context>
chip_gen: v7x
topology: tpu7x:2x2x1
jax: 0.10.0
libtpu: 0.0.40
codegen_flags: <defaults>
</compile_context>

<pallas_src>
import jax
import jax.numpy as jnp
from jax.experimental import pallas as pl
from jax.experimental.pallas import tpu as pltpu


def _pick_tiles_per_step(p, target=16):
    """Largest divisor of p that is <= target (number of (b, s1) tiles per grid step)."""
    tp = 1
    for cand in range(1, min(p, target) + 1):
        if p % cand == 0:
            tp = cand
    return tp


def soft_embedding_forward(tokens, wte_weight, learned, w_mlp, b_mlp, *, tiles_per_step=16):
    """tokens: (B, S1, S2) int32; wte_weight: (V, D); learned: (T, H);
    w_mlp: (V, H) [torch nn.Linear layout]; b_mlp: (V,).  Returns (B, S1, T+S2, D)."""
    B, S1, S2 = tokens.shape
    V, D = wte_weight.shape
    T, H = learned.shape
    assert D == V, "torch.cat along dim 2 requires embedding dim == vocab size"

    out_dtype = wte_weight.dtype
    P = B * S1                                   # total (b, s1) tiles
    TP = _pick_tiles_per_step(P, tiles_per_step)  # tiles handled per grid step
    tok2d = tokens.reshape(P, S2).astype(jnp.int32)

    # Prompt MLP: (T,H)@(H,V)+b is tiny (can't feed a 128x128 / 256x256 MXU), so do it
    # once in plain XLA and pass the resulting (T, D) block to the kernel VMEM-resident.
    mlp_block = (learned @ w_mlp.T + b_mlp).astype(out_dtype)    # (T, V) == (T, D)

    def gather_concat_kernel(tok_ref, mlp_ref, wte_hbm, out_ref, sems):
        # Prompt rows [0, T) of every tile in this step: single lane-dense store of the
        # VMEM-resident MLP block (T=8 is sublane-aligned, D is a multiple of 128).
        out_ref[:, 0:T, :] = jnp.broadcast_to(mlp_ref[...][None], (TP, T, D))

        # Token rows [T, T+S2): TP*S2 row gathers straight from HBM into the output
        # block (no staging buffer).  All copies are issued before any wait so the
        # individual row-copy latencies overlap each other and the prompt-row stores.
        copies = []
        for t in range(TP):                      # static unroll: TP*S2 is small & fixed
            for s in range(S2):
                tok = jnp.clip(tok_ref[t, s], 0, V - 1)   # torch would raise on OOB ids
                cp = pltpu.make_async_copy(
                    wte_hbm.at[pl.ds(tok, 1), :],          # (1, D) row in HBM
                    out_ref.at[t, pl.ds(T + s, 1), :],     # (1, D) row of output tile t
                    sems.at[t, s])
                cp.start()
                copies.append(cp)
        for cp in copies:
            cp.wait()

    out_flat = pl.pallas_call(
        gather_concat_kernel,
        out_shape=jax.ShapeDtypeStruct((P, T + S2, D), out_dtype),
        grid_spec=pltpu.PrefetchScalarGridSpec(
            num_scalar_prefetch=0,
            grid=(P // TP,),
            in_specs=[
                # Only this step's TP*S2 token ids live in SMEM (pipelined per block).
                pl.BlockSpec((TP, S2), lambda p: (p, 0),
                             memory_space=pltpu.MemorySpace.SMEM),
                # Precomputed MLP block: constant index map -> fetched once, stays resident.
                pl.BlockSpec((T, D), lambda p: (0, 0)),
                # Full embedding table stays in HBM; rows gathered by manual DMA.
                pl.BlockSpec(memory_space=pl.ANY),
            ],
            out_specs=pl.BlockSpec((TP, T + S2, D), lambda p: (p, 0, 0)),
            scratch_shapes=[
                pltpu.SemaphoreType.DMA((TP, S2)),   # one sem per in-flight row copy
            ],
        ),
        compiler_params=pltpu.CompilerParams(
            dimension_semantics=("parallel",),       # v7x: split steps across 2 TCs
            vmem_limit_bytes=32 * 1024 * 1024,       # safe on v5e/v6e/v7x at these slabs
        ),
    )(tok2d, mlp_block, wte_weight)

    return out_flat.reshape(B, S1, T + S2, D)


if __name__ == "__main__":
    # Small shapes consistent with the module; D == V is required by the torch concat.
    B, S1, S2 = 2, 3, 8     # tokens are 3-D (forward repeats over dims 0 and 1)
    V = D = 128             # vocab == embed dim; 128 keeps stores/rows lane-dense
    H = 64                  # hidden_size (module default)
    T = 8                   # n_tokens (sublane-aligned prompt length)
    RANDOM_RANGE = 0.5

    key = jax.random.PRNGKey(0)
    k_tok, k_wte, k_learn, k_w, k_b = jax.random.split(key, 5)

    tokens = jax.random.randint(k_tok, (B, S1, S2), 0, V, dtype=jnp.int32)
    wte_weight = jax.random.normal(k_wte, (V, D), dtype=jnp.float32)
    learned = jax.random.uniform(k_learn, (T, H), dtype=jnp.float32,
                                 minval=-RANDOM_RANGE, maxval=RANDOM_RANGE)
    bound = 1.0 / (H ** 0.5)  # torch nn.Linear default init range
    w_mlp = jax.random.uniform(k_w, (V, H), dtype=jnp.float32, minval=-bound, maxval=bound)
    b_mlp = jax.random.uniform(k_b, (V,), dtype=jnp.float32, minval=-bound, maxval=bound)

    out = soft_embedding_forward(tokens, wte_weight, learned, w_mlp, b_mlp)
    out = jax.block_until_ready(out)

    # Pure-JAX reference for correctness.
    ref_input_emb = wte_weight[tokens]                                   # (B, S1, S2, D)
    ref_mlp = learned @ w_mlp.T + b_mlp                                  # (T, V)
    ref_learned = jnp.broadcast_to(ref_mlp, (B, S1, T, V))
    ref = jnp.concatenate([ref_learned, ref_input_emb], axis=2)

    assert out.shape == (B, S1, T + S2, D), out.shape
    assert jnp.allclose(out, ref, atol=1e-5, rtol=1e-5), "mismatch vs reference"
    print("KERNEL_OK")
</pallas_src>

<mosaic_0001>
module attributes {stable_mosaic.version = 11 : i64} {
  func.func @gather_concat_kernel(%arg0: i32, %arg1: memref<6x8xi32, #tpu.memory_space<smem>>, %arg2: memref<8x128xf32, #tpu.memory_space<vmem>>, %arg3: memref<128x128xf32, #tpu.memory_space<any>>, %arg4: memref<6x16x128xf32, #tpu.memory_space<vmem>>, %arg5: memref<6x8x!tpu.dma_semaphore, #tpu.memory_space<semaphore_mem>>) attributes {dimension_semantics = [#tpu.dimension_semantics<parallel>], iteration_bounds = array<i64: 1>, scalar_prefetch = 0 : i64, scratch_operands = 1 : i64, tpu.core_type = #tpu.core_type<tc>, window_params = [{transform_indices = @transform_0, window_bounds = array<i64: 6, 8>}, {pipeline_mode = #tpu.pipeline_mode<synchronous>, transform_indices = @transform_1, window_bounds = array<i64: 8, 128>}, {}, {transform_indices = @transform_3, window_bounds = array<i64: 6, 16, 128>}]} {
    %c0 = arith.constant 0 : index
    %c0_0 = arith.constant 0 : index
    %0 = vector.load %arg2[%c0, %c0_0] : memref<8x128xf32, #tpu.memory_space<vmem>>, vector<8x128xf32>
    %1 = vector.shape_cast %0 : vector<8x128xf32> to vector<1x8x128xf32>
    %2 = vector.shape_cast %1 : vector<1x8x128xf32> to vector<1x8x128xf32>
    %3 = vector.broadcast %2 : vector<1x8x128xf32> to vector<6x8x128xf32>
    %c0_1 = arith.constant 0 : index
    %c0_2 = arith.constant 0 : index
    %c0_3 = arith.constant 0 : index
    %4 = vector.load %arg4[%c0_1, %c0_2, %c0_3] : memref<6x16x128xf32, #tpu.memory_space<vmem>>, vector<6x8x128xf32>
    tpu.vector_store %arg4[%c0_1, %c0_2, %c0_3], %3 {strides = array<i32>} : memref<6x16x128xf32, #tpu.memory_space<vmem>>, vector<6x8x128xf32>,
    %c0_4 = arith.constant 0 : index
    %c0_5 = arith.constant 0 : index
    %5 = memref.load %arg1[%c0_4, %c0_5] : memref<6x8xi32, #tpu.memory_space<smem>>
    %c0_i32 = arith.constant 0 : i32
    %c127_i32 = arith.constant 127 : i32
    %6 = arith.maxsi %c0_i32, %5 : i32
    %7 = arith.minsi %c127_i32, %6 : i32
    %c0_i32_6 = arith.constant 0 : i32
    %c0_i32_7 = arith.constant 0 : i32
    %c0_i32_8 = arith.constant 0 : i32
    %c0_i32_9 = arith.constant 0 : i32
    %8 = tpu.memref_slice %arg3[%7, %c0_i32_9] : memref<128x128xf32, #tpu.memory_space<any>> -> memref<1x128xf32, #tpu.memory_space<any>>
    %c8_i32 = arith.constant 8 : i32
    %c0_i32_10 = arith.constant 0 : i32
    %9 = tpu.memref_slice %arg4[%c0_i32_6, %c8_i32, %c0_i32_10] : memref<6x16x128xf32, #tpu.memory_space<vmem>> -> memref<1x1x128xf32, #tpu.memory_space<vmem>>
    %10 = tpu.memref_squeeze %9 : memref<1x1x128xf32, #tpu.memory_space<vmem>> -> memref<1x128xf32, #tpu.memory_space<vmem>>
    %11 = tpu.memref_slice %arg5[%c0_i32_7, %c0_i32_8] : memref<6x8x!tpu.dma_semaphore, #tpu.memory_space<semaphore_mem>> -> memref<1x1x!tpu.dma_semaphore, #tpu.memory_space<semaphore_mem>>
    %12 = tpu.memref_squeeze %11 : memref<1x1x!tpu.dma_semaphore, #tpu.memory_space<semaphore_mem>> -> memref<!tpu.dma_semaphore, #tpu.memory_space<semaphore_mem>>
    tpu.enqueue_dma source(%8 : memref<1x128xf32, #tpu.memory_space<any>>) target(%10 : memref<1x128xf32, #tpu.memory_space<vmem>>) target_semaphore(%12 : memref<!tpu.dma_semaphore, #tpu.memory_space<semaphore_mem>>)
    %c0_11 = arith.constant 0 : index
    %c1 = arith.constant 1 : index
    %13 = memref.load %arg1[%c0_11, %c1] : memref<6x8xi32, #tpu.memory_space<smem>>
    %c0_i32_12 = arith.constant 0 : i32
    %c127_i32_13 = arith.constant 127 : i32
    %14 = arith.maxsi %c0_i32_12, %13 : i32
    %15 = arith.minsi %c127_i32_13, %14 : i32
    %c0_i32_14 = arith.constant 0 : i32
    %c0_i32_15 = arith.constant 0 : i32
    %c1_i32 = arith.constant 1 : i32
    %c0_i32_16 = arith.constant 0 : i32
    %16 = tpu.memref_slice %arg3[%15, %c0_i32_16] : memref<128x128xf32, #tpu.memory_space<any>> -> memref<1x128xf32, #tpu.memory_space<any>>
    %c9_i32 = arith.constant 9 : i32
    %c0_i32_17 = arith.constant 0 : i32
    %17 = tpu.memref_slice %arg4[%c0_i32_14, %c9_i32, %c0_i32_17] : memref<6x16x128xf32, #tpu.memory_space<vmem>> -> memref<1x1x128xf32, #tpu.memory_space<vmem>>
    %18 = tpu.memref_squeeze %17 : memref<1x1x128xf32, #tpu.memory_space<vmem>> -> memref<1x128xf32, #tpu.memory_space<vmem>>
    %19 = tpu.memref_slice %arg5[%c0_i32_15, %c1_i32] : memref<6x8x!tpu.dma_semaphore, #tpu.memory_space<semaphore_mem>> -> memref<1x1x!tpu.dma_semaphore, #tpu.memory_space<semaphore_mem>>
    %20 = tpu.memref_squeeze %19 : memref<1x1x!tpu.dma_semaphore, #tpu.memory_space<semaphore_mem>> -> memref<!tpu.dma_semaphore, #tpu.memory_space<semaphore_mem>>
    tpu.enqueue_dma source(%16 : memref<1x128xf32, #tpu.memory_space<any>>) target(%18 : memref<1x128xf32, #tpu.memory_space<vmem>>) target_semaphore(%20 : memref<!tpu.dma_semaphore, #tpu.memory_space<semaphore_mem>>)
    %c0_18 = arith.constant 0 : index
    %c2 = arith.constant 2 : index
    %21 = memref.load %arg1[%c0_18, %c2] : memref<6x8xi32, #tpu.memory_space<smem>>
    %c0_i32_19 = arith.constant 0 : i32
    %c127_i32_20 = arith.constant 127 : i32
    %22 = arith.maxsi %c0_i32_19, %21 : i32
    %23 = arith.minsi %c127_i32_20, %22 : i32
    %c0_i32_21 = arith.constant 0 : i32
    %c0_i32_22 = arith.constant 0 : i32
    %c2_i32 = arith.constant 2 : i32
    %c0_i32_23 = arith.constant 0 : i32
    %24 = tpu.memref_slice %arg3[%23, %c0_i32_23] : memref<128x128xf32, #tpu.memory_space<any>> -> memref<1x128xf32, #tpu.memory_space<any>>
    %c10_i32 = arith.constant 10 : i32
    %c0_i32_24 = arith.constant 0 : i32
    %25 = tpu.memref_slice %arg4[%c0_i32_21, %c10_i32, %c0_i32_24] : memref<6x16x128xf32, #tpu.memory_space<vmem>> -> memref<1x1x128xf32, #tpu.memory_space<vmem>>
    %26 = tpu.memref_squeeze %25 : memref<1x1x128xf32, #tpu.memory_space<vmem>> -> memref<1x128xf32, #tpu.memory_space<vmem>>
    %27 = tpu.memref_slice %arg5[%c0_i32_22, %c2_i32] : memref<6x8x!tpu.dma_semaphore, #tpu.memory_space<semaphore_mem>> -> memref<1x1x!tpu.dma_semaphore, #tpu.memory_space<semaphore_mem>>
    %28 = tpu.memref_squeeze %27 : memref<1x1x!tpu.dma_semaphore, #tpu.memory_space<semaphore_mem>> -> memref<!tpu.dma_semaphore, #tpu.memory_space<semaphore_mem>>
    tpu.enqueue_dma source(%24 : memref<1x128xf32, #tpu.memory_space<any>>) target(%26 : memref<1x128xf32, #tpu.memory_space<vmem>>) target_semaphore(%28 : memref<!tpu.dma_semaphore, #tpu.memory_space<semaphore_mem>>)
    %c0_25 = arith.constant 0 : index
    %c3 = arith.constant 3 : index
    %29 = memref.load %arg1[%c0_25, %c3] : memref<6x8xi32, #tpu.memory_space<smem>>
    %c0_i32_26 = arith.constant 0 : i32
    %c127_i32_27 = arith.constant 127 : i32
    %30 = arith.maxsi %c0_i32_26, %29 : i32
    %31 = arith.minsi %c127_i32_27, %30 : i32
    %c0_i32_28 = arith.constant 0 : i32
    %c0_i32_29 = arith.constant 0 : i32
    %c3_i32 = arith.constant 3 : i32
    %c0_i32_30 = arith.constant 0 : i32
    %32 = tpu.memref_slice %arg3[%31, %c0_i32_30] : memref<128x128xf32, #tpu.memory_space<any>> -> memref<1x128xf32, #tpu.memory_space<any>>
    %c11_i32 = arith.constant 11 : i32
    %c0_i32_31 = arith.constant 0 : i32
    %33 = tpu.memref_slice %arg4[%c0_i32_28, %c11_i32, %c0_i32_31] : memref<6x16x128xf32, #tpu.memory_space<vmem>> -> memref<1x1x128xf32, #tpu.memory_space<vmem>>
    %34 = tpu.memref_squeeze %33 : memref<1x1x128xf32, #tpu.memory_space<vmem>> -> memref<1x128xf32, #tpu.memory_space<vmem>>
    %35 = tpu.memref_slice %arg5[%c0_i32_29, %c3_i32] : memref<6x8x!tpu.dma_semaphore, #tpu.memory_space<semaphore_mem>> -> memref<1x1x!tpu.dma_semaphore, #tpu.memory_space<semaphore_mem>>
    %36 = tpu.memref_squeeze %35 : memref<1x1x!tpu.dma_semaphore, #tpu.memory_space<semaphore_mem>> -> memref<!tpu.dma_semaphore, #tpu.memory_space<semaphore_mem>>
    tpu.enqueue_dma source(%32 : memref<1x128xf32, #tpu.memory_space<any>>) target(%34 : memref<1x128xf32, #tpu.memory_space<vmem>>) target_semaphore(%36 : memref<!tpu.dma_semaphore, #tpu.memory_space<semaphore_mem>>)
    %c0_32 = arith.constant 0 : index
    %c4 = arith.constant 4 : index
    %37 = memref.load %arg1[%c0_32, %c4] : memref<6x8xi32, #tpu.memory_space<smem>>
    %c0_i32_33 = arith.constant 0 : i32
    %c127_i32_34 = arith.constant 127 : i32
    %38 = arith.maxsi %c0_i32_33, %37 : i32
    %39 = arith.minsi %c127_i32_34, %38 : i32
    %c0_i32_35 = arith.constant 0 : i32
    %c0_i32_36 = arith.constant 0 : i32
    %c4_i32 = arith.constant 4 : i32
    %c0_i32_37 = arith.constant 0 : i32
    %40 = tpu.memref_slice %arg3[%39, %c0_i32_37] : memref<128x128xf32, #tpu.memory_space<any>> -> memref<1x128xf32, #tpu.memory_space<any>>
    %c12_i32 = arith.constant 12 : i32
    %c0_i32_38 = arith.constant 0 : i32
    %41 = tpu.memref_slice %arg4[%c0_i32_35, %c12_i32, %c0_i32_38] : memref<6x16x128xf32, #tpu.memory_space<vmem>> -> memref<1x1x128xf32, #tpu.memory_space<vmem>>
    %42 = tpu.memref_squeeze %41 : memref<1x1x128xf32, #tpu.memory_space<vmem>> -> memref<1x128xf32, #tpu.memory_space<vmem>>
    %43 = tpu.memref_slice %arg5[%c0_i32_36, %c4_i32] : memref<6x8x!tpu.dma_semaphore, #tpu.memory_space<semaphore_mem>> -> memref<1x1x!tpu.dma_semaphore, #tpu.memory_space<semaphore_mem>>
    %44 = tpu.memref_squeeze %43 : memref<1x1x!tpu.dma_semaphore, #tpu.memory_space<semaphore_mem>> -> memref<!tpu.dma_semaphore, #tpu.memory_space<semaphore_mem>>
    tpu.enqueue_dma source(%40 : memref<1x128xf32, #tpu.memory_space<any>>) target(%42 : memref<1x128xf32, #tpu.memory_space<vmem>>) target_semaphore(%44 : memref<!tpu.dma_semaphore, #tpu.memory_space<semaphore_mem>>)
    %c0_39 = arith.constant 0 : index
    %c5 = arith.constant 5 : index
    %45 = memref.load %arg1[%c0_39, %c5] : memref<6x8xi32, #tpu.memory_space<smem>>
    %c0_i32_40 = arith.constant 0 : i32
    %c127_i32_41 = arith.constant 127 : i32
    %46 = arith.maxsi %c0_i32_40, %45 : i32
    %47 = arith.minsi %c127_i32_41, %46 : i32
    %c0_i32_42 = arith.constant 0 : i32
    %c0_i32_43 = arith.constant 0 : i32
    %c5_i32 = arith.constant 5 : i32
    %c0_i32_44 = arith.constant 0 : i32
    %48 = tpu.memref_slice %arg3[%47, %c0_i32_44] : memref<128x128xf32, #tpu.memory_space<any>> -> memref<1x128xf32, #tpu.memory_space<any>>
    %c13_i32 = arith.constant 13 : i32
    %c0_i32_45 = arith.constant 0 : i32
    %49 = tpu.memref_slice %arg4[%c0_i32_42, %c13_i32, %c0_i32_45] : memref<6x16x128xf32, #tpu.memory_space<vmem>> -> memref<1x1x128xf32, #tpu.memory_space<vmem>>
    %50 = tpu.memref_squeeze %49 : memref<1x1x128xf32, #tpu.memory_space<vmem>> -> memref<1x128xf32, #tpu.memory_space<vmem>>
    %51 = tpu.memref_slice %arg5[%c0_i32_43, %c5_i32] : memref<6x8x!tpu.dma_semaphore, #tpu.memory_space<semaphore_mem>> -> memref<1x1x!tpu.dma_semaphore, #tpu.memory_space<semaphore_mem>>
    %52 = tpu.memref_squeeze %51 : memref<1x1x!tpu.dma_semaphore, #tpu.memory_space<semaphore_mem>> -> memref<!tpu.dma_semaphore, #tpu.memory_space<semaphore_mem>>
    tpu.enqueue_dma source(%48 : memref<1x128xf32, #tpu.memory_space<any>>) target(%50 : memref<1x128xf32, #tpu.memory_space<vmem>>) target_semaphore(%52 : memref<!tpu.dma_semaphore, #tpu.memory_space<semaphore_mem>>)
    %c0_46 = arith.constant 0 : index
    %c6 = arith.constant 6 : index
    %53 = memref.load %arg1[%c0_46, %c6] : memref<6x8xi32, #tpu.memory_space<smem>>
    %c0_i32_47 = arith.constant 0 : i32
    %c127_i32_48 = arith.constant 127 : i32
    %54 = arith.maxsi %c0_i32_47, %53 : i32
    %55 = arith.minsi %c127_i32_48, %54 : i32
    %c0_i32_49 = arith.constant 0 : i32
    %c0_i32_50 = arith.constant 0 : i32
    %c6_i32 = arith.constant 6 : i32
    %c0_i32_51 = arith.constant 0 : i32
    %56 = tpu.memref_slice %arg3[%55, %c0_i32_51] : memref<128x128xf32, #tpu.memory_space<any>> -> memref<1x128xf32, #tpu.memory_space<any>>
    %c14_i32 = arith.constant 14 : i32
    %c0_i32_52 = arith.constant 0 : i32
    %57 = tpu.memref_slice %arg4[%c0_i32_49, %c14_i32, %c0_i32_52] : memref<6x16x128xf32, #tpu.memory_space<vmem>> -> memref<1x1x128xf32, #tpu.memory_space<vmem>>
    %58 = tpu.memref_squeeze %57 : memref<1x1x128xf32, #tpu.memory_space<vmem>> -> memref<1x128xf32, #tpu.memory_space<vmem>>
    %59 = tpu.memref_slice %arg5[%c0_i32_50, %c6_i32] : memref<6x8x!tpu.dma_semaphore, #tpu.memory_space<semaphore_mem>> -> memref<1x1x!tpu.dma_semaphore, #tpu.memory_space<semaphore_mem>>
    %60 = tpu.memref_squeeze %59 : memref<1x1x!tpu.dma_semaphore, #tpu.memory_space<semaphore_mem>> -> memref<!tpu.dma_semaphore, #tpu.memory_space<semaphore_mem>>
    tpu.enqueue_dma source(%56 : memref<1x128xf32, #tpu.memory_space<any>>) target(%58 : memref<1x128xf32, #tpu.memory_space<vmem>>) target_semaphore(%60 : memref<!tpu.dma_semaphore, #tpu.memory_space<semaphore_mem>>)
    %c0_53 = arith.constant 0 : index
    %c7 = arith.constant 7 : index
    %61 = memref.load %arg1[%c0_53, %c7] : memref<6x8xi32, #tpu.memory_space<smem>>
    %c0_i32_54 = arith.constant 0 : i32
    %c127_i32_55 = arith.constant 127 : i32
    %62 = arith.maxsi %c0_i32_54, %61 : i32
    %63 = arith.minsi %c127_i32_55, %62 : i32
    %c0_i32_56 = arith.constant 0 : i32
    %c0_i32_57 = arith.constant 0 : i32
    %c7_i32 = arith.constant 7 : i32
    %c0_i32_58 = arith.constant 0 : i32
    %64 = tpu.memref_slice %arg3[%63, %c0_i32_58] : memref<128x128xf32, #tpu.memory_space<any>> -> memref<1x128xf32, #tpu.memory_space<any>>
    %c15_i32 = arith.constant 15 : i32
    %c0_i32_59 = arith.constant 0 : i32
    %65 = tpu.memref_slice %arg4[%c0_i32_56, %c15_i32, %c0_i32_59] : memref<6x16x128xf32, #tpu.memory_space<vmem>> -> memref<1x1x128xf32, #tpu.memory_space<vmem>>
    %66 = tpu.memref_squeeze %65 : memref<1x1x128xf32, #tpu.memory_space<vmem>> -> memref<1x128xf32, #tpu.memory_space<vmem>>
    %67 = tpu.memref_slice %arg5[%c0_i32_57, %c7_i32] : memref<6x8x!tpu.dma_semaphore, #tpu.memory_space<semaphore_mem>> -> memref<1x1x!tpu.dma_semaphore, #tpu.memory_space<semaphore_mem>>
    %68 = tpu.memref_squeeze %67 : memref<1x1x!tpu.dma_semaphore, #tpu.memory_space<semaphore_mem>> -> memref<!tpu.dma_semaphore, #tpu.memory_space<semaphore_mem>>
    tpu.enqueue_dma source(%64 : memref<1x128xf32, #tpu.memory_space<any>>) target(%66 : memref<1x128xf32, #tpu.memory_space<vmem>>) target_semaphore(%68 : memref<!tpu.dma_semaphore, #tpu.memory_space<semaphore_mem>>)
    %c1_60 = arith.constant 1 : index
    %c0_61 = arith.constant 0 : index
    %69 = memref.load %arg1[%c1_60, %c0_61] : memref<6x8xi32, #tpu.memory_space<smem>>
    %c0_i32_62 = arith.constant 0 : i32
    %c127_i32_63 = arith.constant 127 : i32
    %70 = arith.maxsi %c0_i32_62, %69 : i32
    %71 = arith.minsi %c127_i32_63, %70 : i32
    %c1_i32_64 = arith.constant 1 : i32
    %c1_i32_65 = arith.constant 1 : i32
    %c0_i32_66 = arith.constant 0 : i32
    %c0_i32_67 = arith.constant 0 : i32
    %72 = tpu.memref_slice %arg3[%71, %c0_i32_67] : memref<128x128xf32, #tpu.memory_space<any>> -> memref<1x128xf32, #tpu.memory_space<any>>
    %c8_i32_68 = arith.constant 8 : i32
    %c0_i32_69 = arith.constant 0 : i32
    %73 = tpu.memref_slice %arg4[%c1_i32_64, %c8_i32_68, %c0_i32_69] : memref<6x16x128xf32, #tpu.memory_space<vmem>> -> memref<1x1x128xf32, #tpu.memory_space<vmem>>
    %74 = tpu.memref_squeeze %73 : memref<1x1x128xf32, #tpu.memory_space<vmem>> -> memref<1x128xf32, #tpu.memory_space<vmem>>
    %75 = tpu.memref_slice %arg5[%c1_i32_65, %c0_i32_66] : memref<6x8x!tpu.dma_semaphore, #tpu.memory_space<semaphore_mem>> -> memref<1x1x!tpu.dma_semaphore, #tpu.memory_space<semaphore_mem>>
    %76 = tpu.memref_squeeze %75 : memref<1x1x!tpu.dma_semaphore, #tpu.memory_space<semaphore_mem>> -> memref<!tpu.dma_semaphore, #tpu.memory_space<semaphore_mem>>
    tpu.enqueue_dma source(%72 : memref<1x128xf32, #tpu.memory_space<any>>) target(%74 : memref<1x128xf32, #tpu.memory_space<vmem>>) target_semaphore(%76 : memref<!tpu.dma_semaphore, #tpu.memory_space<semaphore_mem>>)
    %c1_70 = arith.constant 1 : index
    %c1_71 = arith.constant 1 : index
    %77 = memref.load %arg1[%c1_70, %c1_71] : memref<6x8xi32, #tpu.memory_space<smem>>
    %c0_i32_72 = arith.constant 0 : i32
    %c127_i32_73 = arith.constant 127 : i32
    %78 = arith.maxsi %c0_i32_72, %77 : i32
    %79 = arith.minsi %c127_i32_73, %78 : i32
    %c1_i32_74 = arith.constant 1 : i32
    %c1_i32_75 = arith.constant 1 : i32
    %c1_i32_76 = arith.constant 1 : i32
    %c0_i32_77 = arith.constant 0 : i32
    %80 = tpu.memref_slice %arg3[%79, %c0_i32_77] : memref<128x128xf32, #tpu.memory_space<any>> -> memref<1x128xf32, #tpu.memory_space<any>>
    %c9_i32_78 = arith.constant 9 : i32
    %c0_i32_79 = arith.constant 0 : i32
    %81 = tpu.memref_slice %arg4[%c1_i32_74, %c9_i32_78, %c0_i32_79] : memref<6x16x128xf32, #tpu.memory_space<vmem>> -> memref<1x1x128xf32, #tpu.memory_space<vmem>>
    %82 = tpu.memref_squeeze %81 : memref<1x1x128xf32, #tpu.memory_space<vmem>> -> memref<1x128xf32, #tpu.memory_space<vmem>>
    %83 = tpu.memref_slice %arg5[%c1_i32_75, %c1_i32_76] : memref<6x8x!tpu.dma_semaphore, #tpu.memory_space<semaphore_mem>> -> memref<1x1x!tpu.dma_semaphore, #tpu.memory_space<semaphore_mem>>
    %84 = tpu.memref_squeeze %83 : memref<1x1x!tpu.dma_semaphore, #tpu.memory_space<semaphore_mem>> -> memref<!tpu.dma_semaphore, #tpu.memory_space<semaphore_mem>>
    tpu.enqueue_dma source(%80 : memref<1x128xf32, #tpu.memory_space<any>>) target(%82 : memref<1x128xf32, #tpu.memory_space<vmem>>) target_semaphore(%84 : memref<!tpu.dma_semaphore, #tpu.memory_space<semaphore_mem>>)
    %c1_80 = arith.constant 1 : index
    %c2_81 = arith.constant 2 : index
    %85 = memref.load %arg1[%c1_80, %c2_81] : memref<6x8xi32, #tpu.memory_space<smem>>
    %c0_i32_82 = arith.constant 0 : i32
    %c127_i32_83 = arith.constant 127 : i32
    %86 = arith.maxsi %c0_i32_82, %85 : i32
    %87 = arith.minsi %c127_i32_83, %86 : i32
    %c1_i32_84 = arith.constant 1 : i32
    %c1_i32_85 = arith.constant 1 : i32
    %c2_i32_86 = arith.constant 2 : i32
    %c0_i32_87 = arith.constant 0 : i32
    %88 = tpu.memref_slice %arg3[%87, %c0_i32_87] : memref<128x128xf32, #tpu.memory_space<any>> -> memref<1x128xf32, #tpu.memory_space<any>>
    %c10_i32_88 = arith.constant 10 : i32
    %c0_i32_89 = arith.constant 0 : i32
    %89 = tpu.memref_slice %arg4[%c1_i32_84, %c10_i32_88, %c0_i32_89] : memref<6x16x128xf32, #tpu.memory_space<vmem>> -> memref<1x1x128xf32, #tpu.memory_space<vmem>>
    %90 = tpu.memref_squeeze %89 : memref<1x1x128xf32, #tpu.memory_space<vmem>> -> memref<1x128xf32, #tpu.memory_space<vmem>>
    %91 = tpu.memref_slice %arg5[%c1_i32_85, %c2_i32_86] : memref<6x8x!tpu.dma_semaphore, #tpu.memory_space<semaphore_mem>> -> memref<1x1x!tpu.dma_semaphore, #tpu.memory_space<semaphore_mem>>
    %92 = tpu.memref_squeeze %91 : memref<1x1x!tpu.dma_semaphore, #tpu.memory_space<semaphore_mem>> -> memref<!tpu.dma_semaphore, #tpu.memory_space<semaphore_mem>>
    tpu.enqueue_dma source(%88 : memref<1x128xf32, #tpu.memory_space<any>>) target(%90 : memref<1x128xf32, #tpu.memory_space<vmem>>) target_semaphore(%92 : memref<!tpu.dma_semaphore, #tpu.memory_space<semaphore_mem>>)
    %c1_90 = arith.constant 1 : index
    %c3_91 = arith.constant 3 : index
    %93 = memref.load %arg1[%c1_90, %c3_91] : memref<6x8xi32, #tpu.memory_space<smem>>
    %c0_i32_92 = arith.constant 0 : i32
    %c127_i32_93 = arith.constant 127 : i32
    %94 = arith.maxsi %c0_i32_92, %93 : i32
    %95 = arith.minsi %c127_i32_93, %94 : i32
    %c1_i32_94 = arith.constant 1 : i32
    %c1_i32_95 = arith.constant 1 : i32
    %c3_i32_96 = arith.constant 3 : i32
    %c0_i32_97 = arith.constant 0 : i32
    %96 = tpu.memref_slice %arg3[%95, %c0_i32_97] : memref<128x128xf32, #tpu.memory_space<any>> -> memref<1x128xf32, #tpu.memory_space<any>>
    %c11_i32_98 = arith.constant 11 : i32
    %c0_i32_99 = arith.constant 0 : i32
    %97 = tpu.memref_slice %arg4[%c1_i32_94, %c11_i32_98, %c0_i32_99] : memref<6x16x128xf32, #tpu.memory_space<vmem>> -> memref<1x1x128xf32, #tpu.memory_space<vmem>>
    %98 = tpu.memref_squeeze %97 : memref<1x1x128xf32, #tpu.memory_space<vmem>> -> memref<1x128xf32, #tpu.memory_space<vmem>>
    %99 = tpu.memref_slice %arg5[%c1_i32_95, %c3_i32_96] : memref<6x8x!tpu.dma_semaphore, #tpu.memory_space<semaphore_mem>> -> memref<1x1x!tpu.dma_semaphore, #tpu.memory_space<semaphore_mem>>
    %100 = tpu.memref_squeeze %99 : memref<1x1x!tpu.dma_semaphore, #tpu.memory_space<semaphore_mem>> -> memref<!tpu.dma_semaphore, #tpu.memory_space<semaphore_mem>>
    tpu.enqueue_dma source(%96 : memref<1x128xf32, #tpu.memory_space<any>>) target(%98 : memref<1x128xf32, #tpu.memory_space<vmem>>) target_semaphore(%100 : memref<!tpu.dma_semaphore, #tpu.memory_space<semaphore_mem>>)
    %c1_100 = arith.constant 1 : index
    %c4_101 = arith.constant 4 : index
    %101 = memref.load %arg1[%c1_100, %c4_101] : memref<6x8xi32, #tpu.memory_space<smem>>
    %c0_i32_102 = arith.constant 0 : i32
    %c127_i32_103 = arith.constant 127 : i32
    %102 = arith.maxsi %c0_i32_102, %101 : i32
    %103 = arith.minsi %c127_i32_103, %102 : i32
    %c1_i32_104 = arith.constant 1 : i32
    %c1_i32_105 = arith.constant 1 : i32
    %c4_i32_106 = arith.constant 4 : i32
    %c0_i32_107 = arith.constant 0 : i32
    %104 = tpu.memref_slice %arg3[%103, %c0_i32_107] : memref<128x128xf32, #tpu.memory_space<any>> -> memref<1x128xf32, #tpu.memory_space<any>>
    %c12_i32_108 = arith.constant 12 : i32
    %c0_i32_109 = arith.constant 0 : i32
    %105 = tpu.memref_slice %arg4[%c1_i32_104, %c12_i32_108, %c0_i32_109] : memref<6x16x128xf32, #tpu.memory_space<vmem>> -> memref<1x1x128xf32, #tpu.memory_space<vmem>>
    %106 = tpu.memref_squeeze %105 : memref<1x1x128xf32, #tpu.memory_space<vmem>> -> memref<1x128xf32, #tpu.memory_space<vmem>>
    %107 = tpu.memref_slice %arg5[%c1_i32_105, %c4_i32_106] : memref<6x8x!tpu.dma_semaphore, #tpu.memory_space<semaphore_mem>> -> memref<1x1x!tpu.dma_semaphore, #tpu.memory_space<semaphore_mem>>
    %108 = tpu.memref_squeeze %107 : memref<1x1x!tpu.dma_semaphore, #tpu.memory_space<semaphore_mem>> -> memref<!tpu.dma_semaphore, #tpu.memory_space<semaphore_mem>>
    tpu.enqueue_dma source(%104 : memref<1x128xf32, #tpu.memory_space<any>>) target(%106 : memref<1x128xf32, #tpu.memory_space<vmem>>) target_semaphore(%108 : memref<!tpu.dma_semaphore, #tpu.memory_space<semaphore_mem>>)
    %c1_110 = arith.constant 1 : index
    %c5_111 = arith.constant 5 : index
    %109 = memref.load %arg1[%c1_110, %c5_111] : memref<6x8xi32, #tpu.memory_space<smem>>
    %c0_i32_112 = arith.constant 0 : i32
    %c127_i32_113 = arith.constant 127 : i32
    %110 = arith.maxsi %c0_i32_112, %109 : i32
    %111 = arith.minsi %c127_i32_113, %110 : i32
    %c1_i32_114 = arith.constant 1 : i32
    %c1_i32_115 = arith.constant 1 : i32
    %c5_i32_116 = arith.constant 5 : i32
    %c0_i32_117 = arith.constant 0 : i32
    %112 = tpu.memref_slice %arg3[%111, %c0_i32_117] : memref<128x128xf32, #tpu.memory_space<any>> -> memref<1x128xf32, #tpu.memory_space<any>>
    %c13_i32_118 = arith.constant 13 : i32
    %c0_i32_119 = arith.constant 0 : i32
    %113 = tpu.memref_slice %arg4[%c1_i32_114, %c13_i32_118, %c0_i32_119] : memref<6x16x128xf32, #tpu.memory_space<vmem>> -> memref<1x1x128xf32, #tpu.memory_space<vmem>>
    %114 = tpu.memref_squeeze %113 : memref<1x1x128xf32, #tpu.memory_space<vmem>> -> memref<1x128xf32, #tpu.memory_space<vmem>>
    %115 = tpu.memref_slice %arg5[%c1_i32_115, %c5_i32_116] : memref<6x8x!tpu.dma_semaphore, #tpu.memory_space<semaphore_mem>> -> memref<1x1x!tpu.dma_semaphore, #tpu.memory_space<semaphore_mem>>
    %116 = tpu.memref_squeeze %115 : memref<1x1x!tpu.dma_semaphore, #tpu.memory_space<semaphore_mem>> -> memref<!tpu.dma_semaphore, #tpu.memory_space<semaphore_mem>>
    tpu.enqueue_dma source(%112 : memref<1x128xf32, #tpu.memory_space<any>>) target(%114 : memref<1x128xf32, #tpu.memory_space<vmem>>) target_semaphore(%116 : memref<!tpu.dma_semaphore, #tpu.memory_space<semaphore_mem>>)
    %c1_120 = arith.constant 1 : index
    %c6_121 = arith.constant 6 : index
    %117 = memref.load %arg1[%c1_120, %c6_121] : memref<6x8xi32, #tpu.memory_space<smem>>
    %c0_i32_122 = arith.constant 0 : i32
    %c127_i32_123 = arith.constant 127 : i32
    %118 = arith.maxsi %c0_i32_122, %117 : i32
    %119 = arith.minsi %c127_i32_123, %118 : i32
    %c1_i32_124 = arith.constant 1 : i32
    %c1_i32_125 = arith.constant 1 : i32
    %c6_i32_126 = arith.constant 6 : i32
    %c0_i32_127 = arith.constant 0 : i32
    %120 = tpu.memref_slice %arg3[%119, %c0_i32_127] : memref<128x128xf32, #tpu.memory_space<any>> -> memref<1x128xf32, #tpu.memory_space<any>>
    %c14_i32_128 = arith.constant 14 : i32
    %c0_i32_129 = arith.constant 0 : i32
    %121 = tpu.memref_slice %arg4[%c1_i32_124, %c14_i32_128, %c0_i32_129] : memref<6x16x128xf32, #tpu.memory_space<vmem>> -> memref<1x1x128xf32, #tpu.memory_space<vmem>>
    %122 = tpu.memref_squeeze %121 : memref<1x1x128xf32, #tpu.memory_space<vmem>> -> memref<1x128xf32, #tpu.memory_space<vmem>>
    %123 = tpu.memref_slice %arg5[%c1_i32_125, %c6_i32_126] : memref<6x8x!tpu.dma_semaphore, #tpu.memory_space<semaphore_mem>> -> memref<1x1x!tpu.dma_semaphore, #tpu.memory_space<semaphore_mem>>
    %124 = tpu.memref_squeeze %123 : memref<1x1x!tpu.dma_semaphore, #tpu.memory_space<semaphore_mem>> -> memref<!tpu.dma_semaphore, #tpu.memory_space<semaphore_mem>>
    tpu.enqueue_dma source(%120 : memref<1x128xf32, #tpu.memory_space<any>>) target(%122 : memref<1x128xf32, #tpu.memory_space<vmem>>) target_semaphore(%124 : memref<!tpu.dma_semaphore, #tpu.memory_space<semaphore_mem>>)
    %c1_130 = arith.constant 1 : index
    %c7_131 = arith.constant 7 : index
    %125 = memref.load %arg1[%c1_130, %c7_131] : memref<6x8xi32, #tpu.memory_space<smem>>
    %c0_i32_132 = arith.constant 0 : i32
    %c127_i32_133 = arith.constant 127 : i32
    %126 = arith.maxsi %c0_i32_132, %125 : i32
    %127 = arith.minsi %c127_i32_133, %126 : i32
    %c1_i32_134 = arith.constant 1 : i32
    %c1_i32_135 = arith.constant 1 : i32
    %c7_i32_136 = arith.constant 7 : i32
    %c0_i32_137 = arith.constant 0 : i32
    %128 = tpu.memref_slice %arg3[%127, %c0_i32_137] : memref<128x128xf32, #tpu.memory_space<any>> -> memref<1x128xf32, #tpu.memory_space<any>>
    %c15_i32_138 = arith.constant 15 : i32
    %c0_i32_139 = arith.constant 0 : i32
    %129 = tpu.memref_slice %arg4[%c1_i32_134, %c15_i32_138, %c0_i32_139] : memref<6x16x128xf32, #tpu.memory_space<vmem>> -> memref<1x1x128xf32, #tpu.memory_space<vmem>>
    %130 = tpu.memref_squeeze %129 : memref<1x1x128xf32, #tpu.memory_space<vmem>> -> memref<1x128xf32, #tpu.memory_space<vmem>>
    %131 = tpu.memref_slice %arg5[%c1_i32_135, %c7_i32_136] : memref<6x8x!tpu.dma_semaphore, #tpu.memory_space<semaphore_mem>> -> memref<1x1x!tpu.dma_semaphore, #tpu.memory_space<semaphore_mem>>
    %132 = tpu.memref_squeeze %131 : memref<1x1x!tpu.dma_semaphore, #tpu.memory_space<semaphore_mem>> -> memref<!tpu.dma_semaphore, #tpu.memory_space<semaphore_mem>>
    tpu.enqueue_dma source(%128 : memref<1x128xf32, #tpu.memory_space<any>>) target(%130 : memref<1x128xf32, #tpu.memory_space<vmem>>) target_semaphore(%132 : memref<!tpu.dma_semaphore, #tpu.memory_space<semaphore_mem>>)
    %c2_140 = arith.constant 2 : index
    %c0_141 = arith.constant 0 : index
    %133 = memref.load %arg1[%c2_140, %c0_141] : memref<6x8xi32, #tpu.memory_space<smem>>
    %c0_i32_142 = arith.constant 0 : i32
    %c127_i32_143 = arith.constant 127 : i32
    %134 = arith.maxsi %c0_i32_142, %133 : i32
    %135 = arith.minsi %c127_i32_143, %134 : i32
    %c2_i32_144 = arith.constant 2 : i32
    %c2_i32_145 = arith.constant 2 : i32
    %c0_i32_146 = arith.constant 0 : i32
    %c0_i32_147 = arith.constant 0 : i32
    %136 = tpu.memref_slice %arg3[%135, %c0_i32_147] : memref<128x128xf32, #tpu.memory_space<any>> -> memref<1x128xf32, #tpu.memory_space<any>>
    %c8_i32_148 = arith.constant 8 : i32
    %c0_i32_149 = arith.constant 0 : i32
    %137 = tpu.memref_slice %arg4[%c2_i32_144, %c8_i32_148, %c0_i32_149] : memref<6x16x128xf32, #tpu.memory_space<vmem>> -> memref<1x1x128xf32, #tpu.memory_space<vmem>>
    %138 = tpu.memref_squeeze %137 : memref<1x1x128xf32, #tpu.memory_space<vmem>> -> memref<1x128xf32, #tpu.memory_space<vmem>>
    %139 = tpu.memref_slice %arg5[%c2_i32_145, %c0_i32_146] : memref<6x8x!tpu.dma_semaphore, #tpu.memory_space<semaphore_mem>> -> memref<1x1x!tpu.dma_semaphore, #tpu.memory_space<semaphore_mem>>
    %140 = tpu.memref_squeeze %139 : memref<1x1x!tpu.dma_semaphore, #tpu.memory_space<semaphore_mem>> -> memref<!tpu.dma_semaphore, #tpu.memory_space<semaphore_mem>>
    tpu.enqueue_dma source(%136 : memref<1x128xf32, #tpu.memory_space<any>>) target(%138 : memref<1x128xf32, #tpu.memory_space<vmem>>) target_semaphore(%140 : memref<!tpu.dma_semaphore, #tpu.memory_space<semaphore_mem>>)
    %c2_150 = arith.constant 2 : index
    %c1_151 = arith.constant 1 : index
    %141 = memref.load %arg1[%c2_150, %c1_151] : memref<6x8xi32, #tpu.memory_space<smem>>
    %c0_i32_152 = arith.constant 0 : i32
    %c127_i32_153 = arith.constant 127 : i32
    %142 = arith.maxsi %c0_i32_152, %141 : i32
    %143 = arith.minsi %c127_i32_153, %142 : i32
    %c2_i32_154 = arith.constant 2 : i32
    %c2_i32_155 = arith.constant 2 : i32
    %c1_i32_156 = arith.constant 1 : i32
    %c0_i32_157 = arith.constant 0 : i32
    %144 = tpu.memref_slice %arg3[%143, %c0_i32_157] : memref<128x128xf32, #tpu.memory_space<any>> -> memref<1x128xf32, #tpu.memory_space<any>>
    %c9_i32_158 = arith.constant 9 : i32
    %c0_i32_159 = arith.constant 0 : i32
    %145 = tpu.memref_slice %arg4[%c2_i32_154, %c9_i32_158, %c0_i32_159] : memref<6x16x128xf32, #tpu.memory_space<vmem>> -> memref<1x1x128xf32, #tpu.memory_space<vmem>>
    %146 = tpu.memref_squeeze %145 : memref<1x1x128xf32, #tpu.memory_space<vmem>> -> memref<1x128xf32, #tpu.memory_space<vmem>>
    %147 = tpu.memref_slice %arg5[%c2_i32_155, %c1_i32_156] : memref<6x8x!tpu.dma_semaphore, #tpu.memory_space<semaphore_mem>> -> memref<1x1x!tpu.dma_semaphore, #tpu.memory_space<semaphore_mem>>
    %148 = tpu.memref_squeeze %147 : memref<1x1x!tpu.dma_semaphore, #tpu.memory_space<semaphore_mem>> -> memref<!tpu.dma_semaphore, #tpu.memory_space<semaphore_mem>>
    tpu.enqueue_dma source(%144 : memref<1x128xf32, #tpu.memory_space<any>>) target(%146 : memref<1x128xf32, #tpu.memory_space<vmem>>) target_semaphore(%148 : memref<!tpu.dma_semaphore, #tpu.memory_space<semaphore_mem>>)
    %c2_160 = arith.constant 2 : index
    %c2_161 = arith.constant 2 : index
    %149 = memref.load %arg1[%c2_160, %c2_161] : memref<6x8xi32, #tpu.memory_space<smem>>
    %c0_i32_162 = arith.constant 0 : i32
    %c127_i32_163 = arith.constant 127 : i32
    %150 = arith.maxsi %c0_i32_162, %149 : i32
    %151 = arith.minsi %c127_i32_163, %150 : i32
    %c2_i32_164 = arith.constant 2 : i32
    %c2_i32_165 = arith.constant 2 : i32
    %c2_i32_166 = arith.constant 2 : i32
    %c0_i32_167 = arith.constant 0 : i32
    %152 = tpu.memref_slice %arg3[%151, %c0_i32_167] : memref<128x128xf32, #tpu.memory_space<any>> -> memref<1x128xf32, #tpu.memory_space<any>>
    %c10_i32_168 = arith.constant 10 : i32
    %c0_i32_169 = arith.constant 0 : i32
    %153 = tpu.memref_slice %arg4[%c2_i32_164, %c10_i32_168, %c0_i32_169] : memref<6x16x128xf32, #tpu.memory_space<vmem>> -> memref<1x1x128xf32, #tpu.memory_space<vmem>>
    %154 = tpu.memref_squeeze %153 : memref<1x1x128xf32, #tpu.memory_space<vmem>> -> memref<1x128xf32, #tpu.memory_space<vmem>>
    %155 = tpu.memref_slice %arg5[%c2_i32_165, %c2_i32_166] : memref<6x8x!tpu.dma_semaphore, #tpu.memory_space<semaphore_mem>> -> memref<1x1x!tpu.dma_semaphore, #tpu.memory_space<semaphore_mem>>
    %156 = tpu.memref_squeeze %155 : memref<1x1x!tpu.dma_semaphore, #tpu.memory_space<semaphore_mem>> -> memref<!tpu.dma_semaphore, #tpu.memory_space<semaphore_mem>>
    tpu.enqueue_dma source(%152 : memref<1x128xf32, #tpu.memory_space<any>>) target(%154 : memref<1x128xf32, #tpu.memory_space<vmem>>) target_semaphore(%156 : memref<!tpu.dma_semaphore, #tpu.memory_space<semaphore_mem>>)
    %c2_170 = arith.constant 2 : index
    %c3_171 = arith.constant 3 : index
    %157 = memref.load %arg1[%c2_170, %c3_171] : memref<6x8xi32, #tpu.memory_space<smem>>
    %c0_i32_172 = arith.constant 0 : i32
    %c127_i32_173 = arith.constant 127 : i32
    %158 = arith.maxsi %c0_i32_172, %157 : i32
    %159 = arith.minsi %c127_i32_173, %158 : i32
    %c2_i32_174 = arith.constant 2 : i32
    %c2_i32_175 = arith.constant 2 : i32
    %c3_i32_176 = arith.constant 3 : i32
    %c0_i32_177 = arith.constant 0 : i32
    %160 = tpu.memref_slice %arg3[%159, %c0_i32_177] : memref<128x128xf32, #tpu.memory_space<any>> -> memref<1x128xf32, #tpu.memory_space<any>>
    %c11_i32_178 = arith.constant 11 : i32
    %c0_i32_179 = arith.constant 0 : i32
    %161 = tpu.memref_slice %arg4[%c2_i32_174, %c11_i32_178, %c0_i32_179] : memref<6x16x128xf32, #tpu.memory_space<vmem>> -> memref<1x1x128xf32, #tpu.memory_space<vmem>>
    %162 = tpu.memref_squeeze %161 : memref<1x1x128xf32, #tpu.memory_space<vmem>> -> memref<1x128xf32, #tpu.memory_space<vmem>>
    %163 = tpu.memref_slice %arg5[%c2_i32_175, %c3_i32_176] : memref<6x8x!tpu.dma_semaphore, #tpu.memory_space<semaphore_mem>> -> memref<1x1x!tpu.dma_semaphore, #tpu.memory_space<semaphore_mem>>
    %164 = tpu.memref_squeeze %163 : memref<1x1x!tpu.dma_semaphore, #tpu.memory_space<semaphore_mem>> -> memref<!tpu.dma_semaphore, #tpu.memory_space<semaphore_mem>>
    tpu.enqueue_dma source(%160 : memref<1x128xf32, #tpu.memory_space<any>>) target(%162 : memref<1x128xf32, #tpu.memory_space<vmem>>) target_semaphore(%164 : memref<!tpu.dma_semaphore, #tpu.memory_space<semaphore_mem>>)
    %c2_180 = arith.constant 2 : index
    %c4_181 = arith.constant 4 : index
    %165 = memref.load %arg1[%c2_180, %c4_181] : memref<6x8xi32, #tpu.memory_space<smem>>
    %c0_i32_182 = arith.constant 0 : i32
    %c127_i32_183 = arith.constant 127 : i32
    %166 = arith.maxsi %c0_i32_182, %165 : i32
    %167 = arith.minsi %c127_i32_183, %166 : i32
    %c2_i32_184 = arith.constant 2 : i32
    %c2_i32_185 = arith.constant 2 : i32
    %c4_i32_186 = arith.constant 4 : i32
    %c0_i32_187 = arith.constant 0 : i32
    %168 = tpu.memref_slice %arg3[%167, %c0_i32_187] : memref<128x128xf32, #tpu.memory_space<any>> -> memref<1x128xf32, #tpu.memory_space<any>>
    %c12_i32_188 = arith.constant 12 : i32
    %c0_i32_189 = arith.constant 0 : i32
    %169 = tpu.memref_slice %arg4[%c2_i32_184, %c12_i32_188, %c0_i32_189] : memref<6x16x128xf32, #tpu.memory_space<vmem>> -> memref<1x1x128xf32, #tpu.memory_space<vmem>>
    %170 = tpu.memref_squeeze %169 : memref<1x1x128xf32, #tpu.memory_space<vmem>> -> memref<1x128xf32, #tpu.memory_space<vmem>>
    %171 = tpu.memref_slice %arg5[%c2_i32_185, %c4_i32_186] : memref<6x8x!tpu.dma_semaphore, #tpu.memory_space<semaphore_mem>> -> memref<1x1x!tpu.dma_semaphore, #tpu.memory_space<semaphore_mem>>
    %172 = tpu.memref_squeeze %171 : memref<1x1x!tpu.dma_semaphore, #tpu.memory_space<semaphore_mem>> -> memref<!tpu.dma_semaphore, #tpu.memory_space<semaphore_mem>>
    tpu.enqueue_dma source(%168 : memref<1x128xf32, #tpu.memory_space<any>>) target(%170 : memref<1x128xf32, #tpu.memory_space<vmem>>) target_semaphore(%172 : memref<!tpu.dma_semaphore, #tpu.memory_space<semaphore_mem>>)
    %c2_190 = arith.constant 2 : index
    %c5_191 = arith.constant 5 : index
    %173 = memref.load %arg1[%c2_190, %c5_191] : memref<6x8xi32, #tpu.memory_space<smem>>
    %c0_i32_192 = arith.constant 0 : i32
    %c127_i32_193 = arith.constant 127 : i32
    %174 = arith.maxsi %c0_i32_192, %173 : i32
    %175 = arith.minsi %c127_i32_193, %174 : i32
    %c2_i32_194 = arith.constant 2 : i32
    %c2_i32_195 = arith.constant 2 : i32
    %c5_i32_196 = arith.constant 5 : i32
    %c0_i32_197 = arith.constant 0 : i32
    %176 = tpu.memref_slice %arg3[%175, %c0_i32_197] : memref<128x128xf32, #tpu.memory_space<any>> -> memref<1x128xf32, #tpu.memory_space<any>>
    %c13_i32_198 = arith.constant 13 : i32
    %c0_i32_199 = arith.constant 0 : i32
    %177 = tpu.memref_slice %arg4[%c2_i32_194, %c13_i32_198, %c0_i32_199] : memref<6x16x128xf32, #tpu.memory_space<vmem>> -> memref<1x1x128xf32, #tpu.memory_space<vmem>>
    %178 = tpu.memref_squeeze %177 : memref<1x1x128xf32, #tpu.memory_space<vmem>> -> memref<1x128xf32, #tpu.memory_space<vmem>>
    %179 = tpu.memref_slice %arg5[%c2_i32_195, %c5_i32_196] : memref<6x8x!tpu.dma_semaphore, #tpu.memory_space<semaphore_mem>> -> memref<1x1x!tpu.dma_semaphore, #tpu.memory_space<semaphore_mem>>
    %180 = tpu.memref_squeeze %179 : memref<1x1x!tpu.dma_semaphore, #tpu.memory_space<semaphore_mem>> -> memref<!tpu.dma_semaphore, #tpu.memory_space<semaphore_mem>>
    tpu.enqueue_dma source(%176 : memref<1x128xf32, #tpu.memory_space<any>>) target(%178 : memref<1x128xf32, #tpu.memory_space<vmem>>) target_semaphore(%180 : memref<!tpu.dma_semaphore, #tpu.memory_space<semaphore_mem>>)
    %c2_200 = arith.constant 2 : index
    %c6_201 = arith.constant 6 : index
    %181 = memref.load %arg1[%c2_200, %c6_201] : memref<6x8xi32, #tpu.memory_space<smem>>
    %c0_i32_202 = arith.constant 0 : i32
    %c127_i32_203 = arith.constant 127 : i32
    %182 = arith.maxsi %c0_i32_202, %181 : i32
    %183 = arith.minsi %c127_i32_203, %182 : i32
    %c2_i32_204 = arith.constant 2 : i32
    %c2_i32_205 = arith.constant 2 : i32
    %c6_i32_206 = arith.constant 6 : i32
    %c0_i32_207 = arith.constant 0 : i32
    %184 = tpu.memref_slice %arg3[%183, %c0_i32_207] : memref<128x128xf32, #tpu.memory_space<any>> -> memref<1x128xf32, #tpu.memory_space<any>>
    %c14_i32_208 = arith.constant 14 : i32
    %c0_i32_209 = arith.constant 0 : i32
    %185 = tpu.memref_slice %arg4[%c2_i32_204, %c14_i32_208, %c0_i32_209] : memref<6x16x128xf32, #tpu.memory_space<vmem>> -> memref<1x1x128xf32, #tpu.memory_space<vmem>>
    %186 = tpu.memref_squeeze %185 : memref<1x1x128xf32, #tpu.memory_space<vmem>> -> memref<1x128xf32, #tpu.memory_space<vmem>>
    %187 = tpu.memref_slice %arg5[%c2_i32_205, %c6_i32_206] : memref<6x8x!tpu.dma_semaphore, #tpu.memory_space<semaphore_mem>> -> memref<1x1x!tpu.dma_semaphore, #tpu.memory_space<semaphore_mem>>
    %188 = tpu.memref_squeeze %187 : memref<1x1x!tpu.dma_semaphore, #tpu.memory_space<semaphore_mem>> -> memref<!tpu.dma_semaphore, #tpu.memory_space<semaphore_mem>>
    tpu.enqueue_dma source(%184 : memref<1x128xf32, #tpu.memory_space<any>>) target(%186 : memref<1x128xf32, #tpu.memory_space<vmem>>) target_semaphore(%188 : memref<!tpu.dma_semaphore, #tpu.memory_space<semaphore_mem>>)
    %c2_210 = arith.constant 2 : index
    %c7_211 = arith.constant 7 : index
    %189 = memref.load %arg1[%c2_210, %c7_211] : memref<6x8xi32, #tpu.memory_space<smem>>
    %c0_i32_212 = arith.constant 0 : i32
    %c127_i32_213 = arith.constant 127 : i32
    %190 = arith.maxsi %c0_i32_212, %189 : i32
    %191 = arith.minsi %c127_i32_213, %190 : i32
    %c2_i32_214 = arith.constant 2 : i32
    %c2_i32_215 = arith.constant 2 : i32
    %c7_i32_216 = arith.constant 7 : i32
    %c0_i32_217 = arith.constant 0 : i32
    %192 = tpu.memref_slice %arg3[%191, %c0_i32_217] : memref<128x128xf32, #tpu.memory_space<any>> -> memref<1x128xf32, #tpu.memory_space<any>>
    %c15_i32_218 = arith.constant 15 : i32
    %c0_i32_219 = arith.constant 0 : i32
    %193 = tpu.memref_slice %arg4[%c2_i32_214, %c15_i32_218, %c0_i32_219] : memref<6x16x128xf32, #tpu.memory_space<vmem>> -> memref<1x1x128xf32, #tpu.memory_space<vmem>>
    %194 = tpu.memref_squeeze %193 : memref<1x1x128xf32, #tpu.memory_space<vmem>> -> memref<1x128xf32, #tpu.memory_space<vmem>>
    %195 = tpu.memref_slice %arg5[%c2_i32_215, %c7_i32_216] : memref<6x8x!tpu.dma_semaphore, #tpu.memory_space<semaphore_mem>> -> memref<1x1x!tpu.dma_semaphore, #tpu.memory_space<semaphore_mem>>
    %196 = tpu.memref_squeeze %195 : memref<1x1x!tpu.dma_semaphore, #tpu.memory_space<semaphore_mem>> -> memref<!tpu.dma_semaphore, #tpu.memory_space<semaphore_mem>>
    tpu.enqueue_dma source(%192 : memref<1x128xf32, #tpu.memory_space<any>>) target(%194 : memref<1x128xf32, #tpu.memory_space<vmem>>) target_semaphore(%196 : memref<!tpu.dma_semaphore, #tpu.memory_space<semaphore_mem>>)
    %c3_220 = arith.constant 3 : index
    %c0_221 = arith.constant 0 : index
    %197 = memref.load %arg1[%c3_220, %c0_221] : memref<6x8xi32, #tpu.memory_space<smem>>
    %c0_i32_222 = arith.constant 0 : i32
    %c127_i32_223 = arith.constant 127 : i32
    %198 = arith.maxsi %c0_i32_222, %197 : i32
    %199 = arith.minsi %c127_i32_223, %198 : i32
    %c3_i32_224 = arith.constant 3 : i32
    %c3_i32_225 = arith.constant 3 : i32
    %c0_i32_226 = arith.constant 0 : i32
    %c0_i32_227 = arith.constant 0 : i32
    %200 = tpu.memref_slice %arg3[%199, %c0_i32_227] : memref<128x128xf32, #tpu.memory_space<any>> -> memref<1x128xf32, #tpu.memory_space<any>>
    %c8_i32_228 = arith.constant 8 : i32
    %c0_i32_229 = arith.constant 0 : i32
    %201 = tpu.memref_slice %arg4[%c3_i32_224, %c8_i32_228, %c0_i32_229] : memref<6x16x128xf32, #tpu.memory_space<vmem>> -> memref<1x1x128xf32, #tpu.memory_space<vmem>>
    %202 = tpu.memref_squeeze %201 : memref<1x1x128xf32, #tpu.memory_space<vmem>> -> memref<1x128xf32, #tpu.memory_space<vmem>>
    %203 = tpu.memref_slice %arg5[%c3_i32_225, %c0_i32_226] : memref<6x8x!tpu.dma_semaphore, #tpu.memory_space<semaphore_mem>> -> memref<1x1x!tpu.dma_semaphore, #tpu.memory_space<semaphore_mem>>
    %204 = tpu.memref_squeeze %203 : memref<1x1x!tpu.dma_semaphore, #tpu.memory_space<semaphore_mem>> -> memref<!tpu.dma_semaphore, #tpu.memory_space<semaphore_mem>>
    tpu.enqueue_dma source(%200 : memref<1x128xf32, #tpu.memory_space<any>>) target(%202 : memref<1x128xf32, #tpu.memory_space<vmem>>) target_semaphore(%204 : memref<!tpu.dma_semaphore, #tpu.memory_space<semaphore_mem>>)
    %c3_230 = arith.constant 3 : index
    %c1_231 = arith.constant 1 : index
    %205 = memref.load %arg1[%c3_230, %c1_231] : memref<6x8xi32, #tpu.memory_space<smem>>
    %c0_i32_232 = arith.constant 0 : i32
    %c127_i32_233 = arith.constant 127 : i32
    %206 = arith.maxsi %c0_i32_232, %205 : i32
    %207 = arith.minsi %c127_i32_233, %206 : i32
    %c3_i32_234 = arith.constant 3 : i32
    %c3_i32_235 = arith.constant 3 : i32
    %c1_i32_236 = arith.constant 1 : i32
    %c0_i32_237 = arith.constant 0 : i32
    %208 = tpu.memref_slice %arg3[%207, %c0_i32_237] : memref<128x128xf32, #tpu.memory_space<any>> -> memref<1x128xf32, #tpu.memory_space<any>>
    %c9_i32_238 = arith.constant 9 : i32
    %c0_i32_239 = arith.constant 0 : i32
    %209 = tpu.memref_slice %arg4[%c3_i32_234, %c9_i32_238, %c0_i32_239] : memref<6x16x128xf32, #tpu.memory_space<vmem>> -> memref<1x1x128xf32, #tpu.memory_space<vmem>>
    %210 = tpu.memref_squeeze %209 : memref<1x1x128xf32, #tpu.memory_space<vmem>> -> memref<1x128xf32, #tpu.memory_space<vmem>>
    %211 = tpu.memref_slice %arg5[%c3_i32_235, %c1_i32_236] : memref<6x8x!tpu.dma_semaphore, #tpu.memory_space<semaphore_mem>> -> memref<1x1x!tpu.dma_semaphore, #tpu.memory_space<semaphore_mem>>
    %212 = tpu.memref_squeeze %211 : memref<1x1x!tpu.dma_semaphore, #tpu.memory_space<semaphore_mem>> -> memref<!tpu.dma_semaphore, #tpu.memory_space<semaphore_mem>>
    tpu.enqueue_dma source(%208 : memref<1x128xf32, #tpu.memory_space<any>>) target(%210 : memref<1x128xf32, #tpu.memory_space<vmem>>) target_semaphore(%212 : memref<!tpu.dma_semaphore, #tpu.memory_space<semaphore_mem>>)
    %c3_240 = arith.constant 3 : index
    %c2_241 = arith.constant 2 : index
    %213 = memref.load %arg1[%c3_240, %c2_241] : memref<6x8xi32, #tpu.memory_space<smem>>
    %c0_i32_242 = arith.constant 0 : i32
    %c127_i32_243 = arith.constant 127 : i32
    %214 = arith.maxsi %c0_i32_242, %213 : i32
    %215 = arith.minsi %c127_i32_243, %214 : i32
    %c3_i32_244 = arith.constant 3 : i32
    %c3_i32_245 = arith.constant 3 : i32
    %c2_i32_246 = arith.constant 2 : i32
    %c0_i32_247 = arith.constant 0 : i32
    %216 = tpu.memref_slice %arg3[%215, %c0_i32_247] : memref<128x128xf32, #tpu.memory_space<any>> -> memref<1x128xf32, #tpu.memory_space<any>>
    %c10_i32_248 = arith.constant 10 : i32
    %c0_i32_249 = arith.constant 0 : i32
    %217 = tpu.memref_slice %arg4[%c3_i32_244, %c10_i32_248, %c0_i32_249] : memref<6x16x128xf32, #tpu.memory_space<vmem>> -> memref<1x1x128xf32, #tpu.memory_space<vmem>>
    %218 = tpu.memref_squeeze %217 : memref<1x1x128xf32, #tpu.memory_space<vmem>> -> memref<1x128xf32, #tpu.memory_space<vmem>>
    %219 = tpu.memref_slice %arg5[%c3_i32_245, %c2_i32_246] : memref<6x8x!tpu.dma_semaphore, #tpu.memory_space<semaphore_mem>> -> memref<1x1x!tpu.dma_semaphore, #tpu.memory_space<semaphore_mem>>
    %220 = tpu.memref_squeeze %219 : memref<1x1x!tpu.dma_semaphore, #tpu.memory_space<semaphore_mem>> -> memref<!tpu.dma_semaphore, #tpu.memory_space<semaphore_mem>>
    tpu.enqueue_dma source(%216 : memref<1x128xf32, #tpu.memory_space<any>>) target(%218 : memref<1x128xf32, #tpu.memory_space<vmem>>) target_semaphore(%220 : memref<!tpu.dma_semaphore, #tpu.memory_space<semaphore_mem>>)
    %c3_250 = arith.constant 3 : index
    %c3_251 = arith.constant 3 : index
    %221 = memref.load %arg1[%c3_250, %c3_251] : memref<6x8xi32, #tpu.memory_space<smem>>
    %c0_i32_252 = arith.constant 0 : i32
    %c127_i32_253 = arith.constant 127 : i32
    %222 = arith.maxsi %c0_i32_252, %221 : i32
    %223 = arith.minsi %c127_i32_253, %222 : i32
    %c3_i32_254 = arith.constant 3 : i32
    %c3_i32_255 = arith.constant 3 : i32
    %c3_i32_256 = arith.constant 3 : i32
    %c0_i32_257 = arith.constant 0 : i32
    %224 = tpu.memref_slice %arg3[%223, %c0_i32_257] : memref<128x128xf32, #tpu.memory_space<any>> -> memref<1x128xf32, #tpu.memory_space<any>>
    %c11_i32_258 = arith.constant 11 : i32
    %c0_i32_259 = arith.constant 0 : i32
    %225 = tpu.memref_slice %arg4[%c3_i32_254, %c11_i32_258, %c0_i32_259] : memref<6x16x128xf32, #tpu.memory_space<vmem>> -> memref<1x1x128xf32, #tpu.memory_space<vmem>>
    %226 = tpu.memref_squeeze %225 : memref<1x1x128xf32, #tpu.memory_space<vmem>> -> memref<1x128xf32, #tpu.memory_space<vmem>>
    %227 = tpu.memref_slice %arg5[%c3_i32_255, %c3_i32_256] : memref<6x8x!tpu.dma_semaphore, #tpu.memory_space<semaphore_mem>> -> memref<1x1x!tpu.dma_semaphore, #tpu.memory_space<semaphore_mem>>
    %228 = tpu.memref_squeeze %227 : memref<1x1x!tpu.dma_semaphore, #tpu.memory_space<semaphore_mem>> -> memref<!tpu.dma_semaphore, #tpu.memory_space<semaphore_mem>>
    tpu.enqueue_dma source(%224 : memref<1x128xf32, #tpu.memory_space<any>>) target(%226 : memref<1x128xf32, #tpu.memory_space<vmem>>) target_semaphore(%228 : memref<!tpu.dma_semaphore, #tpu.memory_space<semaphore_mem>>)
    %c3_260 = arith.constant 3 : index
    %c4_261 = arith.constant 4 : index
    %229 = memref.load %arg1[%c3_260, %c4_261] : memref<6x8xi32, #tpu.memory_space<smem>>
    %c0_i32_262 = arith.constant 0 : i32
    %c127_i32_263 = arith.constant 127 : i32
    %230 = arith.maxsi %c0_i32_262, %229 : i32
    %231 = arith.minsi %c127_i32_263, %230 : i32
    %c3_i32_264 = arith.constant 3 : i32
    %c3_i32_265 = arith.constant 3 : i32
    %c4_i32_266 = arith.constant 4 : i32
    %c0_i32_267 = arith.constant 0 : i32
    %232 = tpu.memref_slice %arg3[%231, %c0_i32_267] : memref<128x128xf32, #tpu.memory_space<any>> -> memref<1x128xf32, #tpu.memory_space<any>>
    %c12_i32_268 = arith.constant 12 : i32
    %c0_i32_269 = arith.constant 0 : i32
    %233 = tpu.memref_slice %arg4[%c3_i32_264, %c12_i32_268, %c0_i32_269] : memref<6x16x128xf32, #tpu.memory_space<vmem>> -> memref<1x1x128xf32, #tpu.memory_space<vmem>>
    %234 = tpu.memref_squeeze %233 : memref<1x1x128xf32, #tpu.memory_space<vmem>> -> memref<1x128xf32, #tpu.memory_space<vmem>>
    %235 = tpu.memref_slice %arg5[%c3_i32_265, %c4_i32_266] : memref<6x8x!tpu.dma_semaphore, #tpu.memory_space<semaphore_mem>> -> memref<1x1x!tpu.dma_semaphore, #tpu.memory_space<semaphore_mem>>
    %236 = tpu.memref_squeeze %235 : memref<1x1x!tpu.dma_semaphore, #tpu.memory_space<semaphore_mem>> -> memref<!tpu.dma_semaphore, #tpu.memory_space<semaphore_mem>>
    tpu.enqueue_dma source(%232 : memref<1x128xf32, #tpu.memory_space<any>>) target(%234 : memref<1x128xf32, #tpu.memory_space<vmem>>) target_semaphore(%236 : memref<!tpu.dma_semaphore, #tpu.memory_space<semaphore_mem>>)
    %c3_270 = arith.constant 3 : index
    %c5_271 = arith.constant 5 : index
    %237 = memref.load %arg1[%c3_270, %c5_271] : memref<6x8xi32, #tpu.memory_space<smem>>
    %c0_i32_272 = arith.constant 0 : i32
    %c127_i32_273 = arith.constant 127 : i32
    %238 = arith.maxsi %c0_i32_272, %237 : i32
    %239 = arith.minsi %c127_i32_273, %238 : i32
    %c3_i32_274 = arith.constant 3 : i32
    %c3_i32_275 = arith.constant 3 : i32
    %c5_i32_276 = arith.constant 5 : i32
    %c0_i32_277 = arith.constant 0 : i32
    %240 = tpu.memref_slice %arg3[%239, %c0_i32_277] : memref<128x128xf32, #tpu.memory_space<any>> -> memref<1x128xf32, #tpu.memory_space<any>>
    %c13_i32_278 = arith.constant 13 : i32
    %c0_i32_279 = arith.constant 0 : i32
    %241 = tpu.memref_slice %arg4[%c3_i32_274, %c13_i32_278, %c0_i32_279] : memref<6x16x128xf32, #tpu.memory_space<vmem>> -> memref<1x1x128xf32, #tpu.memory_space<vmem>>
    %242 = tpu.memref_squeeze %241 : memref<1x1x128xf32, #tpu.memory_space<vmem>> -> memref<1x128xf32, #tpu.memory_space<vmem>>
    %243 = tpu.memref_slice %arg5[%c3_i32_275, %c5_i32_276] : memref<6x8x!tpu.dma_semaphore, #tpu.memory_space<semaphore_mem>> -> memref<1x1x!tpu.dma_semaphore, #tpu.memory_space<semaphore_mem>>
    %244 = tpu.memref_squeeze %243 : memref<1x1x!tpu.dma_semaphore, #tpu.memory_space<semaphore_mem>> -> memref<!tpu.dma_semaphore, #tpu.memory_space<semaphore_mem>>
    tpu.enqueue_dma source(%240 : memref<1x128xf32, #tpu.memory_space<any>>) target(%242 : memref<1x128xf32, #tpu.memory_space<vmem>>) target_semaphore(%244 : memref<!tpu.dma_semaphore, #tpu.memory_space<semaphore_mem>>)
    %c3_280 = arith.constant 3 : index
    %c6_281 = arith.constant 6 : index
    %245 = memref.load %arg1[%c3_280, %c6_281] : memref<6x8xi32, #tpu.memory_space<smem>>
    %c0_i32_282 = arith.constant 0 : i32
    %c127_i32_283 = arith.constant 127 : i32
    %246 = arith.maxsi %c0_i32_282, %245 : i32
    %247 = arith.minsi %c127_i32_283, %246 : i32
    %c3_i32_284 = arith.constant 3 : i32
    %c3_i32_285 = arith.constant 3 : i32
    %c6_i32_286 = arith.constant 6 : i32
    %c0_i32_287 = arith.constant 0 : i32
    %248 = tpu.memref_slice %arg3[%247, %c0_i32_287] : memref<128x128xf32, #tpu.memory_space<any>> -> memref<1x128xf32, #tpu.memory_space<any>>
    %c14_i32_288 = arith.constant 14 : i32
    %c0_i32_289 = arith.constant 0 : i32
    %249 = tpu.memref_slice %arg4[%c3_i32_284, %c14_i32_288, %c0_i32_289] : memref<6x16x128xf32, #tpu.memory_space<vmem>> -> memref<1x1x128xf32, #tpu.memory_space<vmem>>
    %250 = tpu.memref_squeeze %249 : memref<1x1x128xf32, #tpu.memory_space<vmem>> -> memref<1x128xf32, #tpu.memory_space<vmem>>
    %251 = tpu.memref_slice %arg5[%c3_i32_285, %c6_i32_286] : memref<6x8x!tpu.dma_semaphore, #tpu.memory_space<semaphore_mem>> -> memref<1x1x!tpu.dma_semaphore, #tpu.memory_space<semaphore_mem>>
    %252 = tpu.memref_squeeze %251 : memref<1x1x!tpu.dma_semaphore, #tpu.memory_space<semaphore_mem>> -> memref<!tpu.dma_semaphore, #tpu.memory_space<semaphore_mem>>
    tpu.enqueue_dma source(%248 : memref<1x128xf32, #tpu.memory_space<any>>) target(%250 : memref<1x128xf32, #tpu.memory_space<vmem>>) target_semaphore(%252 : memref<!tpu.dma_semaphore, #tpu.memory_space<semaphore_mem>>)
    %c3_290 = arith.constant 3 : index
    %c7_291 = arith.constant 7 : index
    %253 = memref.load %arg1[%c3_290, %c7_291] : memref<6x8xi32, #tpu.memory_space<smem>>
    %c0_i32_292 = arith.constant 0 : i32
    %c127_i32_293 = arith.constant 127 : i32
    %254 = arith.maxsi %c0_i32_292, %253 : i32
    %255 = arith.minsi %c127_i32_293, %254 : i32
    %c3_i32_294 = arith.constant 3 : i32
    %c3_i32_295 = arith.constant 3 : i32
    %c7_i32_296 = arith.constant 7 : i32
    %c0_i32_297 = arith.constant 0 : i32
    %256 = tpu.memref_slice %arg3[%255, %c0_i32_297] : memref<128x128xf32, #tpu.memory_space<any>> -> memref<1x128xf32, #tpu.memory_space<any>>
    %c15_i32_298 = arith.constant 15 : i32
    %c0_i32_299 = arith.constant 0 : i32
    %257 = tpu.memref_slice %arg4[%c3_i32_294, %c15_i32_298, %c0_i32_299] : memref<6x16x128xf32, #tpu.memory_space<vmem>> -> memref<1x1x128xf32, #tpu.memory_space<vmem>>
    %258 = tpu.memref_squeeze %257 : memref<1x1x128xf32, #tpu.memory_space<vmem>> -> memref<1x128xf32, #tpu.memory_space<vmem>>
    %259 = tpu.memref_slice %arg5[%c3_i32_295, %c7_i32_296] : memref<6x8x!tpu.dma_semaphore, #tpu.memory_space<semaphore_mem>> -> memref<1x1x!tpu.dma_semaphore, #tpu.memory_space<semaphore_mem>>
    %260 = tpu.memref_squeeze %259 : memref<1x1x!tpu.dma_semaphore, #tpu.memory_space<semaphore_mem>> -> memref<!tpu.dma_semaphore, #tpu.memory_space<semaphore_mem>>
    tpu.enqueue_dma source(%256 : memref<1x128xf32, #tpu.memory_space<any>>) target(%258 : memref<1x128xf32, #tpu.memory_space<vmem>>) target_semaphore(%260 : memref<!tpu.dma_semaphore, #tpu.memory_space<semaphore_mem>>)
    %c4_300 = arith.constant 4 : index
    %c0_301 = arith.constant 0 : index
    %261 = memref.load %arg1[%c4_300, %c0_301] : memref<6x8xi32, #tpu.memory_space<smem>>
    %c0_i32_302 = arith.constant 0 : i32
    %c127_i32_303 = arith.constant 127 : i32
    %262 = arith.maxsi %c0_i32_302, %261 : i32
    %263 = arith.minsi %c127_i32_303, %262 : i32
    %c4_i32_304 = arith.constant 4 : i32
    %c4_i32_305 = arith.constant 4 : i32
    %c0_i32_306 = arith.constant 0 : i32
    %c0_i32_307 = arith.constant 0 : i32
    %264 = tpu.memref_slice %arg3[%263, %c0_i32_307] : memref<128x128xf32, #tpu.memory_space<any>> -> memref<1x128xf32, #tpu.memory_space<any>>
    %c8_i32_308 = arith.constant 8 : i32
    %c0_i32_309 = arith.constant 0 : i32
    %265 = tpu.memref_slice %arg4[%c4_i32_304, %c8_i32_308, %c0_i32_309] : memref<6x16x128xf32, #tpu.memory_space<vmem>> -> memref<1x1x128xf32, #tpu.memory_space<vmem>>
    %266 = tpu.memref_squeeze %265 : memref<1x1x128xf32, #tpu.memory_space<vmem>> -> memref<1x128xf32, #tpu.memory_space<vmem>>
    %267 = tpu.memref_slice %arg5[%c4_i32_305, %c0_i32_306] : memref<6x8x!tpu.dma_semaphore, #tpu.memory_space<semaphore_mem>> -> memref<1x1x!tpu.dma_semaphore, #tpu.memory_space<semaphore_mem>>
    %268 = tpu.memref_squeeze %267 : memref<1x1x!tpu.dma_semaphore, #tpu.memory_space<semaphore_mem>> -> memref<!tpu.dma_semaphore, #tpu.memory_space<semaphore_mem>>
    tpu.enqueue_dma source(%264 : memref<1x128xf32, #tpu.memory_space<any>>) target(%266 : memref<1x128xf32, #tpu.memory_space<vmem>>) target_semaphore(%268 : memref<!tpu.dma_semaphore, #tpu.memory_space<semaphore_mem>>)
    %c4_310 = arith.constant 4 : index
    %c1_311 = arith.constant 1 : index
    %269 = memref.load %arg1[%c4_310, %c1_311] : memref<6x8xi32, #tpu.memory_space<smem>>
    %c0_i32_312 = arith.constant 0 : i32
    %c127_i32_313 = arith.constant 127 : i32
    %270 = arith.maxsi %c0_i32_312, %269 : i32
    %271 = arith.minsi %c127_i32_313, %270 : i32
    %c4_i32_314 = arith.constant 4 : i32
    %c4_i32_315 = arith.constant 4 : i32
    %c1_i32_316 = arith.constant 1 : i32
    %c0_i32_317 = arith.constant 0 : i32
    %272 = tpu.memref_slice %arg3[%271, %c0_i32_317] : memref<128x128xf32, #tpu.memory_space<any>> -> memref<1x128xf32, #tpu.memory_space<any>>
    %c9_i32_318 = arith.constant 9 : i32
    %c0_i32_319 = arith.constant 0 : i32
    %273 = tpu.memref_slice %arg4[%c4_i32_314, %c9_i32_318, %c0_i32_319] : memref<6x16x128xf32, #tpu.memory_space<vmem>> -> memref<1x1x128xf32, #tpu.memory_space<vmem>>
    %274 = tpu.memref_squeeze %273 : memref<1x1x128xf32, #tpu.memory_space<vmem>> -> memref<1x128xf32, #tpu.memory_space<vmem>>
    %275 = tpu.memref_slice %arg5[%c4_i32_315, %c1_i32_316] : memref<6x8x!tpu.dma_semaphore, #tpu.memory_space<semaphore_mem>> -> memref<1x1x!tpu.dma_semaphore, #tpu.memory_space<semaphore_mem>>
    %276 = tpu.memref_squeeze %275 : memref<1x1x!tpu.dma_semaphore, #tpu.memory_space<semaphore_mem>> -> memref<!tpu.dma_semaphore, #tpu.memory_space<semaphore_mem>>
    tpu.enqueue_dma source(%272 : memref<1x128xf32, #tpu.memory_space<any>>) target(%274 : memref<1x128xf32, #tpu.memory_space<vmem>>) target_semaphore(%276 : memref<!tpu.dma_semaphore, #tpu.memory_space<semaphore_mem>>)
    %c4_320 = arith.constant 4 : index
    %c2_321 = arith.constant 2 : index
    %277 = memref.load %arg1[%c4_320, %c2_321] : memref<6x8xi32, #tpu.memory_space<smem>>
    %c0_i32_322 = arith.constant 0 : i32
    %c127_i32_323 = arith.constant 127 : i32
    %278 = arith.maxsi %c0_i32_322, %277 : i32
    %279 = arith.minsi %c127_i32_323, %278 : i32
    %c4_i32_324 = arith.constant 4 : i32
    %c4_i32_325 = arith.constant 4 : i32
    %c2_i32_326 = arith.constant 2 : i32
    %c0_i32_327 = arith.constant 0 : i32
    %280 = tpu.memref_slice %arg3[%279, %c0_i32_327] : memref<128x128xf32, #tpu.memory_space<any>> -> memref<1x128xf32, #tpu.memory_space<any>>
    %c10_i32_328 = arith.constant 10 : i32
    %c0_i32_329 = arith.constant 0 : i32
    %281 = tpu.memref_slice %arg4[%c4_i32_324, %c10_i32_328, %c0_i32_329] : memref<6x16x128xf32, #tpu.memory_space<vmem>> -> memref<1x1x128xf32, #tpu.memory_space<vmem>>
    %282 = tpu.memref_squeeze %281 : memref<1x1x128xf32, #tpu.memory_space<vmem>> -> memref<1x128xf32, #tpu.memory_space<vmem>>
    %283 = tpu.memref_slice %arg5[%c4_i32_325, %c2_i32_326] : memref<6x8x!tpu.dma_semaphore, #tpu.memory_space<semaphore_mem>> -> memref<1x1x!tpu.dma_semaphore, #tpu.memory_space<semaphore_mem>>
    %284 = tpu.memref_squeeze %283 : memref<1x1x!tpu.dma_semaphore, #tpu.memory_space<semaphore_mem>> -> memref<!tpu.dma_semaphore, #tpu.memory_space<semaphore_mem>>
    tpu.enqueue_dma source(%280 : memref<1x128xf32, #tpu.memory_space<any>>) target(%282 : memref<1x128xf32, #tpu.memory_space<vmem>>) target_semaphore(%284 : memref<!tpu.dma_semaphore, #tpu.memory_space<semaphore_mem>>)
    %c4_330 = arith.constant 4 : index
    %c3_331 = arith.constant 3 : index
    %285 = memref.load %arg1[%c4_330, %c3_331] : memref<6x8xi32, #tpu.memory_space<smem>>
    %c0_i32_332 = arith.constant 0 : i32
    %c127_i32_333 = arith.constant 127 : i32
    %286 = arith.maxsi %c0_i32_332, %285 : i32
    %287 = arith.minsi %c127_i32_333, %286 : i32
    %c4_i32_334 = arith.constant 4 : i32
    %c4_i32_335 = arith.constant 4 : i32
    %c3_i32_336 = arith.constant 3 : i32
    %c0_i32_337 = arith.constant 0 : i32
    %288 = tpu.memref_slice %arg3[%287, %c0_i32_337] : memref<128x128xf32, #tpu.memory_space<any>> -> memref<1x128xf32, #tpu.memory_space<any>>
    %c11_i32_338 = arith.constant 11 : i32
    %c0_i32_339 = arith.constant 0 : i32
    %289 = tpu.memref_slice %arg4[%c4_i32_334, %c11_i32_338, %c0_i32_339] : memref<6x16x128xf32, #tpu.memory_space<vmem>> -> memref<1x1x128xf32, #tpu.memory_space<vmem>>
    %290 = tpu.memref_squeeze %289 : memref<1x1x128xf32, #tpu.memory_space<vmem>> -> memref<1x128xf32, #tpu.memory_space<vmem>>
    %291 = tpu.memref_slice %arg5[%c4_i32_335, %c3_i32_336] : memref<6x8x!tpu.dma_semaphore, #tpu.memory_space<semaphore_mem>> -> memref<1x1x!tpu.dma_semaphore, #tpu.memory_space<semaphore_mem>>
    %292 = tpu.memref_squeeze %291 : memref<1x1x!tpu.dma_semaphore, #tpu.memory_space<semaphore_mem>> -> memref<!tpu.dma_semaphore, #tpu.memory_space<semaphore_mem>>
    tpu.enqueue_dma source(%288 : memref<1x128xf32, #tpu.memory_space<any>>) target(%290 : memref<1x128xf32, #tpu.memory_space<vmem>>) target_semaphore(%292 : memref<!tpu.dma_semaphore, #tpu.memory_space<semaphore_mem>>)
    %c4_340 = arith.constant 4 : index
    %c4_341 = arith.constant 4 : index
    %293 = memref.load %arg1[%c4_340, %c4_341] : memref<6x8xi32, #tpu.memory_space<smem>>
    %c0_i32_342 = arith.constant 0 : i32
    %c127_i32_343 = arith.constant 127 : i32
    %294 = arith.maxsi %c0_i32_342, %293 : i32
    %295 = arith.minsi %c127_i32_343, %294 : i32
    %c4_i32_344 = arith.constant 4 : i32
    %c4_i32_345 = arith.constant 4 : i32
    %c4_i32_346 = arith.constant 4 : i32
    %c0_i32_347 = arith.constant 0 : i32
    %296 = tpu.memref_slice %arg3[%295, %c0_i32_347] : memref<128x128xf32, #tpu.memory_space<any>> -> memref<1x128xf32, #tpu.memory_space<any>>
    %c12_i32_348 = arith.constant 12 : i32
    %c0_i32_349 = arith.constant 0 : i32
    %297 = tpu.memref_slice %arg4[%c4_i32_344, %c12_i32_348, %c0_i32_349] : memref<6x16x128xf32, #tpu.memory_space<vmem>> -> memref<1x1x128xf32, #tpu.memory_space<vmem>>
    %298 = tpu.memref_squeeze %297 : memref<1x1x128xf32, #tpu.memory_space<vmem>> -> memref<1x128xf32, #tpu.memory_space<vmem>>
    %299 = tpu.memref_slice %arg5[%c4_i32_345, %c4_i32_346] : memref<6x8x!tpu.dma_semaphore, #tpu.memory_space<semaphore_mem>> -> memref<1x1x!tpu.dma_semaphore, #tpu.memory_space<semaphore_mem>>
    %300 = tpu.memref_squeeze %299 : memref<1x1x!tpu.dma_semaphore, #tpu.memory_space<semaphore_mem>> -> memref<!tpu.dma_semaphore, #tpu.memory_space<semaphore_mem>>
    tpu.enqueue_dma source(%296 : memref<1x128xf32, #tpu.memory_space<any>>) target(%298 : memref<1x128xf32, #tpu.memory_space<vmem>>) target_semaphore(%300 : memref<!tpu.dma_semaphore, #tpu.memory_space<semaphore_mem>>)
    %c4_350 = arith.constant 4 : index
    %c5_351 = arith.constant 5 : index
    %301 = memref.load %arg1[%c4_350, %c5_351] : memref<6x8xi32, #tpu.memory_space<smem>>
    %c0_i32_352 = arith.constant 0 : i32
    %c127_i32_353 = arith.constant 127 : i32
    %302 = arith.maxsi %c0_i32_352, %301 : i32
    %303 = arith.minsi %c127_i32_353, %302 : i32
    %c4_i32_354 = arith.constant 4 : i32
    %c4_i32_355 = arith.constant 4 : i32
    %c5_i32_356 = arith.constant 5 : i32
    %c0_i32_357 = arith.constant 0 : i32
    %304 = tpu.memref_slice %arg3[%303, %c0_i32_357] : memref<128x128xf32, #tpu.memory_space<any>> -> memref<1x128xf32, #tpu.memory_space<any>>
    %c13_i32_358 = arith.constant 13 : i32
    %c0_i32_359 = arith.constant 0 : i32
    %305 = tpu.memref_slice %arg4[%c4_i32_354, %c13_i32_358, %c0_i32_359] : memref<6x16x128xf32, #tpu.memory_space<vmem>> -> memref<1x1x128xf32, #tpu.memory_space<vmem>>
    %306 = tpu.memref_squeeze %305 : memref<1x1x128xf32, #tpu.memory_space<vmem>> -> memref<1x128xf32, #tpu.memory_space<vmem>>
    %307 = tpu.memref_slice %arg5[%c4_i32_355, %c5_i32_356] : memref<6x8x!tpu.dma_semaphore, #tpu.memory_space<semaphore_mem>> -> memref<1x1x!tpu.dma_semaphore, #tpu.memory_space<semaphore_mem>>
    %308 = tpu.memref_squeeze %307 : memref<1x1x!tpu.dma_semaphore, #tpu.memory_space<semaphore_mem>> -> memref<!tpu.dma_semaphore, #tpu.memory_space<semaphore_mem>>
    tpu.enqueue_dma source(%304 : memref<1x128xf32, #tpu.memory_space<any>>) target(%306 : memref<1x128xf32, #tpu.memory_space<vmem>>) target_semaphore(%308 : memref<!tpu.dma_semaphore, #tpu.memory_space<semaphore_mem>>)
    %c4_360 = arith.constant 4 : index
    %c6_361 = arith.constant 6 : index
    %309 = memref.load %arg1[%c4_360, %c6_361] : memref<6x8xi32, #tpu.memory_space<smem>>
    %c0_i32_362 = arith.constant 0 : i32
    %c127_i32_363 = arith.constant 127 : i32
    %310 = arith.maxsi %c0_i32_362, %309 : i32
    %311 = arith.minsi %c127_i32_363, %310 : i32
    %c4_i32_364 = arith.constant 4 : i32
    %c4_i32_365 = arith.constant 4 : i32
    %c6_i32_366 = arith.constant 6 : i32
    %c0_i32_367 = arith.constant 0 : i32
    %312 = tpu.memref_slice %arg3[%311, %c0_i32_367] : memref<128x128xf32, #tpu.memory_space<any>> -> memref<1x128xf32, #tpu.memory_space<any>>
    %c14_i32_368 = arith.constant 14 : i32
    %c0_i32_369 = arith.constant 0 : i32
    %313 = tpu.memref_slice %arg4[%c4_i32_364, %c14_i32_368, %c0_i32_369] : memref<6x16x128xf32, #tpu.memory_space<vmem>> -> memref<1x1x128xf32, #tpu.memory_space<vmem>>
    %314 = tpu.memref_squeeze %313 : memref<1x1x128xf32, #tpu.memory_space<vmem>> -> memref<1x128xf32, #tpu.memory_space<vmem>>
    %315 = tpu.memref_slice %arg5[%c4_i32_365, %c6_i32_366] : memref<6x8x!tpu.dma_semaphore, #tpu.memory_space<semaphore_mem>> -> memref<1x1x!tpu.dma_semaphore, #tpu.memory_space<semaphore_mem>>
    %316 = tpu.memref_squeeze %315 : memref<1x1x!tpu.dma_semaphore, #tpu.memory_space<semaphore_mem>> -> memref<!tpu.dma_semaphore, #tpu.memory_space<semaphore_mem>>
    tpu.enqueue_dma source(%312 : memref<1x128xf32, #tpu.memory_space<any>>) target(%314 : memref<1x128xf32, #tpu.memory_space<vmem>>) target_semaphore(%316 : memref<!tpu.dma_semaphore, #tpu.memory_space<semaphore_mem>>)
    %c4_370 = arith.constant 4 : index
    %c7_371 = arith.constant 7 : index
    %317 = memref.load %arg1[%c4_370, %c7_371] : memref<6x8xi32, #tpu.memory_space<smem>>
    %c0_i32_372 = arith.constant 0 : i32
    %c127_i32_373 = arith.constant 127 : i32
    %318 = arith.maxsi %c0_i32_372, %317 : i32
    %319 = arith.minsi %c127_i32_373, %318 : i32
    %c4_i32_374 = arith.constant 4 : i32
    %c4_i32_375 = arith.constant 4 : i32
    %c7_i32_376 = arith.constant 7 : i32
    %c0_i32_377 = arith.constant 0 : i32
    %320 = tpu.memref_slice %arg3[%319, %c0_i32_377] : memref<128x128xf32, #tpu.memory_space<any>> -> memref<1x128xf32, #tpu.memory_space<any>>
    %c15_i32_378 = arith.constant 15 : i32
    %c0_i32_379 = arith.constant 0 : i32
    %321 = tpu.memref_slice %arg4[%c4_i32_374, %c15_i32_378, %c0_i32_379] : memref<6x16x128xf32, #tpu.memory_space<vmem>> -> memref<1x1x128xf32, #tpu.memory_space<vmem>>
    %322 = tpu.memref_squeeze %321 : memref<1x1x128xf32, #tpu.memory_space<vmem>> -> memref<1x128xf32, #tpu.memory_space<vmem>>
    %323 = tpu.memref_slice %arg5[%c4_i32_375, %c7_i32_376] : memref<6x8x!tpu.dma_semaphore, #tpu.memory_space<semaphore_mem>> -> memref<1x1x!tpu.dma_semaphore, #tpu.memory_space<semaphore_mem>>
    %324 = tpu.memref_squeeze %323 : memref<1x1x!tpu.dma_semaphore, #tpu.memory_space<semaphore_mem>> -> memref<!tpu.dma_semaphore, #tpu.memory_space<semaphore_mem>>
    tpu.enqueue_dma source(%320 : memref<1x128xf32, #tpu.memory_space<any>>) target(%322 : memref<1x128xf32, #tpu.memory_space<vmem>>) target_semaphore(%324 : memref<!tpu.dma_semaphore, #tpu.memory_space<semaphore_mem>>)
    %c5_380 = arith.constant 5 : index
    %c0_381 = arith.constant 0 : index
    %325 = memref.load %arg1[%c5_380, %c0_381] : memref<6x8xi32, #tpu.memory_space<smem>>
    %c0_i32_382 = arith.constant 0 : i32
    %c127_i32_383 = arith.constant 127 : i32
    %326 = arith.maxsi %c0_i32_382, %325 : i32
    %327 = arith.minsi %c127_i32_383, %326 : i32
    %c5_i32_384 = arith.constant 5 : i32
    %c5_i32_385 = arith.constant 5 : i32
    %c0_i32_386 = arith.constant 0 : i32
    %c0_i32_387 = arith.constant 0 : i32
    %328 = tpu.memref_slice %arg3[%327, %c0_i32_387] : memref<128x128xf32, #tpu.memory_space<any>> -> memref<1x128xf32, #tpu.memory_space<any>>
    %c8_i32_388 = arith.constant 8 : i32
    %c0_i32_389 = arith.constant 0 : i32
    %329 = tpu.memref_slice %arg4[%c5_i32_384, %c8_i32_388, %c0_i32_389] : memref<6x16x128xf32, #tpu.memory_space<vmem>> -> memref<1x1x128xf32, #tpu.memory_space<vmem>>
    %330 = tpu.memref_squeeze %329 : memref<1x1x128xf32, #tpu.memory_space<vmem>> -> memref<1x128xf32, #tpu.memory_space<vmem>>
    %331 = tpu.memref_slice %arg5[%c5_i32_385, %c0_i32_386] : memref<6x8x!tpu.dma_semaphore, #tpu.memory_space<semaphore_mem>> -> memref<1x1x!tpu.dma_semaphore, #tpu.memory_space<semaphore_mem>>
    %332 = tpu.memref_squeeze %331 : memref<1x1x!tpu.dma_semaphore, #tpu.memory_space<semaphore_mem>> -> memref<!tpu.dma_semaphore, #tpu.memory_space<semaphore_mem>>
    tpu.enqueue_dma source(%328 : memref<1x128xf32, #tpu.memory_space<any>>) target(%330 : memref<1x128xf32, #tpu.memory_space<vmem>>) target_semaphore(%332 : memref<!tpu.dma_semaphore, #tpu.memory_space<semaphore_mem>>)
    %c5_390 = arith.constant 5 : index
    %c1_391 = arith.constant 1 : index
    %333 = memref.load %arg1[%c5_390, %c1_391] : memref<6x8xi32, #tpu.memory_space<smem>>
    %c0_i32_392 = arith.constant 0 : i32
    %c127_i32_393 = arith.constant 127 : i32
    %334 = arith.maxsi %c0_i32_392, %333 : i32
    %335 = arith.minsi %c127_i32_393, %334 : i32
    %c5_i32_394 = arith.constant 5 : i32
    %c5_i32_395 = arith.constant 5 : i32
    %c1_i32_396 = arith.constant 1 : i32
    %c0_i32_397 = arith.constant 0 : i32
    %336 = tpu.memref_slice %arg3[%335, %c0_i32_397] : memref<128x128xf32, #tpu.memory_space<any>> -> memref<1x128xf32, #tpu.memory_space<any>>
    %c9_i32_398 = arith.constant 9 : i32
    %c0_i32_399 = arith.constant 0 : i32
    %337 = tpu.memref_slice %arg4[%c5_i32_394, %c9_i32_398, %c0_i32_399] : memref<6x16x128xf32, #tpu.memory_space<vmem>> -> memref<1x1x128xf32, #tpu.memory_space<vmem>>
    %338 = tpu.memref_squeeze %337 : memref<1x1x128xf32, #tpu.memory_space<vmem>> -> memref<1x128xf32, #tpu.memory_space<vmem>>
    %339 = tpu.memref_slice %arg5[%c5_i32_395, %c1_i32_396] : memref<6x8x!tpu.dma_semaphore, #tpu.memory_space<semaphore_mem>> -> memref<1x1x!tpu.dma_semaphore, #tpu.memory_space<semaphore_mem>>
    %340 = tpu.memref_squeeze %339 : memref<1x1x!tpu.dma_semaphore, #tpu.memory_space<semaphore_mem>> -> memref<!tpu.dma_semaphore, #tpu.memory_space<semaphore_mem>>
    tpu.enqueue_dma source(%336 : memref<1x128xf32, #tpu.memory_space<any>>) target(%338 : memref<1x128xf32, #tpu.memory_space<vmem>>) target_semaphore(%340 : memref<!tpu.dma_semaphore, #tpu.memory_space<semaphore_mem>>)
    %c5_400 = arith.constant 5 : index
    %c2_401 = arith.constant 2 : index
    %341 = memref.load %arg1[%c5_400, %c2_401] : memref<6x8xi32, #tpu.memory_space<smem>>
    %c0_i32_402 = arith.constant 0 : i32
    %c127_i32_403 = arith.constant 127 : i32
    %342 = arith.maxsi %c0_i32_402, %341 : i32
    %343 = arith.minsi %c127_i32_403, %342 : i32
    %c5_i32_404 = arith.constant 5 : i32
    %c5_i32_405 = arith.constant 5 : i32
    %c2_i32_406 = arith.constant 2 : i32
    %c0_i32_407 = arith.constant 0 : i32
    %344 = tpu.memref_slice %arg3[%343, %c0_i32_407] : memref<128x128xf32, #tpu.memory_space<any>> -> memref<1x128xf32, #tpu.memory_space<any>>
    %c10_i32_408 = arith.constant 10 : i32
    %c0_i32_409 = arith.constant 0 : i32
    %345 = tpu.memref_slice %arg4[%c5_i32_404, %c10_i32_408, %c0_i32_409] : memref<6x16x128xf32, #tpu.memory_space<vmem>> -> memref<1x1x128xf32, #tpu.memory_space<vmem>>
    %346 = tpu.memref_squeeze %345 : memref<1x1x128xf32, #tpu.memory_space<vmem>> -> memref<1x128xf32, #tpu.memory_space<vmem>>
    %347 = tpu.memref_slice %arg5[%c5_i32_405, %c2_i32_406] : memref<6x8x!tpu.dma_semaphore, #tpu.memory_space<semaphore_mem>> -> memref<1x1x!tpu.dma_semaphore, #tpu.memory_space<semaphore_mem>>
    %348 = tpu.memref_squeeze %347 : memref<1x1x!tpu.dma_semaphore, #tpu.memory_space<semaphore_mem>> -> memref<!tpu.dma_semaphore, #tpu.memory_space<semaphore_mem>>
    tpu.enqueue_dma source(%344 : memref<1x128xf32, #tpu.memory_space<any>>) target(%346 : memref<1x128xf32, #tpu.memory_space<vmem>>) target_semaphore(%348 : memref<!tpu.dma_semaphore, #tpu.memory_space<semaphore_mem>>)
    %c5_410 = arith.constant 5 : index
    %c3_411 = arith.constant 3 : index
    %349 = memref.load %arg1[%c5_410, %c3_411] : memref<6x8xi32, #tpu.memory_space<smem>>
    %c0_i32_412 = arith.constant 0 : i32
    %c127_i32_413 = arith.constant 127 : i32
    %350 = arith.maxsi %c0_i32_412, %349 : i32
    %351 = arith.minsi %c127_i32_413, %350 : i32
    %c5_i32_414 = arith.constant 5 : i32
    %c5_i32_415 = arith.constant 5 : i32
    %c3_i32_416 = arith.constant 3 : i32
    %c0_i32_417 = arith.constant 0 : i32
    %352 = tpu.memref_slice %arg3[%351, %c0_i32_417] : memref<128x128xf32, #tpu.memory_space<any>> -> memref<1x128xf32, #tpu.memory_space<any>>
    %c11_i32_418 = arith.constant 11 : i32
    %c0_i32_419 = arith.constant 0 : i32
    %353 = tpu.memref_slice %arg4[%c5_i32_414, %c11_i32_418, %c0_i32_419] : memref<6x16x128xf32, #tpu.memory_space<vmem>> -> memref<1x1x128xf32, #tpu.memory_space<vmem>>
    %354 = tpu.memref_squeeze %353 : memref<1x1x128xf32, #tpu.memory_space<vmem>> -> memref<1x128xf32, #tpu.memory_space<vmem>>
    %355 = tpu.memref_slice %arg5[%c5_i32_415, %c3_i32_416] : memref<6x8x!tpu.dma_semaphore, #tpu.memory_space<semaphore_mem>> -> memref<1x1x!tpu.dma_semaphore, #tpu.memory_space<semaphore_mem>>
    %356 = tpu.memref_squeeze %355 : memref<1x1x!tpu.dma_semaphore, #tpu.memory_space<semaphore_mem>> -> memref<!tpu.dma_semaphore, #tpu.memory_space<semaphore_mem>>
    tpu.enqueue_dma source(%352 : memref<1x128xf32, #tpu.memory_space<any>>) target(%354 : memref<1x128xf32, #tpu.memory_space<vmem>>) target_semaphore(%356 : memref<!tpu.dma_semaphore, #tpu.memory_space<semaphore_mem>>)
    %c5_420 = arith.constant 5 : index
    %c4_421 = arith.constant 4 : index
    %357 = memref.load %arg1[%c5_420, %c4_421] : memref<6x8xi32, #tpu.memory_space<smem>>
    %c0_i32_422 = arith.constant 0 : i32
    %c127_i32_423 = arith.constant 127 : i32
    %358 = arith.maxsi %c0_i32_422, %357 : i32
    %359 = arith.minsi %c127_i32_423, %358 : i32
    %c5_i32_424 = arith.constant 5 : i32
    %c5_i32_425 = arith.constant 5 : i32
    %c4_i32_426 = arith.constant 4 : i32
    %c0_i32_427 = arith.constant 0 : i32
    %360 = tpu.memref_slice %arg3[%359, %c0_i32_427] : memref<128x128xf32, #tpu.memory_space<any>> -> memref<1x128xf32, #tpu.memory_space<any>>
    %c12_i32_428 = arith.constant 12 : i32
    %c0_i32_429 = arith.constant 0 : i32
    %361 = tpu.memref_slice %arg4[%c5_i32_424, %c12_i32_428, %c0_i32_429] : memref<6x16x128xf32, #tpu.memory_space<vmem>> -> memref<1x1x128xf32, #tpu.memory_space<vmem>>
    %362 = tpu.memref_squeeze %361 : memref<1x1x128xf32, #tpu.memory_space<vmem>> -> memref<1x128xf32, #tpu.memory_space<vmem>>
    %363 = tpu.memref_slice %arg5[%c5_i32_425, %c4_i32_426] : memref<6x8x!tpu.dma_semaphore, #tpu.memory_space<semaphore_mem>> -> memref<1x1x!tpu.dma_semaphore, #tpu.memory_space<semaphore_mem>>
    %364 = tpu.memref_squeeze %363 : memref<1x1x!tpu.dma_semaphore, #tpu.memory_space<semaphore_mem>> -> memref<!tpu.dma_semaphore, #tpu.memory_space<semaphore_mem>>
    tpu.enqueue_dma source(%360 : memref<1x128xf32, #tpu.memory_space<any>>) target(%362 : memref<1x128xf32, #tpu.memory_space<vmem>>) target_semaphore(%364 : memref<!tpu.dma_semaphore, #tpu.memory_space<semaphore_mem>>)
    %c5_430 = arith.constant 5 : index
    %c5_431 = arith.constant 5 : index
    %365 = memref.load %arg1[%c5_430, %c5_431] : memref<6x8xi32, #tpu.memory_space<smem>>
    %c0_i32_432 = arith.constant 0 : i32
    %c127_i32_433 = arith.constant 127 : i32
    %366 = arith.maxsi %c0_i32_432, %365 : i32
    %367 = arith.minsi %c127_i32_433, %366 : i32
    %c5_i32_434 = arith.constant 5 : i32
    %c5_i32_435 = arith.constant 5 : i32
    %c5_i32_436 = arith.constant 5 : i32
    %c0_i32_437 = arith.constant 0 : i32
    %368 = tpu.memref_slice %arg3[%367, %c0_i32_437] : memref<128x128xf32, #tpu.memory_space<any>> -> memref<1x128xf32, #tpu.memory_space<any>>
    %c13_i32_438 = arith.constant 13 : i32
    %c0_i32_439 = arith.constant 0 : i32
    %369 = tpu.memref_slice %arg4[%c5_i32_434, %c13_i32_438, %c0_i32_439] : memref<6x16x128xf32, #tpu.memory_space<vmem>> -> memref<1x1x128xf32, #tpu.memory_space<vmem>>
    %370 = tpu.memref_squeeze %369 : memref<1x1x128xf32, #tpu.memory_space<vmem>> -> memref<1x128xf32, #tpu.memory_space<vmem>>
    %371 = tpu.memref_slice %arg5[%c5_i32_435, %c5_i32_436] : memref<6x8x!tpu.dma_semaphore, #tpu.memory_space<semaphore_mem>> -> memref<1x1x!tpu.dma_semaphore, #tpu.memory_space<semaphore_mem>>
    %372 = tpu.memref_squeeze %371 : memref<1x1x!tpu.dma_semaphore, #tpu.memory_space<semaphore_mem>> -> memref<!tpu.dma_semaphore, #tpu.memory_space<semaphore_mem>>
    tpu.enqueue_dma source(%368 : memref<1x128xf32, #tpu.memory_space<any>>) target(%370 : memref<1x128xf32, #tpu.memory_space<vmem>>) target_semaphore(%372 : memref<!tpu.dma_semaphore, #tpu.memory_space<semaphore_mem>>)
    %c5_440 = arith.constant 5 : index
    %c6_441 = arith.constant 6 : index
    %373 = memref.load %arg1[%c5_440, %c6_441] : memref<6x8xi32, #tpu.memory_space<smem>>
    %c0_i32_442 = arith.constant 0 : i32
    %c127_i32_443 = arith.constant 127 : i32
    %374 = arith.maxsi %c0_i32_442, %373 : i32
    %375 = arith.minsi %c127_i32_443, %374 : i32
    %c5_i32_444 = arith.constant 5 : i32
    %c5_i32_445 = arith.constant 5 : i32
    %c6_i32_446 = arith.constant 6 : i32
    %c0_i32_447 = arith.constant 0 : i32
    %376 = tpu.memref_slice %arg3[%375, %c0_i32_447] : memref<128x128xf32, #tpu.memory_space<any>> -> memref<1x128xf32, #tpu.memory_space<any>>
    %c14_i32_448 = arith.constant 14 : i32
    %c0_i32_449 = arith.constant 0 : i32
    %377 = tpu.memref_slice %arg4[%c5_i32_444, %c14_i32_448, %c0_i32_449] : memref<6x16x128xf32, #tpu.memory_space<vmem>> -> memref<1x1x128xf32, #tpu.memory_space<vmem>>
    %378 = tpu.memref_squeeze %377 : memref<1x1x128xf32, #tpu.memory_space<vmem>> -> memref<1x128xf32, #tpu.memory_space<vmem>>
    %379 = tpu.memref_slice %arg5[%c5_i32_445, %c6_i32_446] : memref<6x8x!tpu.dma_semaphore, #tpu.memory_space<semaphore_mem>> -> memref<1x1x!tpu.dma_semaphore, #tpu.memory_space<semaphore_mem>>
    %380 = tpu.memref_squeeze %379 : memref<1x1x!tpu.dma_semaphore, #tpu.memory_space<semaphore_mem>> -> memref<!tpu.dma_semaphore, #tpu.memory_space<semaphore_mem>>
    tpu.enqueue_dma source(%376 : memref<1x128xf32, #tpu.memory_space<any>>) target(%378 : memref<1x128xf32, #tpu.memory_space<vmem>>) target_semaphore(%380 : memref<!tpu.dma_semaphore, #tpu.memory_space<semaphore_mem>>)
    %c5_450 = arith.constant 5 : index
    %c7_451 = arith.constant 7 : index
    %381 = memref.load %arg1[%c5_450, %c7_451] : memref<6x8xi32, #tpu.memory_space<smem>>
    %c0_i32_452 = arith.constant 0 : i32
    %c127_i32_453 = arith.constant 127 : i32
    %382 = arith.maxsi %c0_i32_452, %381 : i32
    %383 = arith.minsi %c127_i32_453, %382 : i32
    %c5_i32_454 = arith.constant 5 : i32
    %c5_i32_455 = arith.constant 5 : i32
    %c7_i32_456 = arith.constant 7 : i32
    %c0_i32_457 = arith.constant 0 : i32
    %384 = tpu.memref_slice %arg3[%383, %c0_i32_457] : memref<128x128xf32, #tpu.memory_space<any>> -> memref<1x128xf32, #tpu.memory_space<any>>
    %c15_i32_458 = arith.constant 15 : i32
    %c0_i32_459 = arith.constant 0 : i32
    %385 = tpu.memref_slice %arg4[%c5_i32_454, %c15_i32_458, %c0_i32_459] : memref<6x16x128xf32, #tpu.memory_space<vmem>> -> memref<1x1x128xf32, #tpu.memory_space<vmem>>
    %386 = tpu.memref_squeeze %385 : memref<1x1x128xf32, #tpu.memory_space<vmem>> -> memref<1x128xf32, #tpu.memory_space<vmem>>
    %387 = tpu.memref_slice %arg5[%c5_i32_455, %c7_i32_456] : memref<6x8x!tpu.dma_semaphore, #tpu.memory_space<semaphore_mem>> -> memref<1x1x!tpu.dma_semaphore, #tpu.memory_space<semaphore_mem>>
    %388 = tpu.memref_squeeze %387 : memref<1x1x!tpu.dma_semaphore, #tpu.memory_space<semaphore_mem>> -> memref<!tpu.dma_semaphore, #tpu.memory_space<semaphore_mem>>
    tpu.enqueue_dma source(%384 : memref<1x128xf32, #tpu.memory_space<any>>) target(%386 : memref<1x128xf32, #tpu.memory_space<vmem>>) target_semaphore(%388 : memref<!tpu.dma_semaphore, #tpu.memory_space<semaphore_mem>>)
    %c0_i32_460 = arith.constant 0 : i32
    %c0_i32_461 = arith.constant 0 : i32
    %c0_i32_462 = arith.constant 0 : i32
    %c0_i32_463 = arith.constant 0 : i32
    %389 = tpu.memref_slice %arg3[%7, %c0_i32_463] : memref<128x128xf32, #tpu.memory_space<any>> -> memref<1x128xf32, #tpu.memory_space<any>>
    %c8_i32_464 = arith.constant 8 : i32
    %c0_i32_465 = arith.constant 0 : i32
    %390 = tpu.memref_slice %arg4[%c0_i32_460, %c8_i32_464, %c0_i32_465] : memref<6x16x128xf32, #tpu.memory_space<vmem>> -> memref<1x1x128xf32, #tpu.memory_space<vmem>>
    %391 = tpu.memref_squeeze %390 : memref<1x1x128xf32, #tpu.memory_space<vmem>> -> memref<1x128xf32, #tpu.memory_space<vmem>>
    %392 = tpu.memref_slice %arg5[%c0_i32_461, %c0_i32_462] : memref<6x8x!tpu.dma_semaphore, #tpu.memory_space<semaphore_mem>> -> memref<1x1x!tpu.dma_semaphore, #tpu.memory_space<semaphore_mem>>
    %393 = tpu.memref_squeeze %392 : memref<1x1x!tpu.dma_semaphore, #tpu.memory_space<semaphore_mem>> -> memref<!tpu.dma_semaphore, #tpu.memory_space<semaphore_mem>>
    tpu.wait_dma2 semaphore(%393 : memref<!tpu.dma_semaphore, #tpu.memory_space<semaphore_mem>>) src(%389 : memref<1x128xf32, #tpu.memory_space<any>>) dst(%391 : memref<1x128xf32, #tpu.memory_space<vmem>>)
    %c0_i32_466 = arith.constant 0 : i32
    %c0_i32_467 = arith.constant 0 : i32
    %c1_i32_468 = arith.constant 1 : i32
    %c0_i32_469 = arith.constant 0 : i32
    %394 = tpu.memref_slice %arg3[%15, %c0_i32_469] : memref<128x128xf32, #tpu.memory_space<any>> -> memref<1x128xf32, #tpu.memory_space<any>>
    %c9_i32_470 = arith.constant 9 : i32
    %c0_i32_471 = arith.constant 0 : i32
    %395 = tpu.memref_slice %arg4[%c0_i32_466, %c9_i32_470, %c0_i32_471] : memref<6x16x128xf32, #tpu.memory_space<vmem>> -> memref<1x1x128xf32, #tpu.memory_space<vmem>>
    %396 = tpu.memref_squeeze %395 : memref<1x1x128xf32, #tpu.memory_space<vmem>> -> memref<1x128xf32, #tpu.memory_space<vmem>>
    %397 = tpu.memref_slice %arg5[%c0_i32_467, %c1_i32_468] : memref<6x8x!tpu.dma_semaphore, #tpu.memory_space<semaphore_mem>> -> memref<1x1x!tpu.dma_semaphore, #tpu.memory_space<semaphore_mem>>
    %398 = tpu.memref_squeeze %397 : memref<1x1x!tpu.dma_semaphore, #tpu.memory_space<semaphore_mem>> -> memref<!tpu.dma_semaphore, #tpu.memory_space<semaphore_mem>>
    tpu.wait_dma2 semaphore(%398 : memref<!tpu.dma_semaphore, #tpu.memory_space<semaphore_mem>>) src(%394 : memref<1x128xf32, #tpu.memory_space<any>>) dst(%396 : memref<1x128xf32, #tpu.memory_space<vmem>>)
    %c0_i32_472 = arith.constant 0 : i32
    %c0_i32_473 = arith.constant 0 : i32
    %c2_i32_474 = arith.constant 2 : i32
    %c0_i32_475 = arith.constant 0 : i32
    %399 = tpu.memref_slice %arg3[%23, %c0_i32_475] : memref<128x128xf32, #tpu.memory_space<any>> -> memref<1x128xf32, #tpu.memory_space<any>>
    %c10_i32_476 = arith.constant 10 : i32
    %c0_i32_477 = arith.constant 0 : i32
    %400 = tpu.memref_slice %arg4[%c0_i32_472, %c10_i32_476, %c0_i32_477] : memref<6x16x128xf32, #tpu.memory_space<vmem>> -> memref<1x1x128xf32, #tpu.memory_space<vmem>>
    %401 = tpu.memref_squeeze %400 : memref<1x1x128xf32, #tpu.memory_space<vmem>> -> memref<1x128xf32, #tpu.memory_space<vmem>>
    %402 = tpu.memref_slice %arg5[%c0_i32_473, %c2_i32_474] : memref<6x8x!tpu.dma_semaphore, #tpu.memory_space<semaphore_mem>> -> memref<1x1x!tpu.dma_semaphore, #tpu.memory_space<semaphore_mem>>
    %403 = tpu.memref_squeeze %402 : memref<1x1x!tpu.dma_semaphore, #tpu.memory_space<semaphore_mem>> -> memref<!tpu.dma_semaphore, #tpu.memory_space<semaphore_mem>>
    tpu.wait_dma2 semaphore(%403 : memref<!tpu.dma_semaphore, #tpu.memory_space<semaphore_mem>>) src(%399 : memref<1x128xf32, #tpu.memory_space<any>>) dst(%401 : memref<1x128xf32, #tpu.memory_space<vmem>>)
    %c0_i32_478 = arith.constant 0 : i32
    %c0_i32_479 = arith.constant 0 : i32
    %c3_i32_480 = arith.constant 3 : i32
    %c0_i32_481 = arith.constant 0 : i32
    %404 = tpu.memref_slice %arg3[%31, %c0_i32_481] : memref<128x128xf32, #tpu.memory_space<any>> -> memref<1x128xf32, #tpu.memory_space<any>>
    %c11_i32_482 = arith.constant 11 : i32
    %c0_i32_483 = arith.constant 0 : i32
    %405 = tpu.memref_slice %arg4[%c0_i32_478, %c11_i32_482, %c0_i32_483] : memref<6x16x128xf32, #tpu.memory_space<vmem>> -> memref<1x1x128xf32, #tpu.memory_space<vmem>>
    %406 = tpu.memref_squeeze %405 : memref<1x1x128xf32, #tpu.memory_space<vmem>> -> memref<1x128xf32, #tpu.memory_space<vmem>>
    %407 = tpu.memref_slice %arg5[%c0_i32_479, %c3_i32_480] : memref<6x8x!tpu.dma_semaphore, #tpu.memory_space<semaphore_mem>> -> memref<1x1x!tpu.dma_semaphore, #tpu.memory_space<semaphore_mem>>
    %408 = tpu.memref_squeeze %407 : memref<1x1x!tpu.dma_semaphore, #tpu.memory_space<semaphore_mem>> -> memref<!tpu.dma_semaphore, #tpu.memory_space<semaphore_mem>>
    tpu.wait_dma2 semaphore(%408 : memref<!tpu.dma_semaphore, #tpu.memory_space<semaphore_mem>>) src(%404 : memref<1x128xf32, #tpu.memory_space<any>>) dst(%406 : memref<1x128xf32, #tpu.memory_space<vmem>>)
    %c0_i32_484 = arith.constant 0 : i32
    %c0_i32_485 = arith.constant 0 : i32
    %c4_i32_486 = arith.constant 4 : i32
    %c0_i32_487 = arith.constant 0 : i32
    %409 = tpu.memref_slice %arg3[%39, %c0_i32_487] : memref<128x128xf32, #tpu.memory_space<any>> -> memref<1x128xf32, #tpu.memory_space<any>>
    %c12_i32_488 = arith.constant 12 : i32
    %c0_i32_489 = arith.constant 0 : i32
    %410 = tpu.memref_slice %arg4[%c0_i32_484, %c12_i32_488, %c0_i32_489] : memref<6x16x128xf32, #tpu.memory_space<vmem>> -> memref<1x1x128xf32, #tpu.memory_space<vmem>>
    %411 = tpu.memref_squeeze %410 : memref<1x1x128xf32, #tpu.memory_space<vmem>> -> memref<1x128xf32, #tpu.memory_space<vmem>>
    %412 = tpu.memref_slice %arg5[%c0_i32_485, %c4_i32_486] : memref<6x8x!tpu.dma_semaphore, #tpu.memory_space<semaphore_mem>> -> memref<1x1x!tpu.dma_semaphore, #tpu.memory_space<semaphore_mem>>
    %413 = tpu.memref_squeeze %412 : memref<1x1x!tpu.dma_semaphore, #tpu.memory_space<semaphore_mem>> -> memref<!tpu.dma_semaphore, #tpu.memory_space<semaphore_mem>>
    tpu.wait_dma2 semaphore(%413 : memref<!tpu.dma_semaphore, #tpu.memory_space<semaphore_mem>>) src(%409 : memref<1x128xf32, #tpu.memory_space<any>>) dst(%411 : memref<1x128xf32, #tpu.memory_space<vmem>>)
    %c0_i32_490 = arith.constant 0 : i32
    %c0_i32_491 = arith.constant 0 : i32
    %c5_i32_492 = arith.constant 5 : i32
    %c0_i32_493 = arith.constant 0 : i32
    %414 = tpu.memref_slice %arg3[%47, %c0_i32_493] : memref<128x128xf32, #tpu.memory_space<any>> -> memref<1x128xf32, #tpu.memory_space<any>>
    %c13_i32_494 = arith.constant 13 : i32
    %c0_i32_495 = arith.constant 0 : i32
    %415 = tpu.memref_slice %arg4[%c0_i32_490, %c13_i32_494, %c0_i32_495] : memref<6x16x128xf32, #tpu.memory_space<vmem>> -> memref<1x1x128xf32, #tpu.memory_space<vmem>>
    %416 = tpu.memref_squeeze %415 : memref<1x1x128xf32, #tpu.memory_space<vmem>> -> memref<1x128xf32, #tpu.memory_space<vmem>>
    %417 = tpu.memref_slice %arg5[%c0_i32_491, %c5_i32_492] : memref<6x8x!tpu.dma_semaphore, #tpu.memory_space<semaphore_mem>> -> memref<1x1x!tpu.dma_semaphore, #tpu.memory_space<semaphore_mem>>
    %418 = tpu.memref_squeeze %417 : memref<1x1x!tpu.dma_semaphore, #tpu.memory_space<semaphore_mem>> -> memref<!tpu.dma_semaphore, #tpu.memory_space<semaphore_mem>>
    tpu.wait_dma2 semaphore(%418 : memref<!tpu.dma_semaphore, #tpu.memory_space<semaphore_mem>>) src(%414 : memref<1x128xf32, #tpu.memory_space<any>>) dst(%416 : memref<1x128xf32, #tpu.memory_space<vmem>>)
    %c0_i32_496 = arith.constant 0 : i32
    %c0_i32_497 = arith.constant 0 : i32
    %c6_i32_498 = arith.constant 6 : i32
    %c0_i32_499 = arith.constant 0 : i32
    %419 = tpu.memref_slice %arg3[%55, %c0_i32_499] : memref<128x128xf32, #tpu.memory_space<any>> -> memref<1x128xf32, #tpu.memory_space<any>>
    %c14_i32_500 = arith.constant 14 : i32
    %c0_i32_501 = arith.constant 0 : i32
    %420 = tpu.memref_slice %arg4[%c0_i32_496, %c14_i32_500, %c0_i32_501] : memref<6x16x128xf32, #tpu.memory_space<vmem>> -> memref<1x1x128xf32, #tpu.memory_space<vmem>>
    %421 = tpu.memref_squeeze %420 : memref<1x1x128xf32, #tpu.memory_space<vmem>> -> memref<1x128xf32, #tpu.memory_space<vmem>>
    %422 = tpu.memref_slice %arg5[%c0_i32_497, %c6_i32_498] : memref<6x8x!tpu.dma_semaphore, #tpu.memory_space<semaphore_mem>> -> memref<1x1x!tpu.dma_semaphore, #tpu.memory_space<semaphore_mem>>
    %423 = tpu.memref_squeeze %422 : memref<1x1x!tpu.dma_semaphore, #tpu.memory_space<semaphore_mem>> -> memref<!tpu.dma_semaphore, #tpu.memory_space<semaphore_mem>>
    tpu.wait_dma2 semaphore(%423 : memref<!tpu.dma_semaphore, #tpu.memory_space<semaphore_mem>>) src(%419 : memref<1x128xf32, #tpu.memory_space<any>>) dst(%421 : memref<1x128xf32, #tpu.memory_space<vmem>>)
    %c0_i32_502 = arith.constant 0 : i32
    %c0_i32_503 = arith.constant 0 : i32
    %c7_i32_504 = arith.constant 7 : i32
    %c0_i32_505 = arith.constant 0 : i32
    %424 = tpu.memref_slice %arg3[%63, %c0_i32_505] : memref<128x128xf32, #tpu.memory_space<any>> -> memref<1x128xf32, #tpu.memory_space<any>>
    %c15_i32_506 = arith.constant 15 : i32
    %c0_i32_507 = arith.constant 0 : i32
    %425 = tpu.memref_slice %arg4[%c0_i32_502, %c15_i32_506, %c0_i32_507] : memref<6x16x128xf32, #tpu.memory_space<vmem>> -> memref<1x1x128xf32, #tpu.memory_space<vmem>>
    %426 = tpu.memref_squeeze %425 : memref<1x1x128xf32, #tpu.memory_space<vmem>> -> memref<1x128xf32, #tpu.memory_space<vmem>>
    %427 = tpu.memref_slice %arg5[%c0_i32_503, %c7_i32_504] : memref<6x8x!tpu.dma_semaphore, #tpu.memory_space<semaphore_mem>> -> memref<1x1x!tpu.dma_semaphore, #tpu.memory_space<semaphore_mem>>
    %428 = tpu.memref_squeeze %427 : memref<1x1x!tpu.dma_semaphore, #tpu.memory_space<semaphore_mem>> -> memref<!tpu.dma_semaphore, #tpu.memory_space<semaphore_mem>>
    tpu.wait_dma2 semaphore(%428 : memref<!tpu.dma_semaphore, #tpu.memory_space<semaphore_mem>>) src(%424 : memref<1x128xf32, #tpu.memory_space<any>>) dst(%426 : memref<1x128xf32, #tpu.memory_space<vmem>>)
    %c1_i32_508 = arith.constant 1 : i32
    %c1_i32_509 = arith.constant 1 : i32
    %c0_i32_510 = arith.constant 0 : i32
    %c0_i32_511 = arith.constant 0 : i32
    %429 = tpu.memref_slice %arg3[%71, %c0_i32_511] : memref<128x128xf32, #tpu.memory_space<any>> -> memref<1x128xf32, #tpu.memory_space<any>>
    %c8_i32_512 = arith.constant 8 : i32
    %c0_i32_513 = arith.constant 0 : i32
    %430 = tpu.memref_slice %arg4[%c1_i32_508, %c8_i32_512, %c0_i32_513] : memref<6x16x128xf32, #tpu.memory_space<vmem>> -> memref<1x1x128xf32, #tpu.memory_space<vmem>>
    %431 = tpu.memref_squeeze %430 : memref<1x1x128xf32, #tpu.memory_space<vmem>> -> memref<1x128xf32, #tpu.memory_space<vmem>>
    %432 = tpu.memref_slice %arg5[%c1_i32_509, %c0_i32_510] : memref<6x8x!tpu.dma_semaphore, #tpu.memory_space<semaphore_mem>> -> memref<1x1x!tpu.dma_semaphore, #tpu.memory_space<semaphore_mem>>
    %433 = tpu.memref_squeeze %432 : memref<1x1x!tpu.dma_semaphore, #tpu.memory_space<semaphore_mem>> -> memref<!tpu.dma_semaphore, #tpu.memory_space<semaphore_mem>>
    tpu.wait_dma2 semaphore(%433 : memref<!tpu.dma_semaphore, #tpu.memory_space<semaphore_mem>>) src(%429 : memref<1x128xf32, #tpu.memory_space<any>>) dst(%431 : memref<1x128xf32, #tpu.memory_space<vmem>>)
    %c1_i32_514 = arith.constant 1 : i32
    %c1_i32_515 = arith.constant 1 : i32
    %c1_i32_516 = arith.constant 1 : i32
    %c0_i32_517 = arith.constant 0 : i32
    %434 = tpu.memref_slice %arg3[%79, %c0_i32_517] : memref<128x128xf32, #tpu.memory_space<any>> -> memref<1x128xf32, #tpu.memory_space<any>>
    %c9_i32_518 = arith.constant 9 : i32
    %c0_i32_519 = arith.constant 0 : i32
    %435 = tpu.memref_slice %arg4[%c1_i32_514, %c9_i32_518, %c0_i32_519] : memref<6x16x128xf32, #tpu.memory_space<vmem>> -> memref<1x1x128xf32, #tpu.memory_space<vmem>>
    %436 = tpu.memref_squeeze %435 : memref<1x1x128xf32, #tpu.memory_space<vmem>> -> memref<1x128xf32, #tpu.memory_space<vmem>>
    %437 = tpu.memref_slice %arg5[%c1_i32_515, %c1_i32_516] : memref<6x8x!tpu.dma_semaphore, #tpu.memory_space<semaphore_mem>> -> memref<1x1x!tpu.dma_semaphore, #tpu.memory_space<semaphore_mem>>
    %438 = tpu.memref_squeeze %437 : memref<1x1x!tpu.dma_semaphore, #tpu.memory_space<semaphore_mem>> -> memref<!tpu.dma_semaphore, #tpu.memory_space<semaphore_mem>>
    tpu.wait_dma2 semaphore(%438 : memref<!tpu.dma_semaphore, #tpu.memory_space<semaphore_mem>>) src(%434 : memref<1x128xf32, #tpu.memory_space<any>>) dst(%436 : memref<1x128xf32, #tpu.memory_space<vmem>>)
    %c1_i32_520 = arith.constant 1 : i32
    %c1_i32_521 = arith.constant 1 : i32
    %c2_i32_522 = arith.constant 2 : i32
    %c0_i32_523 = arith.constant 0 : i32
    %439 = tpu.memref_slice %arg3[%87, %c0_i32_523] : memref<128x128xf32, #tpu.memory_space<any>> -> memref<1x128xf32, #tpu.memory_space<any>>
    %c10_i32_524 = arith.constant 10 : i32
    %c0_i32_525 = arith.constant 0 : i32
    %440 = tpu.memref_slice %arg4[%c1_i32_520, %c10_i32_524, %c0_i32_525] : memref<6x16x128xf32, #tpu.memory_space<vmem>> -> memref<1x1x128xf32, #tpu.memory_space<vmem>>
    %441 = tpu.memref_squeeze %440 : memref<1x1x128xf32, #tpu.memory_space<vmem>> -> memref<1x128xf32, #tpu.memory_space<vmem>>
    %442 = tpu.memref_slice %arg5[%c1_i32_521, %c2_i32_522] : memref<6x8x!tpu.dma_semaphore, #tpu.memory_space<semaphore_mem>> -> memref<1x1x!tpu.dma_semaphore, #tpu.memory_space<semaphore_mem>>
    %443 = tpu.memref_squeeze %442 : memref<1x1x!tpu.dma_semaphore, #tpu.memory_space<semaphore_mem>> -> memref<!tpu.dma_semaphore, #tpu.memory_space<semaphore_mem>>
    tpu.wait_dma2 semaphore(%443 : memref<!tpu.dma_semaphore, #tpu.memory_space<semaphore_mem>>) src(%439 : memref<1x128xf32, #tpu.memory_space<any>>) dst(%441 : memref<1x128xf32, #tpu.memory_space<vmem>>)
    %c1_i32_526 = arith.constant 1 : i32
    %c1_i32_527 = arith.constant 1 : i32
    %c3_i32_528 = arith.constant 3 : i32
    %c0_i32_529 = arith.constant 0 : i32
    %444 = tpu.memref_slice %arg3[%95, %c0_i32_529] : memref<128x128xf32, #tpu.memory_space<any>> -> memref<1x128xf32, #tpu.memory_space<any>>
    %c11_i32_530 = arith.constant 11 : i32
    %c0_i32_531 = arith.constant 0 : i32
    %445 = tpu.memref_slice %arg4[%c1_i32_526, %c11_i32_530, %c0_i32_531] : memref<6x16x128xf32, #tpu.memory_space<vmem>> -> memref<1x1x128xf32, #tpu.memory_space<vmem>>
    %446 = tpu.memref_squeeze %445 : memref<1x1x128xf32, #tpu.memory_space<vmem>> -> memref<1x128xf32, #tpu.memory_space<vmem>>
    %447 = tpu.memref_slice %arg5[%c1_i32_527, %c3_i32_528] : memref<6x8x!tpu.dma_semaphore, #tpu.memory_space<semaphore_mem>> -> memref<1x1x!tpu.dma_semaphore, #tpu.memory_space<semaphore_mem>>
    %448 = tpu.memref_squeeze %447 : memref<1x1x!tpu.dma_semaphore, #tpu.memory_space<semaphore_mem>> -> memref<!tpu.dma_semaphore, #tpu.memory_space<semaphore_mem>>
    tpu.wait_dma2 semaphore(%448 : memref<!tpu.dma_semaphore, #tpu.memory_space<semaphore_mem>>) src(%444 : memref<1x128xf32, #tpu.memory_space<any>>) dst(%446 : memref<1x128xf32, #tpu.memory_space<vmem>>)
    %c1_i32_532 = arith.constant 1 : i32
    %c1_i32_533 = arith.constant 1 : i32
    %c4_i32_534 = arith.constant 4 : i32
    %c0_i32_535 = arith.constant 0 : i32
    %449 = tpu.memref_slice %arg3[%103, %c0_i32_535] : memref<128x128xf32, #tpu.memory_space<any>> -> memref<1x128xf32, #tpu.memory_space<any>>
    %c12_i32_536 = arith.constant 12 : i32
    %c0_i32_537 = arith.constant 0 : i32
    %450 = tpu.memref_slice %arg4[%c1_i32_532, %c12_i32_536, %c0_i32_537] : memref<6x16x128xf32, #tpu.memory_space<vmem>> -> memref<1x1x128xf32, #tpu.memory_space<vmem>>
    %451 = tpu.memref_squeeze %450 : memref<1x1x128xf32, #tpu.memory_space<vmem>> -> memref<1x128xf32, #tpu.memory_space<vmem>>
    %452 = tpu.memref_slice %arg5[%c1_i32_533, %c4_i32_534] : memref<6x8x!tpu.dma_semaphore, #tpu.memory_space<semaphore_mem>> -> memref<1x1x!tpu.dma_semaphore, #tpu.memory_space<semaphore_mem>>
    %453 = tpu.memref_squeeze %452 : memref<1x1x!tpu.dma_semaphore, #tpu.memory_space<semaphore_mem>> -> memref<!tpu.dma_semaphore, #tpu.memory_space<semaphore_mem>>
    tpu.wait_dma2 semaphore(%453 : memref<!tpu.dma_semaphore, #tpu.memory_space<semaphore_mem>>) src(%449 : memref<1x128xf32, #tpu.memory_space<any>>) dst(%451 : memref<1x128xf32, #tpu.memory_space<vmem>>)
    %c1_i32_538 = arith.constant 1 : i32
    %c1_i32_539 = arith.constant 1 : i32
    %c5_i32_540 = arith.constant 5 : i32
    %c0_i32_541 = arith.constant 0 : i32
    %454 = tpu.memref_slice %arg3[%111, %c0_i32_541] : memref<128x128xf32, #tpu.memory_space<any>> -> memref<1x128xf32, #tpu.memory_space<any>>
    %c13_i32_542 = arith.constant 13 : i32
    %c0_i32_543 = arith.constant 0 : i32
    %455 = tpu.memref_slice %arg4[%c1_i32_538, %c13_i32_542, %c0_i32_543] : memref<6x16x128xf32, #tpu.memory_space<vmem>> -> memref<1x1x128xf32, #tpu.memory_space<vmem>>
    %456 = tpu.memref_squeeze %455 : memref<1x1x128xf32, #tpu.memory_space<vmem>> -> memref<1x128xf32, #tpu.memory_space<vmem>>
    %457 = tpu.memref_slice %arg5[%c1_i32_539, %c5_i32_540] : memref<6x8x!tpu.dma_semaphore, #tpu.memory_space<semaphore_mem>> -> memref<1x1x!tpu.dma_semaphore, #tpu.memory_space<semaphore_mem>>
    %458 = tpu.memref_squeeze %457 : memref<1x1x!tpu.dma_semaphore, #tpu.memory_space<semaphore_mem>> -> memref<!tpu.dma_semaphore, #tpu.memory_space<semaphore_mem>>
    tpu.wait_dma2 semaphore(%458 : memref<!tpu.dma_semaphore, #tpu.memory_space<semaphore_mem>>) src(%454 : memref<1x128xf32, #tpu.memory_space<any>>) dst(%456 : memref<1x128xf32, #tpu.memory_space<vmem>>)
    %c1_i32_544 = arith.constant 1 : i32
    %c1_i32_545 = arith.constant 1 : i32
    %c6_i32_546 = arith.constant 6 : i32
    %c0_i32_547 = arith.constant 0 : i32
    %459 = tpu.memref_slice %arg3[%119, %c0_i32_547] : memref<128x128xf32, #tpu.memory_space<any>> -> memref<1x128xf32, #tpu.memory_space<any>>
    %c14_i32_548 = arith.constant 14 : i32
    %c0_i32_549 = arith.constant 0 : i32
    %460 = tpu.memref_slice %arg4[%c1_i32_544, %c14_i32_548, %c0_i32_549] : memref<6x16x128xf32, #tpu.memory_space<vmem>> -> memref<1x1x128xf32, #tpu.memory_space<vmem>>
    %461 = tpu.memref_squeeze %460 : memref<1x1x128xf32, #tpu.memory_space<vmem>> -> memref<1x128xf32, #tpu.memory_space<vmem>>
    %462 = tpu.memref_slice %arg5[%c1_i32_545, %c6_i32_546] : memref<6x8x!tpu.dma_semaphore, #tpu.memory_space<semaphore_mem>> -> memref<1x1x!tpu.dma_semaphore, #tpu.memory_space<semaphore_mem>>
    %463 = tpu.memref_squeeze %462 : memref<1x1x!tpu.dma_semaphore, #tpu.memory_space<semaphore_mem>> -> memref<!tpu.dma_semaphore, #tpu.memory_space<semaphore_mem>>
    tpu.wait_dma2 semaphore(%463 : memref<!tpu.dma_semaphore, #tpu.memory_space<semaphore_mem>>) src(%459 : memref<1x128xf32, #tpu.memory_space<any>>) dst(%461 : memref<1x128xf32, #tpu.memory_space<vmem>>)
    %c1_i32_550 = arith.constant 1 : i32
    %c1_i32_551 = arith.constant 1 : i32
    %c7_i32_552 = arith.constant 7 : i32
    %c0_i32_553 = arith.constant 0 : i32
    %464 = tpu.memref_slice %arg3[%127, %c0_i32_553] : memref<128x128xf32, #tpu.memory_space<any>> -> memref<1x128xf32, #tpu.memory_space<any>>
    %c15_i32_554 = arith.constant 15 : i32
    %c0_i32_555 = arith.constant 0 : i32
    %465 = tpu.memref_slice %arg4[%c1_i32_550, %c15_i32_554, %c0_i32_555] : memref<6x16x128xf32, #tpu.memory_space<vmem>> -> memref<1x1x128xf32, #tpu.memory_space<vmem>>
    %466 = tpu.memref_squeeze %465 : memref<1x1x128xf32, #tpu.memory_space<vmem>> -> memref<1x128xf32, #tpu.memory_space<vmem>>
    %467 = tpu.memref_slice %arg5[%c1_i32_551, %c7_i32_552] : memref<6x8x!tpu.dma_semaphore, #tpu.memory_space<semaphore_mem>> -> memref<1x1x!tpu.dma_semaphore, #tpu.memory_space<semaphore_mem>>
    %468 = tpu.memref_squeeze %467 : memref<1x1x!tpu.dma_semaphore, #tpu.memory_space<semaphore_mem>> -> memref<!tpu.dma_semaphore, #tpu.memory_space<semaphore_mem>>
    tpu.wait_dma2 semaphore(%468 : memref<!tpu.dma_semaphore, #tpu.memory_space<semaphore_mem>>) src(%464 : memref<1x128xf32, #tpu.memory_space<any>>) dst(%466 : memref<1x128xf32, #tpu.memory_space<vmem>>)
    %c2_i32_556 = arith.constant 2 : i32
    %c2_i32_557 = arith.constant 2 : i32
    %c0_i32_558 = arith.constant 0 : i32
    %c0_i32_559 = arith.constant 0 : i32
    %469 = tpu.memref_slice %arg3[%135, %c0_i32_559] : memref<128x128xf32, #tpu.memory_space<any>> -> memref<1x128xf32, #tpu.memory_space<any>>
    %c8_i32_560 = arith.constant 8 : i32
    %c0_i32_561 = arith.constant 0 : i32
    %470 = tpu.memref_slice %arg4[%c2_i32_556, %c8_i32_560, %c0_i32_561] : memref<6x16x128xf32, #tpu.memory_space<vmem>> -> memref<1x1x128xf32, #tpu.memory_space<vmem>>
    %471 = tpu.memref_squeeze %470 : memref<1x1x128xf32, #tpu.memory_space<vmem>> -> memref<1x128xf32, #tpu.memory_space<vmem>>
    %472 = tpu.memref_slice %arg5[%c2_i32_557, %c0_i32_558] : memref<6x8x!tpu.dma_semaphore, #tpu.memory_space<semaphore_mem>> -> memref<1x1x!tpu.dma_semaphore, #tpu.memory_space<semaphore_mem>>
    %473 = tpu.memref_squeeze %472 : memref<1x1x!tpu.dma_semaphore, #tpu.memory_space<semaphore_mem>> -> memref<!tpu.dma_semaphore, #tpu.memory_space<semaphore_mem>>
    tpu.wait_dma2 semaphore(%473 : memref<!tpu.dma_semaphore, #tpu.memory_space<semaphore_mem>>) src(%469 : memref<1x128xf32, #tpu.memory_space<any>>) dst(%471 : memref<1x128xf32, #tpu.memory_space<vmem>>)
    %c2_i32_562 = arith.constant 2 : i32
    %c2_i32_563 = arith.constant 2 : i32
    %c1_i32_564 = arith.constant 1 : i32
    %c0_i32_565 = arith.constant 0 : i32
    %474 = tpu.memref_slice %arg3[%143, %c0_i32_565] : memref<128x128xf32, #tpu.memory_space<any>> -> memref<1x128xf32, #tpu.memory_space<any>>
    %c9_i32_566 = arith.constant 9 : i32
    %c0_i32_567 = arith.constant 0 : i32
    %475 = tpu.memref_slice %arg4[%c2_i32_562, %c9_i32_566, %c0_i32_567] : memref<6x16x128xf32, #tpu.memory_space<vmem>> -> memref<1x1x128xf32, #tpu.memory_space<vmem>>
    %476 = tpu.memref_squeeze %475 : memref<1x1x128xf32, #tpu.memory_space<vmem>> -> memref<1x128xf32, #tpu.memory_space<vmem>>
    %477 = tpu.memref_slice %arg5[%c2_i32_563, %c1_i32_564] : memref<6x8x!tpu.dma_semaphore, #tpu.memory_space<semaphore_mem>> -> memref<1x1x!tpu.dma_semaphore, #tpu.memory_space<semaphore_mem>>
    %478 = tpu.memref_squeeze %477 : memref<1x1x!tpu.dma_semaphore, #tpu.memory_space<semaphore_mem>> -> memref<!tpu.dma_semaphore, #tpu.memory_space<semaphore_mem>>
    tpu.wait_dma2 semaphore(%478 : memref<!tpu.dma_semaphore, #tpu.memory_space<semaphore_mem>>) src(%474 : memref<1x128xf32, #tpu.memory_space<any>>) dst(%476 : memref<1x128xf32, #tpu.memory_space<vmem>>)
    %c2_i32_568 = arith.constant 2 : i32
    %c2_i32_569 = arith.constant 2 : i32
    %c2_i32_570 = arith.constant 2 : i32
    %c0_i32_571 = arith.constant 0 : i32
    %479 = tpu.memref_slice %arg3[%151, %c0_i32_571] : memref<128x128xf32, #tpu.memory_space<any>> -> memref<1x128xf32, #tpu.memory_space<any>>
    %c10_i32_572 = arith.constant 10 : i32
    %c0_i32_573 = arith.constant 0 : i32
    %480 = tpu.memref_slice %arg4[%c2_i32_568, %c10_i32_572, %c0_i32_573] : memref<6x16x128xf32, #tpu.memory_space<vmem>> -> memref<1x1x128xf32, #tpu.memory_space<vmem>>
    %481 = tpu.memref_squeeze %480 : memref<1x1x128xf32, #tpu.memory_space<vmem>> -> memref<1x128xf32, #tpu.memory_space<vmem>>
    %482 = tpu.memref_slice %arg5[%c2_i32_569, %c2_i32_570] : memref<6x8x!tpu.dma_semaphore, #tpu.memory_space<semaphore_mem>> -> memref<1x1x!tpu.dma_semaphore, #tpu.memory_space<semaphore_mem>>
    %483 = tpu.memref_squeeze %482 : memref<1x1x!tpu.dma_semaphore, #tpu.memory_space<semaphore_mem>> -> memref<!tpu.dma_semaphore, #tpu.memory_space<semaphore_mem>>
    tpu.wait_dma2 semaphore(%483 : memref<!tpu.dma_semaphore, #tpu.memory_space<semaphore_mem>>) src(%479 : memref<1x128xf32, #tpu.memory_space<any>>) dst(%481 : memref<1x128xf32, #tpu.memory_space<vmem>>)
    %c2_i32_574 = arith.constant 2 : i32
    %c2_i32_575 = arith.constant 2 : i32
    %c3_i32_576 = arith.constant 3 : i32
    %c0_i32_577 = arith.constant 0 : i32
    %484 = tpu.memref_slice %arg3[%159, %c0_i32_577] : memref<128x128xf32, #tpu.memory_space<any>> -> memref<1x128xf32, #tpu.memory_space<any>>
    %c11_i32_578 = arith.constant 11 : i32
    %c0_i32_579 = arith.constant 0 : i32
    %485 = tpu.memref_slice %arg4[%c2_i32_574, %c11_i32_578, %c0_i32_579] : memref<6x16x128xf32, #tpu.memory_space<vmem>> -> memref<1x1x128xf32, #tpu.memory_space<vmem>>
    %486 = tpu.memref_squeeze %485 : memref<1x1x128xf32, #tpu.memory_space<vmem>> -> memref<1x128xf32, #tpu.memory_space<vmem>>
    %487 = tpu.memref_slice %arg5[%c2_i32_575, %c3_i32_576] : memref<6x8x!tpu.dma_semaphore, #tpu.memory_space<semaphore_mem>> -> memref<1x1x!tpu.dma_semaphore, #tpu.memory_space<semaphore_mem>>
    %488 = tpu.memref_squeeze %487 : memref<1x1x!tpu.dma_semaphore, #tpu.memory_space<semaphore_mem>> -> memref<!tpu.dma_semaphore, #tpu.memory_space<semaphore_mem>>
    tpu.wait_dma2 semaphore(%488 : memref<!tpu.dma_semaphore, #tpu.memory_space<semaphore_mem>>) src(%484 : memref<1x128xf32, #tpu.memory_space<any>>) dst(%486 : memref<1x128xf32, #tpu.memory_space<vmem>>)
    %c2_i32_580 = arith.constant 2 : i32
    %c2_i32_581 = arith.constant 2 : i32
    %c4_i32_582 = arith.constant 4 : i32
    %c0_i32_583 = arith.constant 0 : i32
    %489 = tpu.memref_slice %arg3[%167, %c0_i32_583] : memref<128x128xf32, #tpu.memory_space<any>> -> memref<1x128xf32, #tpu.memory_space<any>>
    %c12_i32_584 = arith.constant 12 : i32
    %c0_i32_585 = arith.constant 0 : i32
    %490 = tpu.memref_slice %arg4[%c2_i32_580, %c12_i32_584, %c0_i32_585] : memref<6x16x128xf32, #tpu.memory_space<vmem>> -> memref<1x1x128xf32, #tpu.memory_space<vmem>>
    %491 = tpu.memref_squeeze %490 : memref<1x1x128xf32, #tpu.memory_space<vmem>> -> memref<1x128xf32, #tpu.memory_space<vmem>>
    %492 = tpu.memref_slice %arg5[%c2_i32_581, %c4_i32_582] : memref<6x8x!tpu.dma_semaphore, #tpu.memory_space<semaphore_mem>> -> memref<1x1x!tpu.dma_semaphore, #tpu.memory_space<semaphore_mem>>
    %493 = tpu.memref_squeeze %492 : memref<1x1x!tpu.dma_semaphore, #tpu.memory_space<semaphore_mem>> -> memref<!tpu.dma_semaphore, #tpu.memory_space<semaphore_mem>>
    tpu.wait_dma2 semaphore(%493 : memref<!tpu.dma_semaphore, #tpu.memory_space<semaphore_mem>>) src(%489 : memref<1x128xf32, #tpu.memory_space<any>>) dst(%491 : memref<1x128xf32, #tpu.memory_space<vmem>>)
    %c2_i32_586 = arith.constant 2 : i32
    %c2_i32_587 = arith.constant 2 : i32
    %c5_i32_588 = arith.constant 5 : i32
    %c0_i32_589 = arith.constant 0 : i32
    %494 = tpu.memref_slice %arg3[%175, %c0_i32_589] : memref<128x128xf32, #tpu.memory_space<any>> -> memref<1x128xf32, #tpu.memory_space<any>>
    %c13_i32_590 = arith.constant 13 : i32
    %c0_i32_591 = arith.constant 0 : i32
    %495 = tpu.memref_slice %arg4[%c2_i32_586, %c13_i32_590, %c0_i32_591] : memref<6x16x128xf32, #tpu.memory_space<vmem>> -> memref<1x1x128xf32, #tpu.memory_space<vmem>>
    %496 = tpu.memref_squeeze %495 : memref<1x1x128xf32, #tpu.memory_space<vmem>> -> memref<1x128xf32, #tpu.memory_space<vmem>>
    %497 = tpu.memref_slice %arg5[%c2_i32_587, %c5_i32_588] : memref<6x8x!tpu.dma_semaphore, #tpu.memory_space<semaphore_mem>> -> memref<1x1x!tpu.dma_semaphore, #tpu.memory_space<semaphore_mem>>
    %498 = tpu.memref_squeeze %497 : memref<1x1x!tpu.dma_semaphore, #tpu.memory_space<semaphore_mem>> -> memref<!tpu.dma_semaphore, #tpu.memory_space<semaphore_mem>>
    tpu.wait_dma2 semaphore(%498 : memref<!tpu.dma_semaphore, #tpu.memory_space<semaphore_mem>>) src(%494 : memref<1x128xf32, #tpu.memory_space<any>>) dst(%496 : memref<1x128xf32, #tpu.memory_space<vmem>>)
    %c2_i32_592 = arith.constant 2 : i32
    %c2_i32_593 = arith.constant 2 : i32
    %c6_i32_594 = arith.constant 6 : i32
    %c0_i32_595 = arith.constant 0 : i32
    %499 = tpu.memref_slice %arg3[%183, %c0_i32_595] : memref<128x128xf32, #tpu.memory_space<any>> -> memref<1x128xf32, #tpu.memory_space<any>>
    %c14_i32_596 = arith.constant 14 : i32
    %c0_i32_597 = arith.constant 0 : i32
    %500 = tpu.memref_slice %arg4[%c2_i32_592, %c14_i32_596, %c0_i32_597] : memref<6x16x128xf32, #tpu.memory_space<vmem>> -> memref<1x1x128xf32, #tpu.memory_space<vmem>>
    %501 = tpu.memref_squeeze %500 : memref<1x1x128xf32, #tpu.memory_space<vmem>> -> memref<1x128xf32, #tpu.memory_space<vmem>>
    %502 = tpu.memref_slice %arg5[%c2_i32_593, %c6_i32_594] : memref<6x8x!tpu.dma_semaphore, #tpu.memory_space<semaphore_mem>> -> memref<1x1x!tpu.dma_semaphore, #tpu.memory_space<semaphore_mem>>
    %503 = tpu.memref_squeeze %502 : memref<1x1x!tpu.dma_semaphore, #tpu.memory_space<semaphore_mem>> -> memref<!tpu.dma_semaphore, #tpu.memory_space<semaphore_mem>>
    tpu.wait_dma2 semaphore(%503 : memref<!tpu.dma_semaphore, #tpu.memory_space<semaphore_mem>>) src(%499 : memref<1x128xf32, #tpu.memory_space<any>>) dst(%501 : memref<1x128xf32, #tpu.memory_space<vmem>>)
    %c2_i32_598 = arith.constant 2 : i32
    %c2_i32_599 = arith.constant 2 : i32
    %c7_i32_600 = arith.constant 7 : i32
    %c0_i32_601 = arith.constant 0 : i32
    %504 = tpu.memref_slice %arg3[%191, %c0_i32_601] : memref<128x128xf32, #tpu.memory_space<any>> -> memref<1x128xf32, #tpu.memory_space<any>>
    %c15_i32_602 = arith.constant 15 : i32
    %c0_i32_603 = arith.constant 0 : i32
    %505 = tpu.memref_slice %arg4[%c2_i32_598, %c15_i32_602, %c0_i32_603] : memref<6x16x128xf32, #tpu.memory_space<vmem>> -> memref<1x1x128xf32, #tpu.memory_space<vmem>>
    %506 = tpu.memref_squeeze %505 : memref<1x1x128xf32, #tpu.memory_space<vmem>> -> memref<1x128xf32, #tpu.memory_space<vmem>>
    %507 = tpu.memref_slice %arg5[%c2_i32_599, %c7_i32_600] : memref<6x8x!tpu.dma_semaphore, #tpu.memory_space<semaphore_mem>> -> memref<1x1x!tpu.dma_semaphore, #tpu.memory_space<semaphore_mem>>
    %508 = tpu.memref_squeeze %507 : memref<1x1x!tpu.dma_semaphore, #tpu.memory_space<semaphore_mem>> -> memref<!tpu.dma_semaphore, #tpu.memory_space<semaphore_mem>>
    tpu.wait_dma2 semaphore(%508 : memref<!tpu.dma_semaphore, #tpu.memory_space<semaphore_mem>>) src(%504 : memref<1x128xf32, #tpu.memory_space<any>>) dst(%506 : memref<1x128xf32, #tpu.memory_space<vmem>>)
    %c3_i32_604 = arith.constant 3 : i32
    %c3_i32_605 = arith.constant 3 : i32
    %c0_i32_606 = arith.constant 0 : i32
    %c0_i32_607 = arith.constant 0 : i32
    %509 = tpu.memref_slice %arg3[%199, %c0_i32_607] : memref<128x128xf32, #tpu.memory_space<any>> -> memref<1x128xf32, #tpu.memory_space<any>>
    %c8_i32_608 = arith.constant 8 : i32
    %c0_i32_609 = arith.constant 0 : i32
    %510 = tpu.memref_slice %arg4[%c3_i32_604, %c8_i32_608, %c0_i32_609] : memref<6x16x128xf32, #tpu.memory_space<vmem>> -> memref<1x1x128xf32, #tpu.memory_space<vmem>>
    %511 = tpu.memref_squeeze %510 : memref<1x1x128xf32, #tpu.memory_space<vmem>> -> memref<1x128xf32, #tpu.memory_space<vmem>>
    %512 = tpu.memref_slice %arg5[%c3_i32_605, %c0_i32_606] : memref<6x8x!tpu.dma_semaphore, #tpu.memory_space<semaphore_mem>> -> memref<1x1x!tpu.dma_semaphore, #tpu.memory_space<semaphore_mem>>
    %513 = tpu.memref_squeeze %512 : memref<1x1x!tpu.dma_semaphore, #tpu.memory_space<semaphore_mem>> -> memref<!tpu.dma_semaphore, #tpu.memory_space<semaphore_mem>>
    tpu.wait_dma2 semaphore(%513 : memref<!tpu.dma_semaphore, #tpu.memory_space<semaphore_mem>>) src(%509 : memref<1x128xf32, #tpu.memory_space<any>>) dst(%511 : memref<1x128xf32, #tpu.memory_space<vmem>>)
    %c3_i32_610 = arith.constant 3 : i32
    %c3_i32_611 = arith.constant 3 : i32
    %c1_i32_612 = arith.constant 1 : i32
    %c0_i32_613 = arith.constant 0 : i32
    %514 = tpu.memref_slice %arg3[%207, %c0_i32_613] : memref<128x128xf32, #tpu.memory_space<any>> -> memref<1x128xf32, #tpu.memory_space<any>>
    %c9_i32_614 = arith.constant 9 : i32
    %c0_i32_615 = arith.constant 0 : i32
    %515 = tpu.memref_slice %arg4[%c3_i32_610, %c9_i32_614, %c0_i32_615] : memref<6x16x128xf32, #tpu.memory_space<vmem>> -> memref<1x1x128xf32, #tpu.memory_space<vmem>>
    %516 = tpu.memref_squeeze %515 : memref<1x1x128xf32, #tpu.memory_space<vmem>> -> memref<1x128xf32, #tpu.memory_space<vmem>>
    %517 = tpu.memref_slice %arg5[%c3_i32_611, %c1_i32_612] : memref<6x8x!tpu.dma_semaphore, #tpu.memory_space<semaphore_mem>> -> memref<1x1x!tpu.dma_semaphore, #tpu.memory_space<semaphore_mem>>
    %518 = tpu.memref_squeeze %517 : memref<1x1x!tpu.dma_semaphore, #tpu.memory_space<semaphore_mem>> -> memref<!tpu.dma_semaphore, #tpu.memory_space<semaphore_mem>>
    tpu.wait_dma2 semaphore(%518 : memref<!tpu.dma_semaphore, #tpu.memory_space<semaphore_mem>>) src(%514 : memref<1x128xf32, #tpu.memory_space<any>>) dst(%516 : memref<1x128xf32, #tpu.memory_space<vmem>>)
    %c3_i32_616 = arith.constant 3 : i32
    %c3_i32_617 = arith.constant 3 : i32
    %c2_i32_618 = arith.constant 2 : i32
    %c0_i32_619 = arith.constant 0 : i32
    %519 = tpu.memref_slice %arg3[%215, %c0_i32_619] : memref<128x128xf32, #tpu.memory_space<any>> -> memref<1x128xf32, #tpu.memory_space<any>>
    %c10_i32_620 = arith.constant 10 : i32
    %c0_i32_621 = arith.constant 0 : i32
    %520 = tpu.memref_slice %arg4[%c3_i32_616, %c10_i32_620, %c0_i32_621] : memref<6x16x128xf32, #tpu.memory_space<vmem>> -> memref<1x1x128xf32, #tpu.memory_space<vmem>>
    %521 = tpu.memref_squeeze %520 : memref<1x1x128xf32, #tpu.memory_space<vmem>> -> memref<1x128xf32, #tpu.memory_space<vmem>>
    %522 = tpu.memref_slice %arg5[%c3_i32_617, %c2_i32_618] : memref<6x8x!tpu.dma_semaphore, #tpu.memory_space<semaphore_mem>> -> memref<1x1x!tpu.dma_semaphore, #tpu.memory_space<semaphore_mem>>
    %523 = tpu.memref_squeeze %522 : memref<1x1x!tpu.dma_semaphore, #tpu.memory_space<semaphore_mem>> -> memref<!tpu.dma_semaphore, #tpu.memory_space<semaphore_mem>>
    tpu.wait_dma2 semaphore(%523 : memref<!tpu.dma_semaphore, #tpu.memory_space<semaphore_mem>>) src(%519 : memref<1x128xf32, #tpu.memory_space<any>>) dst(%521 : memref<1x128xf32, #tpu.memory_space<vmem>>)
    %c3_i32_622 = arith.constant 3 : i32
    %c3_i32_623 = arith.constant 3 : i32
    %c3_i32_624 = arith.constant 3 : i32
    %c0_i32_625 = arith.constant 0 : i32
    %524 = tpu.memref_slice %arg3[%223, %c0_i32_625] : memref<128x128xf32, #tpu.memory_space<any>> -> memref<1x128xf32, #tpu.memory_space<any>>
    %c11_i32_626 = arith.constant 11 : i32
    %c0_i32_627 = arith.constant 0 : i32
    %525 = tpu.memref_slice %arg4[%c3_i32_622, %c11_i32_626, %c0_i32_627] : memref<6x16x128xf32, #tpu.memory_space<vmem>> -> memref<1x1x128xf32, #tpu.memory_space<vmem>>
    %526 = tpu.memref_squeeze %525 : memref<1x1x128xf32, #tpu.memory_space<vmem>> -> memref<1x128xf32, #tpu.memory_space<vmem>>
    %527 = tpu.memref_slice %arg5[%c3_i32_623, %c3_i32_624] : memref<6x8x!tpu.dma_semaphore, #tpu.memory_space<semaphore_mem>> -> memref<1x1x!tpu.dma_semaphore, #tpu.memory_space<semaphore_mem>>
    %528 = tpu.memref_squeeze %527 : memref<1x1x!tpu.dma_semaphore, #tpu.memory_space<semaphore_mem>> -> memref<!tpu.dma_semaphore, #tpu.memory_space<semaphore_mem>>
    tpu.wait_dma2 semaphore(%528 : memref<!tpu.dma_semaphore, #tpu.memory_space<semaphore_mem>>) src(%524 : memref<1x128xf32, #tpu.memory_space<any>>) dst(%526 : memref<1x128xf32, #tpu.memory_space<vmem>>)
    %c3_i32_628 = arith.constant 3 : i32
    %c3_i32_629 = arith.constant 3 : i32
    %c4_i32_630 = arith.constant 4 : i32
    %c0_i32_631 = arith.constant 0 : i32
    %529 = tpu.memref_slice %arg3[%231, %c0_i32_631] : memref<128x128xf32, #tpu.memory_space<any>> -> memref<1x128xf32, #tpu.memory_space<any>>
    %c12_i32_632 = arith.constant 12 : i32
    %c0_i32_633 = arith.constant 0 : i32
    %530 = tpu.memref_slice %arg4[%c3_i32_628, %c12_i32_632, %c0_i32_633] : memref<6x16x128xf32, #tpu.memory_space<vmem>> -> memref<1x1x128xf32, #tpu.memory_space<vmem>>
    %531 = tpu.memref_squeeze %530 : memref<1x1x128xf32, #tpu.memory_space<vmem>> -> memref<1x128xf32, #tpu.memory_space<vmem>>
    %532 = tpu.memref_slice %arg5[%c3_i32_629, %c4_i32_630] : memref<6x8x!tpu.dma_semaphore, #tpu.memory_space<semaphore_mem>> -> memref<1x1x!tpu.dma_semaphore, #tpu.memory_space<semaphore_mem>>
    %533 = tpu.memref_squeeze %532 : memref<1x1x!tpu.dma_semaphore, #tpu.memory_space<semaphore_mem>> -> memref<!tpu.dma_semaphore, #tpu.memory_space<semaphore_mem>>
    tpu.wait_dma2 semaphore(%533 : memref<!tpu.dma_semaphore, #tpu.memory_space<semaphore_mem>>) src(%529 : memref<1x128xf32, #tpu.memory_space<any>>) dst(%531 : memref<1x128xf32, #tpu.memory_space<vmem>>)
    %c3_i32_634 = arith.constant 3 : i32
    %c3_i32_635 = arith.constant 3 : i32
    %c5_i32_636 = arith.constant 5 : i32
    %c0_i32_637 = arith.constant 0 : i32
    %534 = tpu.memref_slice %arg3[%239, %c0_i32_637] : memref<128x128xf32, #tpu.memory_space<any>> -> memref<1x128xf32, #tpu.memory_space<any>>
    %c13_i32_638 = arith.constant 13 : i32
    %c0_i32_639 = arith.constant 0 : i32
    %535 = tpu.memref_slice %arg4[%c3_i32_634, %c13_i32_638, %c0_i32_639] : memref<6x16x128xf32, #tpu.memory_space<vmem>> -> memref<1x1x128xf32, #tpu.memory_space<vmem>>
    %536 = tpu.memref_squeeze %535 : memref<1x1x128xf32, #tpu.memory_space<vmem>> -> memref<1x128xf32, #tpu.memory_space<vmem>>
    %537 = tpu.memref_slice %arg5[%c3_i32_635, %c5_i32_636] : memref<6x8x!tpu.dma_semaphore, #tpu.memory_space<semaphore_mem>> -> memref<1x1x!tpu.dma_semaphore, #tpu.memory_space<semaphore_mem>>
    %538 = tpu.memref_squeeze %537 : memref<1x1x!tpu.dma_semaphore, #tpu.memory_space<semaphore_mem>> -> memref<!tpu.dma_semaphore, #tpu.memory_space<semaphore_mem>>
    tpu.wait_dma2 semaphore(%538 : memref<!tpu.dma_semaphore, #tpu.memory_space<semaphore_mem>>) src(%534 : memref<1x128xf32, #tpu.memory_space<any>>) dst(%536 : memref<1x128xf32, #tpu.memory_space<vmem>>)
    %c3_i32_640 = arith.constant 3 : i32
    %c3_i32_641 = arith.constant 3 : i32
    %c6_i32_642 = arith.constant 6 : i32
    %c0_i32_643 = arith.constant 0 : i32
    %539 = tpu.memref_slice %arg3[%247, %c0_i32_643] : memref<128x128xf32, #tpu.memory_space<any>> -> memref<1x128xf32, #tpu.memory_space<any>>
    %c14_i32_644 = arith.constant 14 : i32
    %c0_i32_645 = arith.constant 0 : i32
    %540 = tpu.memref_slice %arg4[%c3_i32_640, %c14_i32_644, %c0_i32_645] : memref<6x16x128xf32, #tpu.memory_space<vmem>> -> memref<1x1x128xf32, #tpu.memory_space<vmem>>
    %541 = tpu.memref_squeeze %540 : memref<1x1x128xf32, #tpu.memory_space<vmem>> -> memref<1x128xf32, #tpu.memory_space<vmem>>
    %542 = tpu.memref_slice %arg5[%c3_i32_641, %c6_i32_642] : memref<6x8x!tpu.dma_semaphore, #tpu.memory_space<semaphore_mem>> -> memref<1x1x!tpu.dma_semaphore, #tpu.memory_space<semaphore_mem>>
    %543 = tpu.memref_squeeze %542 : memref<1x1x!tpu.dma_semaphore, #tpu.memory_space<semaphore_mem>> -> memref<!tpu.dma_semaphore, #tpu.memory_space<semaphore_mem>>
    tpu.wait_dma2 semaphore(%543 : memref<!tpu.dma_semaphore, #tpu.memory_space<semaphore_mem>>) src(%539 : memref<1x128xf32, #tpu.memory_space<any>>) dst(%541 : memref<1x128xf32, #tpu.memory_space<vmem>>)
    %c3_i32_646 = arith.constant 3 : i32
    %c3_i32_647 = arith.constant 3 : i32
    %c7_i32_648 = arith.constant 7 : i32
    %c0_i32_649 = arith.constant 0 : i32
    %544 = tpu.memref_slice %arg3[%255, %c0_i32_649] : memref<128x128xf32, #tpu.memory_space<any>> -> memref<1x128xf32, #tpu.memory_space<any>>
    %c15_i32_650 = arith.constant 15 : i32
    %c0_i32_651 = arith.constant 0 : i32
    %545 = tpu.memref_slice %arg4[%c3_i32_646, %c15_i32_650, %c0_i32_651] : memref<6x16x128xf32, #tpu.memory_space<vmem>> -> memref<1x1x128xf32, #tpu.memory_space<vmem>>
    %546 = tpu.memref_squeeze %545 : memref<1x1x128xf32, #tpu.memory_space<vmem>> -> memref<1x128xf32, #tpu.memory_space<vmem>>
    %547 = tpu.memref_slice %arg5[%c3_i32_647, %c7_i32_648] : memref<6x8x!tpu.dma_semaphore, #tpu.memory_space<semaphore_mem>> -> memref<1x1x!tpu.dma_semaphore, #tpu.memory_space<semaphore_mem>>
    %548 = tpu.memref_squeeze %547 : memref<1x1x!tpu.dma_semaphore, #tpu.memory_space<semaphore_mem>> -> memref<!tpu.dma_semaphore, #tpu.memory_space<semaphore_mem>>
    tpu.wait_dma2 semaphore(%548 : memref<!tpu.dma_semaphore, #tpu.memory_space<semaphore_mem>>) src(%544 : memref<1x128xf32, #tpu.memory_space<any>>) dst(%546 : memref<1x128xf32, #tpu.memory_space<vmem>>)
    %c4_i32_652 = arith.constant 4 : i32
    %c4_i32_653 = arith.constant 4 : i32
    %c0_i32_654 = arith.constant 0 : i32
    %c0_i32_655 = arith.constant 0 : i32
    %549 = tpu.memref_slice %arg3[%263, %c0_i32_655] : memref<128x128xf32, #tpu.memory_space<any>> -> memref<1x128xf32, #tpu.memory_space<any>>
    %c8_i32_656 = arith.constant 8 : i32
    %c0_i32_657 = arith.constant 0 : i32
    %550 = tpu.memref_slice %arg4[%c4_i32_652, %c8_i32_656, %c0_i32_657] : memref<6x16x128xf32, #tpu.memory_space<vmem>> -> memref<1x1x128xf32, #tpu.memory_space<vmem>>
    %551 = tpu.memref_squeeze %550 : memref<1x1x128xf32, #tpu.memory_space<vmem>> -> memref<1x128xf32, #tpu.memory_space<vmem>>
    %552 = tpu.memref_slice %arg5[%c4_i32_653, %c0_i32_654] : memref<6x8x!tpu.dma_semaphore, #tpu.memory_space<semaphore_mem>> -> memref<1x1x!tpu.dma_semaphore, #tpu.memory_space<semaphore_mem>>
    %553 = tpu.memref_squeeze %552 : memref<1x1x!tpu.dma_semaphore, #tpu.memory_space<semaphore_mem>> -> memref<!tpu.dma_semaphore, #tpu.memory_space<semaphore_mem>>
    tpu.wait_dma2 semaphore(%553 : memref<!tpu.dma_semaphore, #tpu.memory_space<semaphore_mem>>) src(%549 : memref<1x128xf32, #tpu.memory_space<any>>) dst(%551 : memref<1x128xf32, #tpu.memory_space<vmem>>)
    %c4_i32_658 = arith.constant 4 : i32
    %c4_i32_659 = arith.constant 4 : i32
    %c1_i32_660 = arith.constant 1 : i32
    %c0_i32_661 = arith.constant 0 : i32
    %554 = tpu.memref_slice %arg3[%271, %c0_i32_661] : memref<128x128xf32, #tpu.memory_space<any>> -> memref<1x128xf32, #tpu.memory_space<any>>
    %c9_i32_662 = arith.constant 9 : i32
    %c0_i32_663 = arith.constant 0 : i32
    %555 = tpu.memref_slice %arg4[%c4_i32_658, %c9_i32_662, %c0_i32_663] : memref<6x16x128xf32, #tpu.memory_space<vmem>> -> memref<1x1x128xf32, #tpu.memory_space<vmem>>
    %556 = tpu.memref_squeeze %555 : memref<1x1x128xf32, #tpu.memory_space<vmem>> -> memref<1x128xf32, #tpu.memory_space<vmem>>
    %557 = tpu.memref_slice %arg5[%c4_i32_659, %c1_i32_660] : memref<6x8x!tpu.dma_semaphore, #tpu.memory_space<semaphore_mem>> -> memref<1x1x!tpu.dma_semaphore, #tpu.memory_space<semaphore_mem>>
    %558 = tpu.memref_squeeze %557 : memref<1x1x!tpu.dma_semaphore, #tpu.memory_space<semaphore_mem>> -> memref<!tpu.dma_semaphore, #tpu.memory_space<semaphore_mem>>
    tpu.wait_dma2 semaphore(%558 : memref<!tpu.dma_semaphore, #tpu.memory_space<semaphore_mem>>) src(%554 : memref<1x128xf32, #tpu.memory_space<any>>) dst(%556 : memref<1x128xf32, #tpu.memory_space<vmem>>)
    %c4_i32_664 = arith.constant 4 : i32
    %c4_i32_665 = arith.constant 4 : i32
    %c2_i32_666 = arith.constant 2 : i32
    %c0_i32_667 = arith.constant 0 : i32
    %559 = tpu.memref_slice %arg3[%279, %c0_i32_667] : memref<128x128xf32, #tpu.memory_space<any>> -> memref<1x128xf32, #tpu.memory_space<any>>
    %c10_i32_668 = arith.constant 10 : i32
    %c0_i32_669 = arith.constant 0 : i32
    %560 = tpu.memref_slice %arg4[%c4_i32_664, %c10_i32_668, %c0_i32_669] : memref<6x16x128xf32, #tpu.memory_space<vmem>> -> memref<1x1x128xf32, #tpu.memory_space<vmem>>
    %561 = tpu.memref_squeeze %560 : memref<1x1x128xf32, #tpu.memory_space<vmem>> -> memref<1x128xf32, #tpu.memory_space<vmem>>
    %562 = tpu.memref_slice %arg5[%c4_i32_665, %c2_i32_666] : memref<6x8x!tpu.dma_semaphore, #tpu.memory_space<semaphore_mem>> -> memref<1x1x!tpu.dma_semaphore, #tpu.memory_space<semaphore_mem>>
    %563 = tpu.memref_squeeze %562 : memref<1x1x!tpu.dma_semaphore, #tpu.memory_space<semaphore_mem>> -> memref<!tpu.dma_semaphore, #tpu.memory_space<semaphore_mem>>
    tpu.wait_dma2 semaphore(%563 : memref<!tpu.dma_semaphore, #tpu.memory_space<semaphore_mem>>) src(%559 : memref<1x128xf32, #tpu.memory_space<any>>) dst(%561 : memref<1x128xf32, #tpu.memory_space<vmem>>)
    %c4_i32_670 = arith.constant 4 : i32
    %c4_i32_671 = arith.constant 4 : i32
    %c3_i32_672 = arith.constant 3 : i32
    %c0_i32_673 = arith.constant 0 : i32
    %564 = tpu.memref_slice %arg3[%287, %c0_i32_673] : memref<128x128xf32, #tpu.memory_space<any>> -> memref<1x128xf32, #tpu.memory_space<any>>
    %c11_i32_674 = arith.constant 11 : i32
    %c0_i32_675 = arith.constant 0 : i32
    %565 = tpu.memref_slice %arg4[%c4_i32_670, %c11_i32_674, %c0_i32_675] : memref<6x16x128xf32, #tpu.memory_space<vmem>> -> memref<1x1x128xf32, #tpu.memory_space<vmem>>
    %566 = tpu.memref_squeeze %565 : memref<1x1x128xf32, #tpu.memory_space<vmem>> -> memref<1x128xf32, #tpu.memory_space<vmem>>
    %567 = tpu.memref_slice %arg5[%c4_i32_671, %c3_i32_672] : memref<6x8x!tpu.dma_semaphore, #tpu.memory_space<semaphore_mem>> -> memref<1x1x!tpu.dma_semaphore, #tpu.memory_space<semaphore_mem>>
    %568 = tpu.memref_squeeze %567 : memref<1x1x!tpu.dma_semaphore, #tpu.memory_space<semaphore_mem>> -> memref<!tpu.dma_semaphore, #tpu.memory_space<semaphore_mem>>
    tpu.wait_dma2 semaphore(%568 : memref<!tpu.dma_semaphore, #tpu.memory_space<semaphore_mem>>) src(%564 : memref<1x128xf32, #tpu.memory_space<any>>) dst(%566 : memref<1x128xf32, #tpu.memory_space<vmem>>)
    %c4_i32_676 = arith.constant 4 : i32
    %c4_i32_677 = arith.constant 4 : i32
    %c4_i32_678 = arith.constant 4 : i32
    %c0_i32_679 = arith.constant 0 : i32
    %569 = tpu.memref_slice %arg3[%295, %c0_i32_679] : memref<128x128xf32, #tpu.memory_space<any>> -> memref<1x128xf32, #tpu.memory_space<any>>
    %c12_i32_680 = arith.constant 12 : i32
    %c0_i32_681 = arith.constant 0 : i32
    %570 = tpu.memref_slice %arg4[%c4_i32_676, %c12_i32_680, %c0_i32_681] : memref<6x16x128xf32, #tpu.memory_space<vmem>> -> memref<1x1x128xf32, #tpu.memory_space<vmem>>
    %571 = tpu.memref_squeeze %570 : memref<1x1x128xf32, #tpu.memory_space<vmem>> -> memref<1x128xf32, #tpu.memory_space<vmem>>
    %572 = tpu.memref_slice %arg5[%c4_i32_677, %c4_i32_678] : memref<6x8x!tpu.dma_semaphore, #tpu.memory_space<semaphore_mem>> -> memref<1x1x!tpu.dma_semaphore, #tpu.memory_space<semaphore_mem>>
    %573 = tpu.memref_squeeze %572 : memref<1x1x!tpu.dma_semaphore, #tpu.memory_space<semaphore_mem>> -> memref<!tpu.dma_semaphore, #tpu.memory_space<semaphore_mem>>
    tpu.wait_dma2 semaphore(%573 : memref<!tpu.dma_semaphore, #tpu.memory_space<semaphore_mem>>) src(%569 : memref<1x128xf32, #tpu.memory_space<any>>) dst(%571 : memref<1x128xf32, #tpu.memory_space<vmem>>)
    %c4_i32_682 = arith.constant 4 : i32
    %c4_i32_683 = arith.constant 4 : i32
    %c5_i32_684 = arith.constant 5 : i32
    %c0_i32_685 = arith.constant 0 : i32
    %574 = tpu.memref_slice %arg3[%303, %c0_i32_685] : memref<128x128xf32, #tpu.memory_space<any>> -> memref<1x128xf32, #tpu.memory_space<any>>
    %c13_i32_686 = arith.constant 13 : i32
    %c0_i32_687 = arith.constant 0 : i32
    %575 = tpu.memref_slice %arg4[%c4_i32_682, %c13_i32_686, %c0_i32_687] : memref<6x16x128xf32, #tpu.memory_space<vmem>> -> memref<1x1x128xf32, #tpu.memory_space<vmem>>
    %576 = tpu.memref_squeeze %575 : memref<1x1x128xf32, #tpu.memory_space<vmem>> -> memref<1x128xf32, #tpu.memory_space<vmem>>
    %577 = tpu.memref_slice %arg5[%c4_i32_683, %c5_i32_684] : memref<6x8x!tpu.dma_semaphore, #tpu.memory_space<semaphore_mem>> -> memref<1x1x!tpu.dma_semaphore, #tpu.memory_space<semaphore_mem>>
    %578 = tpu.memref_squeeze %577 : memref<1x1x!tpu.dma_semaphore, #tpu.memory_space<semaphore_mem>> -> memref<!tpu.dma_semaphore, #tpu.memory_space<semaphore_mem>>
    tpu.wait_dma2 semaphore(%578 : memref<!tpu.dma_semaphore, #tpu.memory_space<semaphore_mem>>) src(%574 : memref<1x128xf32, #tpu.memory_space<any>>) dst(%576 : memref<1x128xf32, #tpu.memory_space<vmem>>)
    %c4_i32_688 = arith.constant 4 : i32
    %c4_i32_689 = arith.constant 4 : i32
    %c6_i32_690 = arith.constant 6 : i32
    %c0_i32_691 = arith.constant 0 : i32
    %579 = tpu.memref_slice %arg3[%311, %c0_i32_691] : memref<128x128xf32, #tpu.memory_space<any>> -> memref<1x128xf32, #tpu.memory_space<any>>
    %c14_i32_692 = arith.constant 14 : i32
    %c0_i32_693 = arith.constant 0 : i32
    %580 = tpu.memref_slice %arg4[%c4_i32_688, %c14_i32_692, %c0_i32_693] : memref<6x16x128xf32, #tpu.memory_space<vmem>> -> memref<1x1x128xf32, #tpu.memory_space<vmem>>
    %581 = tpu.memref_squeeze %580 : memref<1x1x128xf32, #tpu.memory_space<vmem>> -> memref<1x128xf32, #tpu.memory_space<vmem>>
    %582 = tpu.memref_slice %arg5[%c4_i32_689, %c6_i32_690] : memref<6x8x!tpu.dma_semaphore, #tpu.memory_space<semaphore_mem>> -> memref<1x1x!tpu.dma_semaphore, #tpu.memory_space<semaphore_mem>>
    %583 = tpu.memref_squeeze %582 : memref<1x1x!tpu.dma_semaphore, #tpu.memory_space<semaphore_mem>> -> memref<!tpu.dma_semaphore, #tpu.memory_space<semaphore_mem>>
    tpu.wait_dma2 semaphore(%583 : memref<!tpu.dma_semaphore, #tpu.memory_space<semaphore_mem>>) src(%579 : memref<1x128xf32, #tpu.memory_space<any>>) dst(%581 : memref<1x128xf32, #tpu.memory_space<vmem>>)
    %c4_i32_694 = arith.constant 4 : i32
    %c4_i32_695 = arith.constant 4 : i32
    %c7_i32_696 = arith.constant 7 : i32
    %c0_i32_697 = arith.constant 0 : i32
    %584 = tpu.memref_slice %arg3[%319, %c0_i32_697] : memref<128x128xf32, #tpu.memory_space<any>> -> memref<1x128xf32, #tpu.memory_space<any>>
    %c15_i32_698 = arith.constant 15 : i32
    %c0_i32_699 = arith.constant 0 : i32
    %585 = tpu.memref_slice %arg4[%c4_i32_694, %c15_i32_698, %c0_i32_699] : memref<6x16x128xf32, #tpu.memory_space<vmem>> -> memref<1x1x128xf32, #tpu.memory_space<vmem>>
    %586 = tpu.memref_squeeze %585 : memref<1x1x128xf32, #tpu.memory_space<vmem>> -> memref<1x128xf32, #tpu.memory_space<vmem>>
    %587 = tpu.memref_slice %arg5[%c4_i32_695, %c7_i32_696] : memref<6x8x!tpu.dma_semaphore, #tpu.memory_space<semaphore_mem>> -> memref<1x1x!tpu.dma_semaphore, #tpu.memory_space<semaphore_mem>>
    %588 = tpu.memref_squeeze %587 : memref<1x1x!tpu.dma_semaphore, #tpu.memory_space<semaphore_mem>> -> memref<!tpu.dma_semaphore, #tpu.memory_space<semaphore_mem>>
    tpu.wait_dma2 semaphore(%588 : memref<!tpu.dma_semaphore, #tpu.memory_space<semaphore_mem>>) src(%584 : memref<1x128xf32, #tpu.memory_space<any>>) dst(%586 : memref<1x128xf32, #tpu.memory_space<vmem>>)
    %c5_i32_700 = arith.constant 5 : i32
    %c5_i32_701 = arith.constant 5 : i32
    %c0_i32_702 = arith.constant 0 : i32
    %c0_i32_703 = arith.constant 0 : i32
    %589 = tpu.memref_slice %arg3[%327, %c0_i32_703] : memref<128x128xf32, #tpu.memory_space<any>> -> memref<1x128xf32, #tpu.memory_space<any>>
    %c8_i32_704 = arith.constant 8 : i32
    %c0_i32_705 = arith.constant 0 : i32
    %590 = tpu.memref_slice %arg4[%c5_i32_700, %c8_i32_704, %c0_i32_705] : memref<6x16x128xf32, #tpu.memory_space<vmem>> -> memref<1x1x128xf32, #tpu.memory_space<vmem>>
    %591 = tpu.memref_squeeze %590 : memref<1x1x128xf32, #tpu.memory_space<vmem>> -> memref<1x128xf32, #tpu.memory_space<vmem>>
    %592 = tpu.memref_slice %arg5[%c5_i32_701, %c0_i32_702] : memref<6x8x!tpu.dma_semaphore, #tpu.memory_space<semaphore_mem>> -> memref<1x1x!tpu.dma_semaphore, #tpu.memory_space<semaphore_mem>>
    %593 = tpu.memref_squeeze %592 : memref<1x1x!tpu.dma_semaphore, #tpu.memory_space<semaphore_mem>> -> memref<!tpu.dma_semaphore, #tpu.memory_space<semaphore_mem>>
    tpu.wait_dma2 semaphore(%593 : memref<!tpu.dma_semaphore, #tpu.memory_space<semaphore_mem>>) src(%589 : memref<1x128xf32, #tpu.memory_space<any>>) dst(%591 : memref<1x128xf32, #tpu.memory_space<vmem>>)
    %c5_i32_706 = arith.constant 5 : i32
    %c5_i32_707 = arith.constant 5 : i32
    %c1_i32_708 = arith.constant 1 : i32
    %c0_i32_709 = arith.constant 0 : i32
    %594 = tpu.memref_slice %arg3[%335, %c0_i32_709] : memref<128x128xf32, #tpu.memory_space<any>> -> memref<1x128xf32, #tpu.memory_space<any>>
    %c9_i32_710 = arith.constant 9 : i32
    %c0_i32_711 = arith.constant 0 : i32
    %595 = tpu.memref_slice %arg4[%c5_i32_706, %c9_i32_710, %c0_i32_711] : memref<6x16x128xf32, #tpu.memory_space<vmem>> -> memref<1x1x128xf32, #tpu.memory_space<vmem>>
    %596 = tpu.memref_squeeze %595 : memref<1x1x128xf32, #tpu.memory_space<vmem>> -> memref<1x128xf32, #tpu.memory_space<vmem>>
    %597 = tpu.memref_slice %arg5[%c5_i32_707, %c1_i32_708] : memref<6x8x!tpu.dma_semaphore, #tpu.memory_space<semaphore_mem>> -> memref<1x1x!tpu.dma_semaphore, #tpu.memory_space<semaphore_mem>>
    %598 = tpu.memref_squeeze %597 : memref<1x1x!tpu.dma_semaphore, #tpu.memory_space<semaphore_mem>> -> memref<!tpu.dma_semaphore, #tpu.memory_space<semaphore_mem>>
    tpu.wait_dma2 semaphore(%598 : memref<!tpu.dma_semaphore, #tpu.memory_space<semaphore_mem>>) src(%594 : memref<1x128xf32, #tpu.memory_space<any>>) dst(%596 : memref<1x128xf32, #tpu.memory_space<vmem>>)
    %c5_i32_712 = arith.constant 5 : i32
    %c5_i32_713 = arith.constant 5 : i32
    %c2_i32_714 = arith.constant 2 : i32
    %c0_i32_715 = arith.constant 0 : i32
    %599 = tpu.memref_slice %arg3[%343, %c0_i32_715] : memref<128x128xf32, #tpu.memory_space<any>> -> memref<1x128xf32, #tpu.memory_space<any>>
    %c10_i32_716 = arith.constant 10 : i32
    %c0_i32_717 = arith.constant 0 : i32
    %600 = tpu.memref_slice %arg4[%c5_i32_712, %c10_i32_716, %c0_i32_717] : memref<6x16x128xf32, #tpu.memory_space<vmem>> -> memref<1x1x128xf32, #tpu.memory_space<vmem>>
    %601 = tpu.memref_squeeze %600 : memref<1x1x128xf32, #tpu.memory_space<vmem>> -> memref<1x128xf32, #tpu.memory_space<vmem>>
    %602 = tpu.memref_slice %arg5[%c5_i32_713, %c2_i32_714] : memref<6x8x!tpu.dma_semaphore, #tpu.memory_space<semaphore_mem>> -> memref<1x1x!tpu.dma_semaphore, #tpu.memory_space<semaphore_mem>>
    %603 = tpu.memref_squeeze %602 : memref<1x1x!tpu.dma_semaphore, #tpu.memory_space<semaphore_mem>> -> memref<!tpu.dma_semaphore, #tpu.memory_space<semaphore_mem>>
    tpu.wait_dma2 semaphore(%603 : memref<!tpu.dma_semaphore, #tpu.memory_space<semaphore_mem>>) src(%599 : memref<1x128xf32, #tpu.memory_space<any>>) dst(%601 : memref<1x128xf32, #tpu.memory_space<vmem>>)
    %c5_i32_718 = arith.constant 5 : i32
    %c5_i32_719 = arith.constant 5 : i32
    %c3_i32_720 = arith.constant 3 : i32
    %c0_i32_721 = arith.constant 0 : i32
    %604 = tpu.memref_slice %arg3[%351, %c0_i32_721] : memref<128x128xf32, #tpu.memory_space<any>> -> memref<1x128xf32, #tpu.memory_space<any>>
    %c11_i32_722 = arith.constant 11 : i32
    %c0_i32_723 = arith.constant 0 : i32
    %605 = tpu.memref_slice %arg4[%c5_i32_718, %c11_i32_722, %c0_i32_723] : memref<6x16x128xf32, #tpu.memory_space<vmem>> -> memref<1x1x128xf32, #tpu.memory_space<vmem>>
    %606 = tpu.memref_squeeze %605 : memref<1x1x128xf32, #tpu.memory_space<vmem>> -> memref<1x128xf32, #tpu.memory_space<vmem>>
    %607 = tpu.memref_slice %arg5[%c5_i32_719, %c3_i32_720] : memref<6x8x!tpu.dma_semaphore, #tpu.memory_space<semaphore_mem>> -> memref<1x1x!tpu.dma_semaphore, #tpu.memory_space<semaphore_mem>>
    %608 = tpu.memref_squeeze %607 : memref<1x1x!tpu.dma_semaphore, #tpu.memory_space<semaphore_mem>> -> memref<!tpu.dma_semaphore, #tpu.memory_space<semaphore_mem>>
    tpu.wait_dma2 semaphore(%608 : memref<!tpu.dma_semaphore, #tpu.memory_space<semaphore_mem>>) src(%604 : memref<1x128xf32, #tpu.memory_space<any>>) dst(%606 : memref<1x128xf32, #tpu.memory_space<vmem>>)
    %c5_i32_724 = arith.constant 5 : i32
    %c5_i32_725 = arith.constant 5 : i32
    %c4_i32_726 = arith.constant 4 : i32
    %c0_i32_727 = arith.constant 0 : i32
    %609 = tpu.memref_slice %arg3[%359, %c0_i32_727] : memref<128x128xf32, #tpu.memory_space<any>> -> memref<1x128xf32, #tpu.memory_space<any>>
    %c12_i32_728 = arith.constant 12 : i32
    %c0_i32_729 = arith.constant 0 : i32
    %610 = tpu.memref_slice %arg4[%c5_i32_724, %c12_i32_728, %c0_i32_729] : memref<6x16x128xf32, #tpu.memory_space<vmem>> -> memref<1x1x128xf32, #tpu.memory_space<vmem>>
    %611 = tpu.memref_squeeze %610 : memref<1x1x128xf32, #tpu.memory_space<vmem>> -> memref<1x128xf32, #tpu.memory_space<vmem>>
    %612 = tpu.memref_slice %arg5[%c5_i32_725, %c4_i32_726] : memref<6x8x!tpu.dma_semaphore, #tpu.memory_space<semaphore_mem>> -> memref<1x1x!tpu.dma_semaphore, #tpu.memory_space<semaphore_mem>>
    %613 = tpu.memref_squeeze %612 : memref<1x1x!tpu.dma_semaphore, #tpu.memory_space<semaphore_mem>> -> memref<!tpu.dma_semaphore, #tpu.memory_space<semaphore_mem>>
    tpu.wait_dma2 semaphore(%613 : memref<!tpu.dma_semaphore, #tpu.memory_space<semaphore_mem>>) src(%609 : memref<1x128xf32, #tpu.memory_space<any>>) dst(%611 : memref<1x128xf32, #tpu.memory_space<vmem>>)
    %c5_i32_730 = arith.constant 5 : i32
    %c5_i32_731 = arith.constant 5 : i32
    %c5_i32_732 = arith.constant 5 : i32
    %c0_i32_733 = arith.constant 0 : i32
    %614 = tpu.memref_slice %arg3[%367, %c0_i32_733] : memref<128x128xf32, #tpu.memory_space<any>> -> memref<1x128xf32, #tpu.memory_space<any>>
    %c13_i32_734 = arith.constant 13 : i32
    %c0_i32_735 = arith.constant 0 : i32
    %615 = tpu.memref_slice %arg4[%c5_i32_730, %c13_i32_734, %c0_i32_735] : memref<6x16x128xf32, #tpu.memory_space<vmem>> -> memref<1x1x128xf32, #tpu.memory_space<vmem>>
    %616 = tpu.memref_squeeze %615 : memref<1x1x128xf32, #tpu.memory_space<vmem>> -> memref<1x128xf32, #tpu.memory_space<vmem>>
    %617 = tpu.memref_slice %arg5[%c5_i32_731, %c5_i32_732] : memref<6x8x!tpu.dma_semaphore, #tpu.memory_space<semaphore_mem>> -> memref<1x1x!tpu.dma_semaphore, #tpu.memory_space<semaphore_mem>>
    %618 = tpu.memref_squeeze %617 : memref<1x1x!tpu.dma_semaphore, #tpu.memory_space<semaphore_mem>> -> memref<!tpu.dma_semaphore, #tpu.memory_space<semaphore_mem>>
    tpu.wait_dma2 semaphore(%618 : memref<!tpu.dma_semaphore, #tpu.memory_space<semaphore_mem>>) src(%614 : memref<1x128xf32, #tpu.memory_space<any>>) dst(%616 : memref<1x128xf32, #tpu.memory_space<vmem>>)
    %c5_i32_736 = arith.constant 5 : i32
    %c5_i32_737 = arith.constant 5 : i32
    %c6_i32_738 = arith.constant 6 : i32
    %c0_i32_739 = arith.constant 0 : i32
    %619 = tpu.memref_slice %arg3[%375, %c0_i32_739] : memref<128x128xf32, #tpu.memory_space<any>> -> memref<1x128xf32, #tpu.memory_space<any>>
    %c14_i32_740 = arith.constant 14 : i32
    %c0_i32_741 = arith.constant 0 : i32
    %620 = tpu.memref_slice %arg4[%c5_i32_736, %c14_i32_740, %c0_i32_741] : memref<6x16x128xf32, #tpu.memory_space<vmem>> -> memref<1x1x128xf32, #tpu.memory_space<vmem>>
    %621 = tpu.memref_squeeze %620 : memref<1x1x128xf32, #tpu.memory_space<vmem>> -> memref<1x128xf32, #tpu.memory_space<vmem>>
    %622 = tpu.memref_slice %arg5[%c5_i32_737, %c6_i32_738] : memref<6x8x!tpu.dma_semaphore, #tpu.memory_space<semaphore_mem>> -> memref<1x1x!tpu.dma_semaphore, #tpu.memory_space<semaphore_mem>>
    %623 = tpu.memref_squeeze %622 : memref<1x1x!tpu.dma_semaphore, #tpu.memory_space<semaphore_mem>> -> memref<!tpu.dma_semaphore, #tpu.memory_space<semaphore_mem>>
    tpu.wait_dma2 semaphore(%623 : memref<!tpu.dma_semaphore, #tpu.memory_space<semaphore_mem>>) src(%619 : memref<1x128xf32, #tpu.memory_space<any>>) dst(%621 : memref<1x128xf32, #tpu.memory_space<vmem>>)
    %c5_i32_742 = arith.constant 5 : i32
    %c5_i32_743 = arith.constant 5 : i32
    %c7_i32_744 = arith.constant 7 : i32
    %c0_i32_745 = arith.constant 0 : i32
    %624 = tpu.memref_slice %arg3[%383, %c0_i32_745] : memref<128x128xf32, #tpu.memory_space<any>> -> memref<1x128xf32, #tpu.memory_space<any>>
    %c15_i32_746 = arith.constant 15 : i32
    %c0_i32_747 = arith.constant 0 : i32
    %625 = tpu.memref_slice %arg4[%c5_i32_742, %c15_i32_746, %c0_i32_747] : memref<6x16x128xf32, #tpu.memory_space<vmem>> -> memref<1x1x128xf32, #tpu.memory_space<vmem>>
    %626 = tpu.memref_squeeze %625 : memref<1x1x128xf32, #tpu.memory_space<vmem>> -> memref<1x128xf32, #tpu.memory_space<vmem>>
    %627 = tpu.memref_slice %arg5[%c5_i32_743, %c7_i32_744] : memref<6x8x!tpu.dma_semaphore, #tpu.memory_space<semaphore_mem>> -> memref<1x1x!tpu.dma_semaphore, #tpu.memory_space<semaphore_mem>>
    %628 = tpu.memref_squeeze %627 : memref<1x1x!tpu.dma_semaphore, #tpu.memory_space<semaphore_mem>> -> memref<!tpu.dma_semaphore, #tpu.memory_space<semaphore_mem>>
    tpu.wait_dma2 semaphore(%628 : memref<!tpu.dma_semaphore, #tpu.memory_space<semaphore_mem>>) src(%624 : memref<1x128xf32, #tpu.memory_space<any>>) dst(%626 : memref<1x128xf32, #tpu.memory_space<vmem>>)
    return
  }
  func.func @transform_0(%arg0: i32) -> (i32, i32) {
    %c0_i32 = arith.constant 0 : i32
    %c0_i32_0 = arith.constant 0 : i32
    return %arg0, %c0_i32 : i32, i32
  }
  func.func @transform_1(%arg0: i32) -> (i32, i32) {
    %c0_i32 = arith.constant 0 : i32
    %c0_i32_0 = arith.constant 0 : i32
    %c0_i32_1 = arith.constant 0 : i32
    return %c0_i32, %c0_i32_0 : i32, i32
  }
  func.func @transform_3(%arg0: i32) -> (i32, i32, i32) {
    %c0_i32 = arith.constant 0 : i32
    %c0_i32_0 = arith.constant 0 : i32
    %c0_i32_1 = arith.constant 0 : i32
    return %arg0, %c0_i32, %c0_i32_0 : i32, i32, i32
  }
}

</mosaic_0001>

<llo_original>
// kernel: tpu_custom_call.1
$region0: #{tpu_custom_call.1}
  #allocation0 [shape = 'u32[]', space=smem, size = 0x4, offset = 0x4, fixed_abs, tag = 'smem constant byte address 0x4 - core index']
  #allocation1 [shape = 'u32[144,128]{1,0:T(1,128)}', space=vmem, size = 0x12000, scoped, tag = 'internal scratch']
  #allocation2 [shape = 's32[48]{0}', space=sflag, size = 0xc0, scoped, tag = 'scratch operand']
  #allocation9 [shape = 's32[]', space=sflag, size = 0x4, offset = 0, fixed_abs, tag = 'sflag constant byte address 0x0 - dummy sync flag']
  #allocation10 [shape = 's32[]', space=sflag, size = 0x4, offset = 0, fixed_abs, tag = 'sflag constant byte address 0x0 - dummy sync flag']
  #allocation11 [shape = 'u32[]', space=smem, size = 0x4, offset = 0x44, fixed_abs, tag = 'smem constant byte address 0x44 - assertion arg 0']
  #allocation12 [shape = 'u32[]', space=smem, size = 0x4, offset = 0x48, fixed_abs, tag = 'smem constant byte address 0x48 - assertion arg 1']
  #allocation13 [shape = 's32[]', space=sflag, size = 0x4, offset = 0, fixed_abs, tag = 'sflag constant byte address 0x0 - dummy sync flag']
  #allocation14 [shape = 's32[]', space=sflag, size = 0x4, offset = 0, fixed_abs, tag = 'sflag constant byte address 0x0 - dummy sync flag']
  #allocation15 [shape = 's32[]', space=sflag, size = 0x4, offset = 0, fixed_abs, tag = 'sflag constant byte address 0x0 - dummy sync flag']
  #allocation16 [shape = 's32[]', space=sflag, size = 0x4, offset = 0, fixed_abs, tag = 'sflag constant byte address 0x0 - dummy sync flag']
  #allocation17 [shape = 's32[]', space=sflag, size = 0x4, offset = 0, fixed_abs, tag = 'sflag constant byte address 0x0 - dummy sync flag']
  #allocation18 [shape = 's32[]', space=sflag, size = 0x4, offset = 0, fixed_abs, tag = 'sflag constant byte address 0x0 - dummy sync flag']
  #allocation19 [shape = 's32[]', space=sflag, size = 0x4, offset = 0, fixed_abs, tag = 'sflag constant byte address 0x0 - dummy sync flag']
  #allocation20 [shape = 's32[]', space=sflag, size = 0x4, offset = 0, fixed_abs, tag = 'sflag constant byte address 0x0 - dummy sync flag']
  #allocation21 [shape = 's32[]', space=sflag, size = 0x4, offset = 0, fixed_abs, tag = 'sflag constant byte address 0x0 - dummy sync flag']
  #allocation22 [shape = 's32[]', space=sflag, size = 0x4, offset = 0, fixed_abs, tag = 'sflag constant byte address 0x0 - dummy sync flag']
  #allocation23 [shape = 's32[]', space=sflag, size = 0x4, offset = 0, fixed_abs, tag = 'sflag constant byte address 0x0 - dummy sync flag']
  #allocation24 [shape = 's32[]', space=sflag, size = 0x4, offset = 0, fixed_abs, tag = 'sflag constant byte address 0x0 - dummy sync flag']
  #allocation25 [shape = 's32[]', space=sflag, size = 0x4, offset = 0, fixed_abs, tag = 'sflag constant byte address 0x0 - dummy sync flag']
  #allocation26 [shape = 's32[]', space=sflag, size = 0x4, offset = 0, fixed_abs, tag = 'sflag constant byte address 0x0 - dummy sync flag']
  #allocation27 [shape = 's32[]', space=sflag, size = 0x4, offset = 0, fixed_abs, tag = 'sflag constant byte address 0x0 - dummy sync flag']
  #allocation28 [shape = 's32[]', space=sflag, size = 0x4, offset = 0, fixed_abs, tag = 'sflag constant byte address 0x0 - dummy sync flag']
  #allocation29 [shape = 's32[]', space=sflag, size = 0x4, offset = 0, fixed_abs, tag = 'sflag constant byte address 0x0 - dummy sync flag']
  #allocation30 [shape = 's32[]', space=sflag, size = 0x4, offset = 0, fixed_abs, tag = 'sflag constant byte address 0x0 - dummy sync flag']
  #allocation31 [shape = 's32[]', space=sflag, size = 0x4, offset = 0, fixed_abs, tag = 'sflag constant byte address 0x0 - dummy sync flag']
  #allocation32 [shape = 's32[]', space=sflag, size = 0x4, offset = 0, fixed_abs, tag = 'sflag constant byte address 0x0 - dummy sync flag']
  #allocation33 [shape = 's32[]', space=sflag, size = 0x4, offset = 0, fixed_abs, tag = 'sflag constant byte address 0x0 - dummy sync flag']
  #allocation34 [shape = 's32[]', space=sflag, size = 0x4, offset = 0, fixed_abs, tag = 'sflag constant byte address 0x0 - dummy sync flag']
  #allocation35 [shape = 's32[]', space=sflag, size = 0x4, offset = 0, fixed_abs, tag = 'sflag constant byte address 0x0 - dummy sync flag']
  #allocation36 [shape = 's32[]', space=sflag, size = 0x4, offset = 0, fixed_abs, tag = 'sflag constant byte address 0x0 - dummy sync flag']
  #allocation37 [shape = 's32[]', space=sflag, size = 0x4, offset = 0, fixed_abs, tag = 'sflag constant byte address 0x0 - dummy sync flag']
  #allocation38 [shape = 's32[]', space=sflag, size = 0x4, offset = 0, fixed_abs, tag = 'sflag constant byte address 0x0 - dummy sync flag']
  #allocation39 [shape = 's32[]', space=sflag, size = 0x4, offset = 0, fixed_abs, tag = 'sflag constant byte address 0x0 - dummy sync flag']
  #allocation40 [shape = 's32[]', space=sflag, size = 0x4, offset = 0, fixed_abs, tag = 'sflag constant byte address 0x0 - dummy sync flag']
  #allocation41 [shape = 's32[]', space=sflag, size = 0x4, offset = 0, fixed_abs, tag = 'sflag constant byte address 0x0 - dummy sync flag']
  #allocation42 [shape = 's32[]', space=sflag, size = 0x4, offset = 0, fixed_abs, tag = 'sflag constant byte address 0x0 - dummy sync flag']
  #allocation43 [shape = 's32[]', space=sflag, size = 0x4, offset = 0, fixed_abs, tag = 'sflag constant byte address 0x0 - dummy sync flag']
  #allocation44 [shape = 's32[]', space=sflag, size = 0x4, offset = 0, fixed_abs, tag = 'sflag constant byte address 0x0 - dummy sync flag']
  #allocation45 [shape = 's32[]', space=sflag, size = 0x4, offset = 0, fixed_abs, tag = 'sflag constant byte address 0x0 - dummy sync flag']
  #allocation46 [shape = 's32[]', space=sflag, size = 0x4, offset = 0, fixed_abs, tag = 'sflag constant byte address 0x0 - dummy sync flag']
  #allocation47 [shape = 's32[]', space=sflag, size = 0x4, offset = 0, fixed_abs, tag = 'sflag constant byte address 0x0 - dummy sync flag']
  #allocation48 [shape = 's32[]', space=sflag, size = 0x4, offset = 0, fixed_abs, tag = 'sflag constant byte address 0x0 - dummy sync flag']
  #allocation49 [shape = 's32[]', space=sflag, size = 0x4, offset = 0, fixed_abs, tag = 'sflag constant byte address 0x0 - dummy sync flag']
  #allocation50 [shape = 's32[]', space=sflag, size = 0x4, offset = 0, fixed_abs, tag = 'sflag constant byte address 0x0 - dummy sync flag']
  #allocation51 [shape = 's32[]', space=sflag, size = 0x4, offset = 0, fixed_abs, tag = 'sflag constant byte address 0x0 - dummy sync flag']
  #allocation52 [shape = 's32[]', space=sflag, size = 0x4, offset = 0, fixed_abs, tag = 'sflag constant byte address 0x0 - dummy sync flag']
  #allocation53 [shape = 's32[]', space=sflag, size = 0x4, offset = 0, fixed_abs, tag = 'sflag constant byte address 0x0 - dummy sync flag']
  #allocation54 [shape = 's32[]', space=sflag, size = 0x4, offset = 0, fixed_abs, tag = 'sflag constant byte address 0x0 - dummy sync flag']
  #allocation55 [shape = 's32[]', space=sflag, size = 0x4, offset = 0, fixed_abs, tag = 'sflag constant byte address 0x0 - dummy sync flag']
  #allocation56 [shape = 's32[]', space=sflag, size = 0x4, offset = 0, fixed_abs, tag = 'sflag constant byte address 0x0 - dummy sync flag']
  #allocation57 [shape = 's32[]', space=sflag, size = 0x4, offset = 0, fixed_abs, tag = 'sflag constant byte address 0x0 - dummy sync flag']
  #allocation58 [shape = 's32[]', space=sflag, size = 0x4, offset = 0, fixed_abs, tag = 'sflag constant byte address 0x0 - dummy sync flag']
  #allocation59 [shape = 's32[]', space=sflag, size = 0x4, offset = 0, fixed_abs, tag = 'sflag constant byte address 0x0 - dummy sync flag']
  #allocation60 [shape = 's32[]', space=sflag, size = 0x4, offset = 0, fixed_abs, tag = 'sflag constant byte address 0x0 - dummy sync flag']
  #allocation61 [shape = 's32[]', space=sflag, size = 0x4, offset = 0, fixed_abs, tag = 'sflag constant byte address 0x0 - dummy sync flag']
  #allocation62 [shape = 's32[]', space=sflag, size = 0x4, offset = 0, fixed_abs, tag = 'sflag constant byte address 0x0 - dummy sync flag']
  #allocation63 [shape = 's32[]', space=sflag, size = 0x4, offset = 0, fixed_abs, tag = 'sflag constant byte address 0x0 - dummy sync flag']
  #allocation64 [shape = 's32[]', space=sflag, size = 0x4, offset = 0, fixed_abs, tag = 'sflag constant byte address 0x0 - dummy sync flag']
  #allocation65 [shape = 's32[]', space=sflag, size = 0x4, offset = 0, fixed_abs, tag = 'sflag constant byte address 0x0 - dummy sync flag']
  #allocation66 [shape = 's32[]', space=sflag, size = 0x4, offset = 0, fixed_abs, tag = 'sflag constant byte address 0x0 - dummy sync flag']
  #allocation67 [shape = 's32[]', space=sflag, size = 0x4, offset = 0, fixed_abs, tag = 'sflag constant byte address 0x0 - dummy sync flag']
  #allocation68 [shape = 's32[]', space=sflag, size = 0x4, offset = 0, fixed_abs, tag = 'sflag constant byte address 0x0 - dummy sync flag']
  #allocation69 [shape = 's32[]', space=sflag, size = 0x4, offset = 0, fixed_abs, tag = 'sflag constant byte address 0x0 - dummy sync flag']
  #allocation70 [shape = 's32[]', space=sflag, size = 0x4, offset = 0, fixed_abs, tag = 'sflag constant byte address 0x0 - dummy sync flag']
  #allocation71 [shape = 's32[]', space=sflag, size = 0x4, offset = 0, fixed_abs, tag = 'sflag constant byte address 0x0 - dummy sync flag']
  #allocation72 [shape = 's32[]', space=sflag, size = 0x4, offset = 0, fixed_abs, tag = 'sflag constant byte address 0x0 - dummy sync flag']
  #allocation73 [shape = 's32[]', space=sflag, size = 0x4, offset = 0, fixed_abs, tag = 'sflag constant byte address 0x0 - dummy sync flag']
  #allocation74 [shape = 's32[]', space=sflag, size = 0x4, offset = 0, fixed_abs, tag = 'sflag constant byte address 0x0 - dummy sync flag']
  #allocation75 [shape = 's32[]', space=sflag, size = 0x4, offset = 0, fixed_abs, tag = 'sflag constant byte address 0x0 - dummy sync flag']
  #allocation76 [shape = 's32[]', space=sflag, size = 0x4, offset = 0, fixed_abs, tag = 'sflag constant byte address 0x0 - dummy sync flag']
  #allocation77 [shape = 's32[]', space=sflag, size = 0x4, offset = 0, fixed_abs, tag = 'sflag constant byte address 0x0 - dummy sync flag']
  #allocation78 [shape = 's32[]', space=sflag, size = 0x4, offset = 0, fixed_abs, tag = 'sflag constant byte address 0x0 - dummy sync flag']
  #allocation79 [shape = 's32[]', space=sflag, size = 0x4, offset = 0, fixed_abs, tag = 'sflag constant byte address 0x0 - dummy sync flag']
  #allocation80 [shape = 's32[]', space=sflag, size = 0x4, offset = 0, fixed_abs, tag = 'sflag constant byte address 0x0 - dummy sync flag']
  #allocation81 [shape = 's32[]', space=sflag, size = 0x4, offset = 0, fixed_abs, tag = 'sflag constant byte address 0x0 - dummy sync flag']
  #allocation82 [shape = 's32[]', space=sflag, size = 0x4, offset = 0, fixed_abs, tag = 'sflag constant byte address 0x0 - dummy sync flag']
  #allocation83 [shape = 's32[]', space=sflag, size = 0x4, offset = 0, fixed_abs, tag = 'sflag constant byte address 0x0 - dummy sync flag']
  #allocation84 [shape = 's32[]', space=sflag, size = 0x4, offset = 0, fixed_abs, tag = 'sflag constant byte address 0x0 - dummy sync flag']
  #allocation85 [shape = 's32[]', space=sflag, size = 0x4, offset = 0, fixed_abs, tag = 'sflag constant byte address 0x0 - dummy sync flag']
  #allocation86 [shape = 's32[]', space=sflag, size = 0x4, offset = 0, fixed_abs, tag = 'sflag constant byte address 0x0 - dummy sync flag']
  #allocation87 [shape = 's32[]', space=sflag, size = 0x4, offset = 0, fixed_abs, tag = 'sflag constant byte address 0x0 - dummy sync flag']
  #allocation88 [shape = 's32[]', space=sflag, size = 0x4, offset = 0, fixed_abs, tag = 'sflag constant byte address 0x0 - dummy sync flag']
  #allocation89 [shape = 's32[]', space=sflag, size = 0x4, offset = 0, fixed_abs, tag = 'sflag constant byte address 0x0 - dummy sync flag']
  #allocation90 [shape = 's32[]', space=sflag, size = 0x4, offset = 0, fixed_abs, tag = 'sflag constant byte address 0x0 - dummy sync flag']
  #allocation91 [shape = 's32[]', space=sflag, size = 0x4, offset = 0, fixed_abs, tag = 'sflag constant byte address 0x0 - dummy sync flag']
  #allocation92 [shape = 's32[]', space=sflag, size = 0x4, offset = 0, fixed_abs, tag = 'sflag constant byte address 0x0 - dummy sync flag']
  #allocation93 [shape = 's32[]', space=sflag, size = 0x4, offset = 0, fixed_abs, tag = 'sflag constant byte address 0x0 - dummy sync flag']
  #allocation94 [shape = 's32[]', space=sflag, size = 0x4, offset = 0, fixed_abs, tag = 'sflag constant byte address 0x0 - dummy sync flag']
  #allocation95 [shape = 's32[]', space=sflag, size = 0x4, offset = 0, fixed_abs, tag = 'sflag constant byte address 0x0 - dummy sync flag']
  #allocation96 [shape = 's32[]', space=sflag, size = 0x4, offset = 0, fixed_abs, tag = 'sflag constant byte address 0x0 - dummy sync flag']
  #allocation97 [shape = 's32[]', space=sflag, size = 0x4, offset = 0, fixed_abs, tag = 'sflag constant byte address 0x0 - dummy sync flag']
  #allocation98 [shape = 's32[]', space=sflag, size = 0x4, offset = 0, fixed_abs, tag = 'sflag constant byte address 0x0 - dummy sync flag']
  #allocation99 [shape = 's32[]', space=sflag, size = 0x4, offset = 0, fixed_abs, tag = 'sflag constant byte address 0x0 - dummy sync flag']
  #allocation100 [shape = 's32[]', space=sflag, size = 0x4, offset = 0, fixed_abs, tag = 'sflag constant byte address 0x0 - dummy sync flag']
  #allocation101 [shape = 's32[]', space=sflag, size = 0x4, offset = 0, fixed_abs, tag = 'sflag constant byte address 0x0 - dummy sync flag']
  #allocation102 [shape = 's32[]', space=sflag, size = 0x4, offset = 0, fixed_abs, tag = 'sflag constant byte address 0x0 - dummy sync flag']
  #allocation103 [shape = 's32[]', space=sflag, size = 0x4, offset = 0, fixed_abs, tag = 'sflag constant byte address 0x0 - dummy sync flag']
  #allocation104 [shape = 's32[]', space=sflag, size = 0x4, offset = 0, fixed_abs, tag = 'sflag constant byte address 0x0 - dummy sync flag']
  #allocation105 [shape = 's32[]', space=sflag, size = 0x4, offset = 0, fixed_abs, tag = 'sflag constant byte address 0x0 - dummy sync flag']
  #allocation106 [shape = 's32[]', space=sflag, size = 0x4, offset = 0, fixed_abs, tag = 'sflag constant byte address 0x0 - dummy sync flag']
  %s0 = inlined_call_operand.hbm [shape: s32[6,8], index: 0, kind: input, shape index: {}]
  %s1 = inlined_call_operand.hbm [shape: f32[8,128], index: 1, kind: input, shape index: {}]
  %s2 = inlined_call_operand.hbm [shape: f32[128,128], index: 2, kind: input, shape index: {}]
  %s3 = inlined_call_operand.hbm [shape: f32[6,16,128], index: 3, kind: output, shape index: {}]
  %s4 = sld [smem:[#allocation0]]
  $region218: #{tpu_custom_call.1} parent=0
    _
  %s6 = ssub.s32 1, %s4
  %s7 = scalar_select 0, %s6, %s4
  $region1: #{tpu_custom_call.1} parent=0
    #allocation3 [shape = 'u8[4096]{0}', space=smem, size = 0x1000, scoped, tag = 'input window, operand 0, single buffered']
    #allocation4 [shape = 's32[1]{0}', space=sflag, size = 0x4, scoped, tag = 'scoped memory for tpu_custom_call.1']
    #allocation5 [shape = 's32[1]{0}', space=sflag, size = 0x4, scoped, tag = 'scoped memory for tpu_custom_call.1']
    #allocation6 [shape = 's32[1]{0}', space=sflag, size = 0x4, scoped, tag = 'scoped memory for tpu_custom_call.1']
    #allocation7 [shape = 'u8[4096]{0}', space=vmem, size = 0x1000, scoped, tag = 'input window, operand 1, single buffered']
    #allocation8 [shape = 'u8[49152]{0}', space=vmem, size = 0xc000, scoped, tag = 'output window, operand 0, single buffered']
    %8 = vsyncpa [#allocation6], 0
    %9 = vsyncpa [#allocation4], 0
    %10 = vsyncpa [#allocation5], 0
    // Predicated region
    $region2: #{tpu_custom_call.1} parent=1 // pred_check
      _
    $region3: #{tpu_custom_call.1} parent=1 // pred_check_branch
      %12 = sbr.rel (0) target = $region5
    $region4: #{tpu_custom_call.1} parent=1 // pred_region
      %s14 = ssub.s32 128, 128
      %15 = vsyncadd [#allocation6], %s14
      %18 = dma.hbm_to_smem %s0, 128, [#allocation3], [#allocation6]
    $region5: #{tpu_custom_call.1} parent=1 // pred_fallthru
      _
    // Predicated region
    $region6: #{tpu_custom_call.1} parent=1 // pred_check
      _
    $region7: #{tpu_custom_call.1} parent=1 // pred_check_branch
      %20 = sbr.rel (0) target = $region9
    $region8: #{tpu_custom_call.1} parent=1 // pred_region
      %s22 = ssub.s32 128, 128
      %23 = vsyncadd [#allocation4], %s22
      %s25 = sshll.u32 [#allocation7], 4
      %s26 = int_to_ptr.vmem [resolvable:$true] %s25
      %28 = dma.hbm_to_vmem [thread:$0]  %s1, 128, %s26, [#allocation4]
    $region9: #{tpu_custom_call.1} parent=1 // pred_fallthru
      _
    // Predicated region
    $region10: #{tpu_custom_call.1} parent=1 // pred_check
      _
    $region11: #{tpu_custom_call.1} parent=1 // pred_check_branch
      %30 = sbr.rel (0) target = $region13
    $region12: #{tpu_custom_call.1} parent=1 // pred_region
      %31 = dma.done [#allocation6], 128
    $region13: #{tpu_custom_call.1} parent=1 // pred_fallthru
      _
    // Predicated region
    $region14: #{tpu_custom_call.1} parent=1 // pred_check
      _
    $region15: #{tpu_custom_call.1} parent=1 // pred_check_branch
      %33 = sbr.rel (0) target = $region17
    $region16: #{tpu_custom_call.1} parent=1 // pred_region
      %34 = dma.done [#allocation4], 128
    $region17: #{tpu_custom_call.1} parent=1 // pred_fallthru
      _
    %35 = sfence
    %v36 = vld [vmem:[#allocation7] sm:$0xff]
    %37 = vst [vmem:[#allocation8] sm:$0xff] %v36
    %38 = vst [vmem:[#allocation8 + $0x10] sm:$0xff] %v36
    %39 = vst [vmem:[#allocation8 + $0x20] sm:$0xff] %v36
    %40 = vst [vmem:[#allocation8 + $0x30] sm:$0xff] %v36
    %41 = vst [vmem:[#allocation8 + $0x40] sm:$0xff] %v36
    %42 = vst [vmem:[#allocation8 + $0x50] sm:$0xff] %v36
    %s43 = sld [smem:[#allocation3]]
    %p44 = scmp.gt.s32.totalorder %s43, 0
    %s45 = scalar_select %p44, %s43, 0
    %p46 = scmp.lt.s32.totalorder %s45, 127
    %s47 = scalar_select %p46, %s45, 127
    %s48 = smul.addr %s47, 16
    %s49 = scalar_lea.hbm %s2, %s48
    %s50 = scalar_lea.vmem [#allocation8], 8
    // Predicated region
    $region18: #{tpu_custom_call.1} parent=1 // pred_check
      _
    $region19: #{tpu_custom_call.1} parent=1 // pred_check_branch
      %52 = sbr.rel target = $region21
    $region20: #{tpu_custom_call.1} parent=1 // pred_region
      %53 = sst [smem:[#allocation11]] [#allocation10]
      %54 = sst [smem:[#allocation12]] [#allocation9]
    $region21: #{tpu_custom_call.1} parent=1 // pred_fallthru
      _
    %56 = shalt.err (0)
    %s58 = sshll.u32 %s50, 4
    %s59 = int_to_ptr.vmem [resolvable:$true] %s58
    %61 = dma.hbm_to_vmem [thread:$0]  %s49, 16, %s59, [#allocation2]
    %s62 = sld [smem:[#allocation3 + $0x1]]
    %p63 = scmp.gt.s32.totalorder %s62, 0
    %s64 = scalar_select %p63, %s62, 0
    %p65 = scmp.lt.s32.totalorder %s64, 127
    %s66 = scalar_select %p65, %s64, 127
    %s67 = smul.addr %s66, 16
    %s68 = scalar_lea.hbm %s2, %s67
    %s69 = scalar_lea.vmem [#allocation8], 9
    %s70 = scalar_lea.sflag [#allocation2], 1
    // Predicated region
    $region22: #{tpu_custom_call.1} parent=1 // pred_check
      _
    $region23: #{tpu_custom_call.1} parent=1 // pred_check_branch
      %72 = sbr.rel target = $region25
    $region24: #{tpu_custom_call.1} parent=1 // pred_region
      %73 = sst [smem:[#allocation11]] [#allocation14]
      %74 = sst [smem:[#allocation12]] [#allocation13]
    $region25: #{tpu_custom_call.1} parent=1 // pred_fallthru
      _
    %76 = shalt.err (0)
    %s78 = sshll.u32 %s69, 4
    %s79 = int_to_ptr.vmem [resolvable:$true] %s78
    %81 = dma.hbm_to_vmem [thread:$0]  %s68, 16, %s79, %s70
    %s82 = sld [smem:[#allocation3 + $0x2]]
    %p83 = scmp.gt.s32.totalorder %s82, 0
    %s84 = scalar_select %p83, %s82, 0
    %p85 = scmp.lt.s32.totalorder %s84, 127
    %s86 = scalar_select %p85, %s84, 127
    %s87 = smul.addr %s86, 16
    %s88 = scalar_lea.hbm %s2, %s87
    %s89 = scalar_lea.vmem [#allocation8], 10
    %s90 = scalar_lea.sflag [#allocation2], 2
    // Predicated region
    $region26: #{tpu_custom_call.1} parent=1 // pred_check
      _
    $region27: #{tpu_custom_call.1} parent=1 // pred_check_branch
      %92 = sbr.rel target = $region29
    $region28: #{tpu_custom_call.1} parent=1 // pred_region
      %93 = sst [smem:[#allocation11]] [#allocation16]
      %94 = sst [smem:[#allocation12]] [#allocation15]
    $region29: #{tpu_custom_call.1} parent=1 // pred_fallthru
      _
    %96 = shalt.err (0)
    %s98 = sshll.u32 %s89, 4
    %s99 = int_to_ptr.vmem [resolvable:$true] %s98
    %101 = dma.hbm_to_vmem [thread:$0]  %s88, 16, %s99, %s90
    %s102 = sld [smem:[#allocation3 + $0x3]]
    %p103 = scmp.gt.s32.totalorder %s102, 0
    %s104 = scalar_select %p103, %s102, 0
    %p105 = scmp.lt.s32.totalorder %s104, 127
    %s106 = scalar_select %p105, %s104, 127
    %s107 = smul.addr %s106, 16
    %s108 = scalar_lea.hbm %s2, %s107
    %s109 = scalar_lea.vmem [#allocation8], 11
    %s110 = scalar_lea.sflag [#allocation2], 3
    // Predicated region
    $region30: #{tpu_custom_call.1} parent=1 // pred_check
      _
    $region31: #{tpu_custom_call.1} parent=1 // pred_check_branch
      %112 = sbr.rel target = $region33
    $region32: #{tpu_custom_call.1} parent=1 // pred_region
      %113 = sst [smem:[#allocation11]] [#allocation18]
      %114 = sst [smem:[#allocation12]] [#allocation17]
    $region33: #{tpu_custom_call.1} parent=1 // pred_fallthru
      _
    %116 = shalt.err (0)
    %s118 = sshll.u32 %s109, 4
    %s119 = int_to_ptr.vmem [resolvable:$true] %s118
    %121 = dma.hbm_to_vmem [thread:$0]  %s108, 16, %s119, %s110
    %s122 = sld [smem:[#allocation3 + $0x4]]
    %p123 = scmp.gt.s32.totalorder %s122, 0
    %s124 = scalar_select %p123, %s122, 0
    %p125 = scmp.lt.s32.totalorder %s124, 127
    %s126 = scalar_select %p125, %s124, 127
    %s127 = smul.addr %s126, 16
    %s128 = scalar_lea.hbm %s2, %s127
    %s129 = scalar_lea.vmem [#allocation8], 12
    %s130 = scalar_lea.sflag [#allocation2], 4
    // Predicated region
    $region34: #{tpu_custom_call.1} parent=1 // pred_check
      _
    $region35: #{tpu_custom_call.1} parent=1 // pred_check_branch
      %132 = sbr.rel target = $region37
    $region36: #{tpu_custom_call.1} parent=1 // pred_region
      %133 = sst [smem:[#allocation11]] [#allocation20]
      %134 = sst [smem:[#allocation12]] [#allocation19]
    $region37: #{tpu_custom_call.1} parent=1 // pred_fallthru
      _
    %136 = shalt.err (0)
    %s138 = sshll.u32 %s129, 4
    %s139 = int_to_ptr.vmem [resolvable:$true] %s138
    %141 = dma.hbm_to_vmem [thread:$0]  %s128, 16, %s139, %s130
    %s142 = sld [smem:[#allocation3 + $0x5]]
    %p143 = scmp.gt.s32.totalorder %s142, 0
    %s144 = scalar_select %p143, %s142, 0
    %p145 = scmp.lt.s32.totalorder %s144, 127
    %s146 = scalar_select %p145, %s144, 127
    %s147 = smul.addr %s146, 16
    %s148 = scalar_lea.hbm %s2, %s147
    %s149 = scalar_lea.vmem [#allocation8], 13
    %s150 = scalar_lea.sflag [#allocation2], 5
    // Predicated region
    $region38: #{tpu_custom_call.1} parent=1 // pred_check
      _
    $region39: #{tpu_custom_call.1} parent=1 // pred_check_branch
      %152 = sbr.rel target = $region41
    $region40: #{tpu_custom_call.1} parent=1 // pred_region
      %153 = sst [smem:[#allocation11]] [#allocation22]
      %154 = sst [smem:[#allocation12]] [#allocation21]
    $region41: #{tpu_custom_call.1} parent=1 // pred_fallthru
      _
    %156 = shalt.err (0)
    %s158 = sshll.u32 %s149, 4
    %s159 = int_to_ptr.vmem [resolvable:$true] %s158
    %161 = dma.hbm_to_vmem [thread:$0]  %s148, 16, %s159, %s150
    %s162 = sld [smem:[#allocation3 + $0x6]]
    %p163 = scmp.gt.s32.totalorder %s162, 0
    %s164 = scalar_select %p163, %s162, 0
    %p165 = scmp.lt.s32.totalorder %s164, 127
    %s166 = scalar_select %p165, %s164, 127
    %s167 = smul.addr %s166, 16
    %s168 = scalar_lea.hbm %s2, %s167
    %s169 = scalar_lea.vmem [#allocation8], 14
    %s170 = scalar_lea.sflag [#allocation2], 6
    // Predicated region
    $region42: #{tpu_custom_call.1} parent=1 // pred_check
      _
    $region43: #{tpu_custom_call.1} parent=1 // pred_check_branch
      %172 = sbr.rel target = $region45
    $region44: #{tpu_custom_call.1} parent=1 // pred_region
      %173 = sst [smem:[#allocation11]] [#allocation24]
      %174 = sst [smem:[#allocation12]] [#allocation23]
    $region45: #{tpu_custom_call.1} parent=1 // pred_fallthru
      _
    %176 = shalt.err (0)
    %s178 = sshll.u32 %s169, 4
    %s179 = int_to_ptr.vmem [resolvable:$true] %s178
    %181 = dma.hbm_to_vmem [thread:$0]  %s168, 16, %s179, %s170
    %s182 = sld [smem:[#allocation3 + $0x7]]
    %p183 = scmp.gt.s32.totalorder %s182, 0
    %s184 = scalar_select %p183, %s182, 0
    %p185 = scmp.lt.s32.totalorder %s184, 127
    %s186 = scalar_select %p185, %s184, 127
    %s187 = smul.addr %s186, 16
    %s188 = scalar_lea.hbm %s2, %s187
    %s189 = scalar_lea.vmem [#allocation8], 15
    %s190 = scalar_lea.sflag [#allocation2], 7
    // Predicated region
    $region46: #{tpu_custom_call.1} parent=1 // pred_check
      _
    $region47: #{tpu_custom_call.1} parent=1 // pred_check_branch
      %192 = sbr.rel target = $region49
    $region48: #{tpu_custom_call.1} parent=1 // pred_region
      %193 = sst [smem:[#allocation11]] [#allocation26]
      %194 = sst [smem:[#allocation12]] [#allocation25]
    $region49: #{tpu_custom_call.1} parent=1 // pred_fallthru
      _
    %196 = shalt.err (0)
    %s198 = sshll.u32 %s189, 4
    %s199 = int_to_ptr.vmem [resolvable:$true] %s198
    %201 = dma.hbm_to_vmem [thread:$0]  %s188, 16, %s199, %s190
    %s202 = sld [smem:[#allocation3 + $0x80]]
    %p203 = scmp.gt.s32.totalorder %s202, 0
    %s204 = scalar_select %p203, %s202, 0
    %p205 = scmp.lt.s32.totalorder %s204, 127
    %s206 = scalar_select %p205, %s204, 127
    %s207 = smul.addr %s206, 16
    %s208 = scalar_lea.hbm %s2, %s207
    %s209 = scalar_lea.vmem [#allocation8], 24
    %s210 = scalar_lea.sflag [#allocation2], 8
    // Predicated region
    $region50: #{tpu_custom_call.1} parent=1 // pred_check
      _
    $region51: #{tpu_custom_call.1} parent=1 // pred_check_branch
      %212 = sbr.rel target = $region53
    $region52: #{tpu_custom_call.1} parent=1 // pred_region
      %213 = sst [smem:[#allocation11]] [#allocation28]
      %214 = sst [smem:[#allocation12]] [#allocation27]
    $region53: #{tpu_custom_call.1} parent=1 // pred_fallthru
      _
    %216 = shalt.err (0)
    %s218 = sshll.u32 %s209, 4
    %s219 = int_to_ptr.vmem [resolvable:$true] %s218
    %221 = dma.hbm_to_vmem [thread:$0]  %s208, 16, %s219, %s210
    %s222 = sld [smem:[#allocation3 + $0x81]]
    %p223 = scmp.gt.s32.totalorder %s222, 0
    %s224 = scalar_select %p223, %s222, 0
    %p225 = scmp.lt.s32.totalorder %s224, 127
    %s226 = scalar_select %p225, %s224, 127
    %s227 = smul.addr %s226, 16
    %s228 = scalar_lea.hbm %s2, %s227
    %s229 = scalar_lea.vmem [#allocation8], 25
    %s230 = scalar_lea.sflag [#allocation2], 9
    // Predicated region
    $region54: #{tpu_custom_call.1} parent=1 // pred_check
      _
    $region55: #{tpu_custom_call.1} parent=1 // pred_check_branch
      %232 = sbr.rel target = $region57
    $region56: #{tpu_custom_call.1} parent=1 // pred_region
      %233 = sst [smem:[#allocation11]] [#allocation30]
      %234 = sst [smem:[#allocation12]] [#allocation29]
    $region57: #{tpu_custom_call.1} parent=1 // pred_fallthru
      _
    %236 = shalt.err (0)
    %s238 = sshll.u32 %s229, 4
    %s239 = int_to_ptr.vmem [resolvable:$true] %s238
    %241 = dma.hbm_to_vmem [thread:$0]  %s228, 16, %s239, %s230
    %s242 = sld [smem:[#allocation3 + $0x82]]
    %p243 = scmp.gt.s32.totalorder %s242, 0
    %s244 = scalar_select %p243, %s242, 0
    %p245 = scmp.lt.s32.totalorder %s244, 127
    %s246 = scalar_select %p245, %s244, 127
    %s247 = smul.addr %s246, 16
    %s248 = scalar_lea.hbm %s2, %s247
    %s249 = scalar_lea.vmem [#allocation8], 26
    %s250 = scalar_lea.sflag [#allocation2], 10
    // Predicated region
    $region58: #{tpu_custom_call.1} parent=1 // pred_check
      _
    $region59: #{tpu_custom_call.1} parent=1 // pred_check_branch
      %252 = sbr.rel target = $region61
    $region60: #{tpu_custom_call.1} parent=1 // pred_region
      %253 = sst [smem:[#allocation11]] [#allocation32]
      %254 = sst [smem:[#allocation12]] [#allocation31]
    $region61: #{tpu_custom_call.1} parent=1 // pred_fallthru
      _
    %256 = shalt.err (0)
    %s258 = sshll.u32 %s249, 4
    %s259 = int_to_ptr.vmem [resolvable:$true] %s258
    %261 = dma.hbm_to_vmem [thread:$0]  %s248, 16, %s259, %s250
    %s262 = sld [smem:[#allocation3 + $0x83]]
    %p263 = scmp.gt.s32.totalorder %s262, 0
    %s264 = scalar_select %p263, %s262, 0
    %p265 = scmp.lt.s32.totalorder %s264, 127
    %s266 = scalar_select %p265, %s264, 127
    %s267 = smul.addr %s266, 16
    %s268 = scalar_lea.hbm %s2, %s267
    %s269 = scalar_lea.vmem [#allocation8], 27
    %s270 = scalar_lea.sflag [#allocation2], 11
    // Predicated region
    $region62: #{tpu_custom_call.1} parent=1 // pred_check
      _
    $region63: #{tpu_custom_call.1} parent=1 // pred_check_branch
      %272 = sbr.rel target = $region65
    $region64: #{tpu_custom_call.1} parent=1 // pred_region
      %273 = sst [smem:[#allocation11]] [#allocation34]
      %274 = sst [smem:[#allocation12]] [#allocation33]
    $region65: #{tpu_custom_call.1} parent=1 // pred_fallthru
      _
    %276 = shalt.err (0)
    %s278 = sshll.u32 %s269, 4
    %s279 = int_to_ptr.vmem [resolvable:$true] %s278
    %281 = dma.hbm_to_vmem [thread:$0]  %s268, 16, %s279, %s270
    %s282 = sld [smem:[#allocation3 + $0x84]]
    %p283 = scmp.gt.s32.totalorder %s282, 0
    %s284 = scalar_select %p283, %s282, 0
    %p285 = scmp.lt.s32.totalorder %s284, 127
    %s286 = scalar_select %p285, %s284, 127
    %s287 = smul.addr %s286, 16
    %s288 = scalar_lea.hbm %s2, %s287
    %s289 = scalar_lea.vmem [#allocation8], 28
    %s290 = scalar_lea.sflag [#allocation2], 12
    // Predicated region
    $region66: #{tpu_custom_call.1} parent=1 // pred_check
      _
    $region67: #{tpu_custom_call.1} parent=1 // pred_check_branch
      %292 = sbr.rel target = $region69
    $region68: #{tpu_custom_call.1} parent=1 // pred_region
      %293 = sst [smem:[#allocation11]] [#allocation36]
      %294 = sst [smem:[#allocation12]] [#allocation35]
    $region69: #{tpu_custom_call.1} parent=1 // pred_fallthru
      _
    %296 = shalt.err (0)
    %s298 = sshll.u32 %s289, 4
    %s299 = int_to_ptr.vmem [resolvable:$true] %s298
    %301 = dma.hbm_to_vmem [thread:$0]  %s288, 16, %s299, %s290
    %s302 = sld [smem:[#allocation3 + $0x85]]
    %p303 = scmp.gt.s32.totalorder %s302, 0
    %s304 = scalar_select %p303, %s302, 0
    %p305 = scmp.lt.s32.totalorder %s304, 127
    %s306 = scalar_select %p305, %s304, 127
    %s307 = smul.addr %s306, 16
    %s308 = scalar_lea.hbm %s2, %s307
    %s309 = scalar_lea.vmem [#allocation8], 29
    %s310 = scalar_lea.sflag [#allocation2], 13
    // Predicated region
    $region70: #{tpu_custom_call.1} parent=1 // pred_check
      _
    $region71: #{tpu_custom_call.1} parent=1 // pred_check_branch
      %312 = sbr.rel target = $region73
    $region72: #{tpu_custom_call.1} parent=1 // pred_region
      %313 = sst [smem:[#allocation11]] [#allocation38]
      %314 = sst [smem:[#allocation12]] [#allocation37]
    $region73: #{tpu_custom_call.1} parent=1 // pred_fallthru
      _
    %316 = shalt.err (0)
    %s318 = sshll.u32 %s309, 4
    %s319 = int_to_ptr.vmem [resolvable:$true] %s318
    %321 = dma.hbm_to_vmem [thread:$0]  %s308, 16, %s319, %s310
    %s322 = sld [smem:[#allocation3 + $0x86]]
    %p323 = scmp.gt.s32.totalorder %s322, 0
    %s324 = scalar_select %p323, %s322, 0
    %p325 = scmp.lt.s32.totalorder %s324, 127
    %s326 = scalar_select %p325, %s324, 127
    %s327 = smul.addr %s326, 16
    %s328 = scalar_lea.hbm %s2, %s327
    %s329 = scalar_lea.vmem [#allocation8], 30
    %s330 = scalar_lea.sflag [#allocation2], 14
    // Predicated region
    $region74: #{tpu_custom_call.1} parent=1 // pred_check
      _
    $region75: #{tpu_custom_call.1} parent=1 // pred_check_branch
      %332 = sbr.rel target = $region77
    $region76: #{tpu_custom_call.1} parent=1 // pred_region
      %333 = sst [smem:[#allocation11]] [#allocation40]
      %334 = sst [smem:[#allocation12]] [#allocation39]
    $region77: #{tpu_custom_call.1} parent=1 // pred_fallthru
      _
    %336 = shalt.err (0)
    %s338 = sshll.u32 %s329, 4
    %s339 = int_to_ptr.vmem [resolvable:$true] %s338
    %341 = dma.hbm_to_vmem [thread:$0]  %s328, 16, %s339, %s330
    %s342 = sld [smem:[#allocation3 + $0x87]]
    %p343 = scmp.gt.s32.totalorder %s342, 0
    %s344 = scalar_select %p343, %s342, 0
    %p345 = scmp.lt.s32.totalorder %s344, 127
    %s346 = scalar_select %p345, %s344, 127
    %s347 = smul.addr %s346, 16
    %s348 = scalar_lea.hbm %s2, %s347
    %s349 = scalar_lea.vmem [#allocation8], 31
    %s350 = scalar_lea.sflag [#allocation2], 15
    // Predicated region
    $region78: #{tpu_custom_call.1} parent=1 // pred_check
      _
    $region79: #{tpu_custom_call.1} parent=1 // pred_check_branch
      %352 = sbr.rel target = $region81
    $region80: #{tpu_custom_call.1} parent=1 // pred_region
      %353 = sst [smem:[#allocation11]] [#allocation42]
      %354 = sst [smem:[#allocation12]] [#allocation41]
    $region81: #{tpu_custom_call.1} parent=1 // pred_fallthru
      _
    %356 = shalt.err (0)
    %s358 = sshll.u32 %s349, 4
    %s359 = int_to_ptr.vmem [resolvable:$true] %s358
    %361 = dma.hbm_to_vmem [thread:$0]  %s348, 16, %s359, %s350
    %s362 = sld [smem:[#allocation3 + $0x100]]
    %p363 = scmp.gt.s32.totalorder %s362, 0
    %s364 = scalar_select %p363, %s362, 0
    %p365 = scmp.lt.s32.totalorder %s364, 127
    %s366 = scalar_select %p365, %s364, 127
    %s367 = smul.addr %s366, 16
    %s368 = scalar_lea.hbm %s2, %s367
    %s369 = scalar_lea.vmem [#allocation8], 40
    %s370 = scalar_lea.sflag [#allocation2], 16
    // Predicated region
    $region82: #{tpu_custom_call.1} parent=1 // pred_check
      _
    $region83: #{tpu_custom_call.1} parent=1 // pred_check_branch
      %372 = sbr.rel target = $region85
    $region84: #{tpu_custom_call.1} parent=1 // pred_region
      %373 = sst [smem:[#allocation11]] [#allocation44]
      %374 = sst [smem:[#allocation12]] [#allocation43]
    $region85: #{tpu_custom_call.1} parent=1 // pred_fallthru
      _
    %376 = shalt.err (0)
    %s378 = sshll.u32 %s369, 4
    %s379 = int_to_ptr.vmem [resolvable:$true] %s378
    %381 = dma.hbm_to_vmem [thread:$0]  %s368, 16, %s379, %s370
    %s382 = sld [smem:[#allocation3 + $0x101]]
    %p383 = scmp.gt.s32.totalorder %s382, 0
    %s384 = scalar_select %p383, %s382, 0
    %p385 = scmp.lt.s32.totalorder %s384, 127
    %s386 = scalar_select %p385, %s384, 127
    %s387 = smul.addr %s386, 16
    %s388 = scalar_lea.hbm %s2, %s387
    %s389 = scalar_lea.vmem [#allocation8], 41
    %s390 = scalar_lea.sflag [#allocation2], 17
    // Predicated region
    $region86: #{tpu_custom_call.1} parent=1 // pred_check
      _
    $region87: #{tpu_custom_call.1} parent=1 // pred_check_branch
      %392 = sbr.rel target = $region89
    $region88: #{tpu_custom_call.1} parent=1 // pred_region
      %393 = sst [smem:[#allocation11]] [#allocation46]
      %394 = sst [smem:[#allocation12]] [#allocation45]
    $region89: #{tpu_custom_call.1} parent=1 // pred_fallthru
      _
    %396 = shalt.err (0)
    %s398 = sshll.u32 %s389, 4
    %s399 = int_to_ptr.vmem [resolvable:$true] %s398
    %401 = dma.hbm_to_vmem [thread:$0]  %s388, 16, %s399, %s390
    %s402 = sld [smem:[#allocation3 + $0x102]]
    %p403 = scmp.gt.s32.totalorder %s402, 0
    %s404 = scalar_select %p403, %s402, 0
    %p405 = scmp.lt.s32.totalorder %s404, 127
    %s406 = scalar_select %p405, %s404, 127
    %s407 = smul.addr %s406, 16
    %s408 = scalar_lea.hbm %s2, %s407
    %s409 = scalar_lea.vmem [#allocation8], 42
    %s410 = scalar_lea.sflag [#allocation2], 18
    // Predicated region
    $region90: #{tpu_custom_call.1} parent=1 // pred_check
      _
    $region91: #{tpu_custom_call.1} parent=1 // pred_check_branch
      %412 = sbr.rel target = $region93
    $region92: #{tpu_custom_call.1} parent=1 // pred_region
      %413 = sst [smem:[#allocation11]] [#allocation48]
      %414 = sst [smem:[#allocation12]] [#allocation47]
    $region93: #{tpu_custom_call.1} parent=1 // pred_fallthru
      _
    %416 = shalt.err (0)
    %s418 = sshll.u32 %s409, 4
    %s419 = int_to_ptr.vmem [resolvable:$true] %s418
    %421 = dma.hbm_to_vmem [thread:$0]  %s408, 16, %s419, %s410
    %s422 = sld [smem:[#allocation3 + $0x103]]
    %p423 = scmp.gt.s32.totalorder %s422, 0
    %s424 = scalar_select %p423, %s422, 0
    %p425 = scmp.lt.s32.totalorder %s424, 127
    %s426 = scalar_select %p425, %s424, 127
    %s427 = smul.addr %s426, 16
    %s428 = scalar_lea.hbm %s2, %s427
    %s429 = scalar_lea.vmem [#allocation8], 43
    %s430 = scalar_lea.sflag [#allocation2], 19
    // Predicated region
    $region94: #{tpu_custom_call.1} parent=1 // pred_check
      _
    $region95: #{tpu_custom_call.1} parent=1 // pred_check_branch
      %432 = sbr.rel target = $region97
    $region96: #{tpu_custom_call.1} parent=1 // pred_region
      %433 = sst [smem:[#allocation11]] [#allocation50]
      %434 = sst [smem:[#allocation12]] [#allocation49]
    $region97: #{tpu_custom_call.1} parent=1 // pred_fallthru
      _
    %436 = shalt.err (0)
    %s438 = sshll.u32 %s429, 4
    %s439 = int_to_ptr.vmem [resolvable:$true] %s438
    %441 = dma.hbm_to_vmem [thread:$0]  %s428, 16, %s439, %s430
    %s442 = sld [smem:[#allocation3 + $0x104]]
    %p443 = scmp.gt.s32.totalorder %s442, 0
    %s444 = scalar_select %p443, %s442, 0
    %p445 = scmp.lt.s32.totalorder %s444, 127
    %s446 = scalar_select %p445, %s444, 127
    %s447 = smul.addr %s446, 16
    %s448 = scalar_lea.hbm %s2, %s447
    %s449 = scalar_lea.vmem [#allocation8], 44
    %s450 = scalar_lea.sflag [#allocation2], 20
    // Predicated region
    $region98: #{tpu_custom_call.1} parent=1 // pred_check
      _
    $region99: #{tpu_custom_call.1} parent=1 // pred_check_branch
      %452 = sbr.rel target = $region101
    $region100: #{tpu_custom_call.1} parent=1 // pred_region
      %453 = sst [smem:[#allocation11]] [#allocation52]
      %454 = sst [smem:[#allocation12]] [#allocation51]
    $region101: #{tpu_custom_call.1} parent=1 // pred_fallthru
      _
    %456 = shalt.err (0)
    %s458 = sshll.u32 %s449, 4
    %s459 = int_to_ptr.vmem [resolvable:$true] %s458
    %461 = dma.hbm_to_vmem [thread:$0]  %s448, 16, %s459, %s450
    %s462 = sld [smem:[#allocation3 + $0x105]]
    %p463 = scmp.gt.s32.totalorder %s462, 0
    %s464 = scalar_select %p463, %s462, 0
    %p465 = scmp.lt.s32.totalorder %s464, 127
    %s466 = scalar_select %p465, %s464, 127
    %s467 = smul.addr %s466, 16
    %s468 = scalar_lea.hbm %s2, %s467
    %s469 = scalar_lea.vmem [#allocation8], 45
    %s470 = scalar_lea.sflag [#allocation2], 21
    // Predicated region
    $region102: #{tpu_custom_call.1} parent=1 // pred_check
      _
    $region103: #{tpu_custom_call.1} parent=1 // pred_check_branch
      %472 = sbr.rel target = $region105
    $region104: #{tpu_custom_call.1} parent=1 // pred_region
      %473 = sst [smem:[#allocation11]] [#allocation54]
      %474 = sst [smem:[#allocation12]] [#allocation53]
    $region105: #{tpu_custom_call.1} parent=1 // pred_fallthru
      _
    %476 = shalt.err (0)
    %s478 = sshll.u32 %s469, 4
    %s479 = int_to_ptr.vmem [resolvable:$true] %s478
    %481 = dma.hbm_to_vmem [thread:$0]  %s468, 16, %s479, %s470
    %s482 = sld [smem:[#allocation3 + $0x106]]
    %p483 = scmp.gt.s32.totalorder %s482, 0
    %s484 = scalar_select %p483, %s482, 0
    %p485 = scmp.lt.s32.totalorder %s484, 127
    %s486 = scalar_select %p485, %s484, 127
    %s487 = smul.addr %s486, 16
    %s488 = scalar_lea.hbm %s2, %s487
    %s489 = scalar_lea.vmem [#allocation8], 46
    %s490 = scalar_lea.sflag [#allocation2], 22
    // Predicated region
    $region106: #{tpu_custom_call.1} parent=1 // pred_check
      _
    $region107: #{tpu_custom_call.1} parent=1 // pred_check_branch
      %492 = sbr.rel target = $region109
    $region108: #{tpu_custom_call.1} parent=1 // pred_region
      %493 = sst [smem:[#allocation11]] [#allocation56]
      %494 = sst [smem:[#allocation12]] [#allocation55]
    $region109: #{tpu_custom_call.1} parent=1 // pred_fallthru
      _
    %496 = shalt.err (0)
    %s498 = sshll.u32 %s489, 4
    %s499 = int_to_ptr.vmem [resolvable:$true] %s498
    %501 = dma.hbm_to_vmem [thread:$0]  %s488, 16, %s499, %s490
    %s502 = sld [smem:[#allocation3 + $0x107]]
    %p503 = scmp.gt.s32.totalorder %s502, 0
    %s504 = scalar_select %p503, %s502, 0
    %p505 = scmp.lt.s32.totalorder %s504, 127
    %s506 = scalar_select %p505, %s504, 127
    %s507 = smul.addr %s506, 16
    %s508 = scalar_lea.hbm %s2, %s507
    %s509 = scalar_lea.vmem [#allocation8], 47
    %s510 = scalar_lea.sflag [#allocation2], 23
    // Predicated region
    $region110: #{tpu_custom_call.1} parent=1 // pred_check
      _
    $region111: #{tpu_custom_call.1} parent=1 // pred_check_branch
      %512 = sbr.rel target = $region113
    $region112: #{tpu_custom_call.1} parent=1 // pred_region
      %513 = sst [smem:[#allocation11]] [#allocation58]
      %514 = sst [smem:[#allocation12]] [#allocation57]
    $region113: #{tpu_custom_call.1} parent=1 // pred_fallthru
      _
    %516 = shalt.err (0)
    %s518 = sshll.u32 %s509, 4
    %s519 = int_to_ptr.vmem [resolvable:$true] %s518
    %521 = dma.hbm_to_vmem [thread:$0]  %s508, 16, %s519, %s510
    %s522 = sld [smem:[#allocation3 + $0x180]]
    %p523 = scmp.gt.s32.totalorder %s522, 0
    %s524 = scalar_select %p523, %s522, 0
    %p525 = scmp.lt.s32.totalorder %s524, 127
    %s526 = scalar_select %p525, %s524, 127
    %s527 = smul.addr %s526, 16
    %s528 = scalar_lea.hbm %s2, %s527
    %s529 = scalar_lea.vmem [#allocation8], 56
    %s530 = scalar_lea.sflag [#allocation2], 24
    // Predicated region
    $region114: #{tpu_custom_call.1} parent=1 // pred_check
      _
    $region115: #{tpu_custom_call.1} parent=1 // pred_check_branch
      %532 = sbr.rel target = $region117
    $region116: #{tpu_custom_call.1} parent=1 // pred_region
      %533 = sst [smem:[#allocation11]] [#allocation60]
      %534 = sst [smem:[#allocation12]] [#allocation59]
    $region117: #{tpu_custom_call.1} parent=1 // pred_fallthru
      _
    %536 = shalt.err (0)
    %s538 = sshll.u32 %s529, 4
    %s539 = int_to_ptr.vmem [resolvable:$true] %s538
    %541 = dma.hbm_to_vmem [thread:$0]  %s528, 16, %s539, %s530
    %s542 = sld [smem:[#allocation3 + $0x181]]
    %p543 = scmp.gt.s32.totalorder %s542, 0
    %s544 = scalar_select %p543, %s542, 0
    %p545 = scmp.lt.s32.totalorder %s544, 127
    %s546 = scalar_select %p545, %s544, 127
    %s547 = smul.addr %s546, 16
    %s548 = scalar_lea.hbm %s2, %s547
    %s549 = scalar_lea.vmem [#allocation8], 57
    %s550 = scalar_lea.sflag [#allocation2], 25
    // Predicated region
    $region118: #{tpu_custom_call.1} parent=1 // pred_check
      _
    $region119: #{tpu_custom_call.1} parent=1 // pred_check_branch
      %552 = sbr.rel target = $region121
    $region120: #{tpu_custom_call.1} parent=1 // pred_region
      %553 = sst [smem:[#allocation11]] [#allocation62]
      %554 = sst [smem:[#allocation12]] [#allocation61]
    $region121: #{tpu_custom_call.1} parent=1 // pred_fallthru
      _
    %556 = shalt.err (0)
    %s558 = sshll.u32 %s549, 4
    %s559 = int_to_ptr.vmem [resolvable:$true] %s558
    %561 = dma.hbm_to_vmem [thread:$0]  %s548, 16, %s559, %s550
    %s562 = sld [smem:[#allocation3 + $0x182]]
    %p563 = scmp.gt.s32.totalorder %s562, 0
    %s564 = scalar_select %p563, %s562, 0
    %p565 = scmp.lt.s32.totalorder %s564, 127
    %s566 = scalar_select %p565, %s564, 127
    %s567 = smul.addr %s566, 16
    %s568 = scalar_lea.hbm %s2, %s567
    %s569 = scalar_lea.vmem [#allocation8], 58
    %s570 = scalar_lea.sflag [#allocation2], 26
    // Predicated region
    $region122: #{tpu_custom_call.1} parent=1 // pred_check
      _
    $region123: #{tpu_custom_call.1} parent=1 // pred_check_branch
      %572 = sbr.rel target = $region125
    $region124: #{tpu_custom_call.1} parent=1 // pred_region
      %573 = sst [smem:[#allocation11]] [#allocation64]
      %574 = sst [smem:[#allocation12]] [#allocation63]
    $region125: #{tpu_custom_call.1} parent=1 // pred_fallthru
      _
    %576 = shalt.err (0)
    %s578 = sshll.u32 %s569, 4
    %s579 = int_to_ptr.vmem [resolvable:$true] %s578
    %581 = dma.hbm_to_vmem [thread:$0]  %s568, 16, %s579, %s570
    %s582 = sld [smem:[#allocation3 + $0x183]]
    %p583 = scmp.gt.s32.totalorder %s582, 0
    %s584 = scalar_select %p583, %s582, 0
    %p585 = scmp.lt.s32.totalorder %s584, 127
    %s586 = scalar_select %p585, %s584, 127
    %s587 = smul.addr %s586, 16
    %s588 = scalar_lea.hbm %s2, %s587
    %s589 = scalar_lea.vmem [#allocation8], 59
    %s590 = scalar_lea.sflag [#allocation2], 27
    // Predicated region
    $region126: #{tpu_custom_call.1} parent=1 // pred_check
      _
    $region127: #{tpu_custom_call.1} parent=1 // pred_check_branch
      %592 = sbr.rel target = $region129
    $region128: #{tpu_custom_call.1} parent=1 // pred_region
      %593 = sst [smem:[#allocation11]] [#allocation66]
      %594 = sst [smem:[#allocation12]] [#allocation65]
    $region129: #{tpu_custom_call.1} parent=1 // pred_fallthru
      _
    %596 = shalt.err (0)
    %s598 = sshll.u32 %s589, 4
    %s599 = int_to_ptr.vmem [resolvable:$true] %s598
    %601 = dma.hbm_to_vmem [thread:$0]  %s588, 16, %s599, %s590
    %s602 = sld [smem:[#allocation3 + $0x184]]
    %p603 = scmp.gt.s32.totalorder %s602, 0
    %s604 = scalar_select %p603, %s602, 0
    %p605 = scmp.lt.s32.totalorder %s604, 127
    %s606 = scalar_select %p605, %s604, 127
    %s607 = smul.addr %s606, 16
    %s608 = scalar_lea.hbm %s2, %s607
    %s609 = scalar_lea.vmem [#allocation8], 60
    %s610 = scalar_lea.sflag [#allocation2], 28
    // Predicated region
    $region130: #{tpu_custom_call.1} parent=1 // pred_check
      _
    $region131: #{tpu_custom_call.1} parent=1 // pred_check_branch
      %612 = sbr.rel target = $region133
    $region132: #{tpu_custom_call.1} parent=1 // pred_region
      %613 = sst [smem:[#allocation11]] [#allocation68]
      %614 = sst [smem:[#allocation12]] [#allocation67]
    $region133: #{tpu_custom_call.1} parent=1 // pred_fallthru
      _
    %616 = shalt.err (0)
    %s618 = sshll.u32 %s609, 4
    %s619 = int_to_ptr.vmem [resolvable:$true] %s618
    %621 = dma.hbm_to_vmem [thread:$0]  %s608, 16, %s619, %s610
    %s622 = sld [smem:[#allocation3 + $0x185]]
    %p623 = scmp.gt.s32.totalorder %s622, 0
    %s624 = scalar_select %p623, %s622, 0
    %p625 = scmp.lt.s32.totalorder %s624, 127
    %s626 = scalar_select %p625, %s624, 127
    %s627 = smul.addr %s626, 16
    %s628 = scalar_lea.hbm %s2, %s627
    %s629 = scalar_lea.vmem [#allocation8], 61
    %s630 = scalar_lea.sflag [#allocation2], 29
    // Predicated region
    $region134: #{tpu_custom_call.1} parent=1 // pred_check
      _
    $region135: #{tpu_custom_call.1} parent=1 // pred_check_branch
      %632 = sbr.rel target = $region137
    $region136: #{tpu_custom_call.1} parent=1 // pred_region
      %633 = sst [smem:[#allocation11]] [#allocation70]
      %634 = sst [smem:[#allocation12]] [#allocation69]
    $region137: #{tpu_custom_call.1} parent=1 // pred_fallthru
      _
    %636 = shalt.err (0)
    %s638 = sshll.u32 %s629, 4
    %s639 = int_to_ptr.vmem [resolvable:$true] %s638
    %641 = dma.hbm_to_vmem [thread:$0]  %s628, 16, %s639, %s630
    %s642 = sld [smem:[#allocation3 + $0x186]]
    %p643 = scmp.gt.s32.totalorder %s642, 0
    %s644 = scalar_select %p643, %s642, 0
    %p645 = scmp.lt.s32.totalorder %s644, 127
    %s646 = scalar_select %p645, %s644, 127
    %s647 = smul.addr %s646, 16
    %s648 = scalar_lea.hbm %s2, %s647
    %s649 = scalar_lea.vmem [#allocation8], 62
    %s650 = scalar_lea.sflag [#allocation2], 30
    // Predicated region
    $region138: #{tpu_custom_call.1} parent=1 // pred_check
      _
    $region139: #{tpu_custom_call.1} parent=1 // pred_check_branch
      %652 = sbr.rel target = $region141
    $region140: #{tpu_custom_call.1} parent=1 // pred_region
      %653 = sst [smem:[#allocation11]] [#allocation72]
      %654 = sst [smem:[#allocation12]] [#allocation71]
    $region141: #{tpu_custom_call.1} parent=1 // pred_fallthru
      _
    %656 = shalt.err (0)
    %s658 = sshll.u32 %s649, 4
    %s659 = int_to_ptr.vmem [resolvable:$true] %s658
    %661 = dma.hbm_to_vmem [thread:$0]  %s648, 16, %s659, %s650
    %s662 = sld [smem:[#allocation3 + $0x187]]
    %p663 = scmp.gt.s32.totalorder %s662, 0
    %s664 = scalar_select %p663, %s662, 0
    %p665 = scmp.lt.s32.totalorder %s664, 127
    %s666 = scalar_select %p665, %s664, 127
    %s667 = smul.addr %s666, 16
    %s668 = scalar_lea.hbm %s2, %s667
    %s669 = scalar_lea.vmem [#allocation8], 63
    %s670 = scalar_lea.sflag [#allocation2], 31
    // Predicated region
    $region142: #{tpu_custom_call.1} parent=1 // pred_check
      _
    $region143: #{tpu_custom_call.1} parent=1 // pred_check_branch
      %672 = sbr.rel target = $region145
    $region144: #{tpu_custom_call.1} parent=1 // pred_region
      %673 = sst [smem:[#allocation11]] [#allocation74]
      %674 = sst [smem:[#allocation12]] [#allocation73]
    $region145: #{tpu_custom_call.1} parent=1 // pred_fallthru
      _
    %676 = shalt.err (0)
    %s678 = sshll.u32 %s669, 4
    %s679 = int_to_ptr.vmem [resolvable:$true] %s678
    %681 = dma.hbm_to_vmem [thread:$0]  %s668, 16, %s679, %s670
    %s682 = sld [smem:[#allocation3 + $0x200]]
    %p683 = scmp.gt.s32.totalorder %s682, 0
    %s684 = scalar_select %p683, %s682, 0
    %p685 = scmp.lt.s32.totalorder %s684, 127
    %s686 = scalar_select %p685, %s684, 127
    %s687 = smul.addr %s686, 16
    %s688 = scalar_lea.hbm %s2, %s687
    %s689 = scalar_lea.vmem [#allocation8], 72
    %s690 = scalar_lea.sflag [#allocation2], 32
    // Predicated region
    $region146: #{tpu_custom_call.1} parent=1 // pred_check
      _
    $region147: #{tpu_custom_call.1} parent=1 // pred_check_branch
      %692 = sbr.rel target = $region149
    $region148: #{tpu_custom_call.1} parent=1 // pred_region
      %693 = sst [smem:[#allocation11]] [#allocation76]
      %694 = sst [smem:[#allocation12]] [#allocation75]
    $region149: #{tpu_custom_call.1} parent=1 // pred_fallthru
      _
    %696 = shalt.err (0)
    %s698 = sshll.u32 %s689, 4
    %s699 = int_to_ptr.vmem [resolvable:$true] %s698
    %701 = dma.hbm_to_vmem [thread:$0]  %s688, 16, %s699, %s690
    %s702 = sld [smem:[#allocation3 + $0x201]]
    %p703 = scmp.gt.s32.totalorder %s702, 0
    %s704 = scalar_select %p703, %s702, 0
    %p705 = scmp.lt.s32.totalorder %s704, 127
    %s706 = scalar_select %p705, %s704, 127
    %s707 = smul.addr %s706, 16
    %s708 = scalar_lea.hbm %s2, %s707
    %s709 = scalar_lea.vmem [#allocation8], 73
    %s710 = scalar_lea.sflag [#allocation2], 33
    // Predicated region
    $region150: #{tpu_custom_call.1} parent=1 // pred_check
      _
    $region151: #{tpu_custom_call.1} parent=1 // pred_check_branch
      %712 = sbr.rel target = $region153
    $region152: #{tpu_custom_call.1} parent=1 // pred_region
      %713 = sst [smem:[#allocation11]] [#allocation78]
      %714 = sst [smem:[#allocation12]] [#allocation77]
    $region153: #{tpu_custom_call.1} parent=1 // pred_fallthru
      _
    %716 = shalt.err (0)
    %s718 = sshll.u32 %s709, 4
    %s719 = int_to_ptr.vmem [resolvable:$true] %s718
    %721 = dma.hbm_to_vmem [thread:$0]  %s708, 16, %s719, %s710
    %s722 = sld [smem:[#allocation3 + $0x202]]
    %p723 = scmp.gt.s32.totalorder %s722, 0
    %s724 = scalar_select %p723, %s722, 0
    %p725 = scmp.lt.s32.totalorder %s724, 127
    %s726 = scalar_select %p725, %s724, 127
    %s727 = smul.addr %s726, 16
    %s728 = scalar_lea.hbm %s2, %s727
    %s729 = scalar_lea.vmem [#allocation8], 74
    %s730 = scalar_lea.sflag [#allocation2], 34
    // Predicated region
    $region154: #{tpu_custom_call.1} parent=1 // pred_check
      _
    $region155: #{tpu_custom_call.1} parent=1 // pred_check_branch
      %732 = sbr.rel target = $region157
    $region156: #{tpu_custom_call.1} parent=1 // pred_region
      %733 = sst [smem:[#allocation11]] [#allocation80]
      %734 = sst [smem:[#allocation12]] [#allocation79]
    $region157: #{tpu_custom_call.1} parent=1 // pred_fallthru
      _
    %736 = shalt.err (0)
    %s738 = sshll.u32 %s729, 4
    %s739 = int_to_ptr.vmem [resolvable:$true] %s738
    %741 = dma.hbm_to_vmem [thread:$0]  %s728, 16, %s739, %s730
    %s742 = sld [smem:[#allocation3 + $0x203]]
    %p743 = scmp.gt.s32.totalorder %s742, 0
    %s744 = scalar_select %p743, %s742, 0
    %p745 = scmp.lt.s32.totalorder %s744, 127
    %s746 = scalar_select %p745, %s744, 127
    %s747 = smul.addr %s746, 16
    %s748 = scalar_lea.hbm %s2, %s747
    %s749 = scalar_lea.vmem [#allocation8], 75
    %s750 = scalar_lea.sflag [#allocation2], 35
    // Predicated region
    $region158: #{tpu_custom_call.1} parent=1 // pred_check
      _
    $region159: #{tpu_custom_call.1} parent=1 // pred_check_branch
      %752 = sbr.rel target = $region161
    $region160: #{tpu_custom_call.1} parent=1 // pred_region
      %753 = sst [smem:[#allocation11]] [#allocation82]
      %754 = sst [smem:[#allocation12]] [#allocation81]
    $region161: #{tpu_custom_call.1} parent=1 // pred_fallthru
      _
    %756 = shalt.err (0)
    %s758 = sshll.u32 %s749, 4
    %s759 = int_to_ptr.vmem [resolvable:$true] %s758
    %761 = dma.hbm_to_vmem [thread:$0]  %s748, 16, %s759, %s750
    %s762 = sld [smem:[#allocation3 + $0x204]]
    %p763 = scmp.gt.s32.totalorder %s762, 0
    %s764 = scalar_select %p763, %s762, 0
    %p765 = scmp.lt.s32.totalorder %s764, 127
    %s766 = scalar_select %p765, %s764, 127
    %s767 = smul.addr %s766, 16
    %s768 = scalar_lea.hbm %s2, %s767
    %s769 = scalar_lea.vmem [#allocation8], 76
    %s770 = scalar_lea.sflag [#allocation2], 36
    // Predicated region
    $region162: #{tpu_custom_call.1} parent=1 // pred_check
      _
    $region163: #{tpu_custom_call.1} parent=1 // pred_check_branch
      %772 = sbr.rel target = $region165
    $region164: #{tpu_custom_call.1} parent=1 // pred_region
      %773 = sst [smem:[#allocation11]] [#allocation84]
      %774 = sst [smem:[#allocation12]] [#allocation83]
    $region165: #{tpu_custom_call.1} parent=1 // pred_fallthru
      _
    %776 = shalt.err (0)
    %s778 = sshll.u32 %s769, 4
    %s779 = int_to_ptr.vmem [resolvable:$true] %s778
    %781 = dma.hbm_to_vmem [thread:$0]  %s768, 16, %s779, %s770
    %s782 = sld [smem:[#allocation3 + $0x205]]
    %p783 = scmp.gt.s32.totalorder %s782, 0
    %s784 = scalar_select %p783, %s782, 0
    %p785 = scmp.lt.s32.totalorder %s784, 127
    %s786 = scalar_select %p785, %s784, 127
    %s787 = smul.addr %s786, 16
    %s788 = scalar_lea.hbm %s2, %s787
    %s789 = scalar_lea.vmem [#allocation8], 77
    %s790 = scalar_lea.sflag [#allocation2], 37
    // Predicated region
    $region166: #{tpu_custom_call.1} parent=1 // pred_check
      _
    $region167: #{tpu_custom_call.1} parent=1 // pred_check_branch
      %792 = sbr.rel target = $region169
    $region168: #{tpu_custom_call.1} parent=1 // pred_region
      %793 = sst [smem:[#allocation11]] [#allocation86]
      %794 = sst [smem:[#allocation12]] [#allocation85]
    $region169: #{tpu_custom_call.1} parent=1 // pred_fallthru
      _
    %796 = shalt.err (0)
    %s798 = sshll.u32 %s789, 4
    %s799 = int_to_ptr.vmem [resolvable:$true] %s798
    %801 = dma.hbm_to_vmem [thread:$0]  %s788, 16, %s799, %s790
    %s802 = sld [smem:[#allocation3 + $0x206]]
    %p803 = scmp.gt.s32.totalorder %s802, 0
    %s804 = scalar_select %p803, %s802, 0
    %p805 = scmp.lt.s32.totalorder %s804, 127
    %s806 = scalar_select %p805, %s804, 127
    %s807 = smul.addr %s806, 16
    %s808 = scalar_lea.hbm %s2, %s807
    %s809 = scalar_lea.vmem [#allocation8], 78
    %s810 = scalar_lea.sflag [#allocation2], 38
    // Predicated region
    $region170: #{tpu_custom_call.1} parent=1 // pred_check
      _
    $region171: #{tpu_custom_call.1} parent=1 // pred_check_branch
      %812 = sbr.rel target = $region173
    $region172: #{tpu_custom_call.1} parent=1 // pred_region
      %813 = sst [smem:[#allocation11]] [#allocation88]
      %814 = sst [smem:[#allocation12]] [#allocation87]
    $region173: #{tpu_custom_call.1} parent=1 // pred_fallthru
      _
    %816 = shalt.err (0)
    %s818 = sshll.u32 %s809, 4
    %s819 = int_to_ptr.vmem [resolvable:$true] %s818
    %821 = dma.hbm_to_vmem [thread:$0]  %s808, 16, %s819, %s810
    %s822 = sld [smem:[#allocation3 + $0x207]]
    %p823 = scmp.gt.s32.totalorder %s822, 0
    %s824 = scalar_select %p823, %s822, 0
    %p825 = scmp.lt.s32.totalorder %s824, 127
    %s826 = scalar_select %p825, %s824, 127
    %s827 = smul.addr %s826, 16
    %s828 = scalar_lea.hbm %s2, %s827
    %s829 = scalar_lea.vmem [#allocation8], 79
    %s830 = scalar_lea.sflag [#allocation2], 39
    // Predicated region
    $region174: #{tpu_custom_call.1} parent=1 // pred_check
      _
    $region175: #{tpu_custom_call.1} parent=1 // pred_check_branch
      %832 = sbr.rel target = $region177
    $region176: #{tpu_custom_call.1} parent=1 // pred_region
      %833 = sst [smem:[#allocation11]] [#allocation90]
      %834 = sst [smem:[#allocation12]] [#allocation89]
    $region177: #{tpu_custom_call.1} parent=1 // pred_fallthru
      _
    %836 = shalt.err (0)
    %s838 = sshll.u32 %s829, 4
    %s839 = int_to_ptr.vmem [resolvable:$true] %s838
    %841 = dma.hbm_to_vmem [thread:$0]  %s828, 16, %s839, %s830
    %s842 = sld [smem:[#allocation3 + $0x280]]
    %p843 = scmp.gt.s32.totalorder %s842, 0
    %s844 = scalar_select %p843, %s842, 0
    %p845 = scmp.lt.s32.totalorder %s844, 127
    %s846 = scalar_select %p845, %s844, 127
    %s847 = smul.addr %s846, 16
    %s848 = scalar_lea.hbm %s2, %s847
    %s849 = scalar_lea.vmem [#allocation8], 88
    %s850 = scalar_lea.sflag [#allocation2], 40
    // Predicated region
    $region178: #{tpu_custom_call.1} parent=1 // pred_check
      _
    $region179: #{tpu_custom_call.1} parent=1 // pred_check_branch
      %852 = sbr.rel target = $region181
    $region180: #{tpu_custom_call.1} parent=1 // pred_region
      %853 = sst [smem:[#allocation11]] [#allocation92]
      %854 = sst [smem:[#allocation12]] [#allocation91]
    $region181: #{tpu_custom_call.1} parent=1 // pred_fallthru
      _
    %856 = shalt.err (0)
    %s858 = sshll.u32 %s849, 4
    %s859 = int_to_ptr.vmem [resolvable:$true] %s858
    %861 = dma.hbm_to_vmem [thread:$0]  %s848, 16, %s859, %s850
    %s862 = sld [smem:[#allocation3 + $0x281]]
    %p863 = scmp.gt.s32.totalorder %s862, 0
    %s864 = scalar_select %p863, %s862, 0
    %p865 = scmp.lt.s32.totalorder %s864, 127
    %s866 = scalar_select %p865, %s864, 127
    %s867 = smul.addr %s866, 16
    %s868 = scalar_lea.hbm %s2, %s867
    %s869 = scalar_lea.vmem [#allocation8], 89
    %s870 = scalar_lea.sflag [#allocation2], 41
    // Predicated region
    $region182: #{tpu_custom_call.1} parent=1 // pred_check
      _
    $region183: #{tpu_custom_call.1} parent=1 // pred_check_branch
      %872 = sbr.rel target = $region185
    $region184: #{tpu_custom_call.1} parent=1 // pred_region
      %873 = sst [smem:[#allocation11]] [#allocation94]
      %874 = sst [smem:[#allocation12]] [#allocation93]
    $region185: #{tpu_custom_call.1} parent=1 // pred_fallthru
      _
    %876 = shalt.err (0)
    %s878 = sshll.u32 %s869, 4
    %s879 = int_to_ptr.vmem [resolvable:$true] %s878
    %881 = dma.hbm_to_vmem [thread:$0]  %s868, 16, %s879, %s870
    %s882 = sld [smem:[#allocation3 + $0x282]]
    %p883 = scmp.gt.s32.totalorder %s882, 0
    %s884 = scalar_select %p883, %s882, 0
    %p885 = scmp.lt.s32.totalorder %s884, 127
    %s886 = scalar_select %p885, %s884, 127
    %s887 = smul.addr %s886, 16
    %s888 = scalar_lea.hbm %s2, %s887
    %s889 = scalar_lea.vmem [#allocation8], 90
    %s890 = scalar_lea.sflag [#allocation2], 42
    // Predicated region
    $region186: #{tpu_custom_call.1} parent=1 // pred_check
      _
    $region187: #{tpu_custom_call.1} parent=1 // pred_check_branch
      %892 = sbr.rel target = $region189
    $region188: #{tpu_custom_call.1} parent=1 // pred_region
      %893 = sst [smem:[#allocation11]] [#allocation96]
      %894 = sst [smem:[#allocation12]] [#allocation95]
    $region189: #{tpu_custom_call.1} parent=1 // pred_fallthru
      _
    %896 = shalt.err (0)
    %s898 = sshll.u32 %s889, 4
    %s899 = int_to_ptr.vmem [resolvable:$true] %s898
    %901 = dma.hbm_to_vmem [thread:$0]  %s888, 16, %s899, %s890
    %s902 = sld [smem:[#allocation3 + $0x283]]
    %p903 = scmp.gt.s32.totalorder %s902, 0
    %s904 = scalar_select %p903, %s902, 0
    %p905 = scmp.lt.s32.totalorder %s904, 127
    %s906 = scalar_select %p905, %s904, 127
    %s907 = smul.addr %s906, 16
    %s908 = scalar_lea.hbm %s2, %s907
    %s909 = scalar_lea.vmem [#allocation8], 91
    %s910 = scalar_lea.sflag [#allocation2], 43
    // Predicated region
    $region190: #{tpu_custom_call.1} parent=1 // pred_check
      _
    $region191: #{tpu_custom_call.1} parent=1 // pred_check_branch
      %912 = sbr.rel target = $region193
    $region192: #{tpu_custom_call.1} parent=1 // pred_region
      %913 = sst [smem:[#allocation11]] [#allocation98]
      %914 = sst [smem:[#allocation12]] [#allocation97]
    $region193: #{tpu_custom_call.1} parent=1 // pred_fallthru
      _
    %916 = shalt.err (0)
    %s918 = sshll.u32 %s909, 4
    %s919 = int_to_ptr.vmem [resolvable:$true] %s918
    %921 = dma.hbm_to_vmem [thread:$0]  %s908, 16, %s919, %s910
    %s922 = sld [smem:[#allocation3 + $0x284]]
    %p923 = scmp.gt.s32.totalorder %s922, 0
    %s924 = scalar_select %p923, %s922, 0
    %p925 = scmp.lt.s32.totalorder %s924, 127
    %s926 = scalar_select %p925, %s924, 127
    %s927 = smul.addr %s926, 16
    %s928 = scalar_lea.hbm %s2, %s927
    %s929 = scalar_lea.vmem [#allocation8], 92
    %s930 = scalar_lea.sflag [#allocation2], 44
    // Predicated region
    $region194: #{tpu_custom_call.1} parent=1 // pred_check
      _
    $region195: #{tpu_custom_call.1} parent=1 // pred_check_branch
      %932 = sbr.rel target = $region197
    $region196: #{tpu_custom_call.1} parent=1 // pred_region
      %933 = sst [smem:[#allocation11]] [#allocation100]
      %934 = sst [smem:[#allocation12]] [#allocation99]
    $region197: #{tpu_custom_call.1} parent=1 // pred_fallthru
      _
    %936 = shalt.err (0)
    %s938 = sshll.u32 %s929, 4
    %s939 = int_to_ptr.vmem [resolvable:$true] %s938
    %941 = dma.hbm_to_vmem [thread:$0]  %s928, 16, %s939, %s930
    %s942 = sld [smem:[#allocation3 + $0x285]]
    %p943 = scmp.gt.s32.totalorder %s942, 0
    %s944 = scalar_select %p943, %s942, 0
    %p945 = scmp.lt.s32.totalorder %s944, 127
    %s946 = scalar_select %p945, %s944, 127
    %s947 = smul.addr %s946, 16
    %s948 = scalar_lea.hbm %s2, %s947
    %s949 = scalar_lea.vmem [#allocation8], 93
    %s950 = scalar_lea.sflag [#allocation2], 45
    // Predicated region
    $region198: #{tpu_custom_call.1} parent=1 // pred_check
      _
    $region199: #{tpu_custom_call.1} parent=1 // pred_check_branch
      %952 = sbr.rel target = $region201
    $region200: #{tpu_custom_call.1} parent=1 // pred_region
      %953 = sst [smem:[#allocation11]] [#allocation102]
      %954 = sst [smem:[#allocation12]] [#allocation101]
    $region201: #{tpu_custom_call.1} parent=1 // pred_fallthru
      _
    %956 = shalt.err (0)
    %s958 = sshll.u32 %s949, 4
    %s959 = int_to_ptr.vmem [resolvable:$true] %s958
    %961 = dma.hbm_to_vmem [thread:$0]  %s948, 16, %s959, %s950
    %s962 = sld [smem:[#allocation3 + $0x286]]
    %p963 = scmp.gt.s32.totalorder %s962, 0
    %s964 = scalar_select %p963, %s962, 0
    %p965 = scmp.lt.s32.totalorder %s964, 127
    %s966 = scalar_select %p965, %s964, 127
    %s967 = smul.addr %s966, 16
    %s968 = scalar_lea.hbm %s2, %s967
    %s969 = scalar_lea.vmem [#allocation8], 94
    %s970 = scalar_lea.sflag [#allocation2], 46
    // Predicated region
    $region202: #{tpu_custom_call.1} parent=1 // pred_check
      _
    $region203: #{tpu_custom_call.1} parent=1 // pred_check_branch
      %972 = sbr.rel target = $region205
    $region204: #{tpu_custom_call.1} parent=1 // pred_region
      %973 = sst [smem:[#allocation11]] [#allocation104]
      %974 = sst [smem:[#allocation12]] [#allocation103]
    $region205: #{tpu_custom_call.1} parent=1 // pred_fallthru
      _
    %976 = shalt.err (0)
    %s978 = sshll.u32 %s969, 4
    %s979 = int_to_ptr.vmem [resolvable:$true] %s978
    %981 = dma.hbm_to_vmem [thread:$0]  %s968, 16, %s979, %s970
    %s982 = sld [smem:[#allocation3 + $0x287]]
    %p983 = scmp.gt.s32.totalorder %s982, 0
    %s984 = scalar_select %p983, %s982, 0
    %p985 = scmp.lt.s32.totalorder %s984, 127
    %s986 = scalar_select %p985, %s984, 127
    %s987 = smul.addr %s986, 16
    %s988 = scalar_lea.hbm %s2, %s987
    %s989 = scalar_lea.vmem [#allocation8], 95
    %s990 = scalar_lea.sflag [#allocation2], 47
    // Predicated region
    $region206: #{tpu_custom_call.1} parent=1 // pred_check
      _
    $region207: #{tpu_custom_call.1} parent=1 // pred_check_branch
      %992 = sbr.rel target = $region209
    $region208: #{tpu_custom_call.1} parent=1 // pred_region
      %993 = sst [smem:[#allocation11]] [#allocation106]
      %994 = sst [smem:[#allocation12]] [#allocation105]
    $region209: #{tpu_custom_call.1} parent=1 // pred_fallthru
      _
    %996 = shalt.err (0)
    %s998 = sshll.u32 %s989, 4
    %s999 = int_to_ptr.vmem [resolvable:$true] %s998
    %1001 = dma.hbm_to_vmem [thread:$0]  %s988, 16, %s999, %s990
    %s1002 = smul.u32 1, 1
    %s1003 = sshll.u32 %s1002, 4
    %1004 = dma.done [#allocation2], %s1003
    %s1005 = sshll.u32 %s1002, 4
    %1006 = dma.done %s70, %s1005
    %s1007 = sshll.u32 %s1002, 4
    %1008 = dma.done %s90, %s1007
    %s1009 = sshll.u32 %s1002, 4
    %1010 = dma.done %s110, %s1009
    %s1011 = sshll.u32 %s1002, 4
    %1012 = dma.done %s130, %s1011
    %s1013 = sshll.u32 %s1002, 4
    %1014 = dma.done %s150, %s1013
    %s1015 = sshll.u32 %s1002, 4
    %1016 = dma.done %s170, %s1015
    %s1017 = sshll.u32 %s1002, 4
    %1018 = dma.done %s190, %s1017
    %s1019 = sshll.u32 %s1002, 4
    %1020 = dma.done %s210, %s1019
    %s1021 = sshll.u32 %s1002, 4
    %1022 = dma.done %s230, %s1021
    %s1023 = sshll.u32 %s1002, 4
    %1024 = dma.done %s250, %s1023
    %s1025 = sshll.u32 %s1002, 4
    %1026 = dma.done %s270, %s1025
    %s1027 = sshll.u32 %s1002, 4
    %1028 = dma.done %s290, %s1027
    %s1029 = sshll.u32 %s1002, 4
    %1030 = dma.done %s310, %s1029
    %s1031 = sshll.u32 %s1002, 4
    %1032 = dma.done %s330, %s1031
    %s1033 = sshll.u32 %s1002, 4
    %1034 = dma.done %s350, %s1033
    %s1035 = sshll.u32 %s1002, 4
    %1036 = dma.done %s370, %s1035
    %s1037 = sshll.u32 %s1002, 4
    %1038 = dma.done %s390, %s1037
    %s1039 = sshll.u32 %s1002, 4
    %1040 = dma.done %s410, %s1039
    %s1041 = sshll.u32 %s1002, 4
    %1042 = dma.done %s430, %s1041
    %s1043 = sshll.u32 %s1002, 4
    %1044 = dma.done %s450, %s1043
    %s1045 = sshll.u32 %s1002, 4
    %1046 = dma.done %s470, %s1045
    %s1047 = sshll.u32 %s1002, 4
    %1048 = dma.done %s490, %s1047
    %s1049 = sshll.u32 %s1002, 4
    %1050 = dma.done %s510, %s1049
    %s1051 = sshll.u32 %s1002, 4
    %1052 = dma.done %s530, %s1051
    %s1053 = sshll.u32 %s1002, 4
    %1054 = dma.done %s550, %s1053
    %s1055 = sshll.u32 %s1002, 4
    %1056 = dma.done %s570, %s1055
    %s1057 = sshll.u32 %s1002, 4
    %1058 = dma.done %s590, %s1057
    %s1059 = sshll.u32 %s1002, 4
    %1060 = dma.done %s610, %s1059
    %s1061 = sshll.u32 %s1002, 4
    %1062 = dma.done %s630, %s1061
    %s1063 = sshll.u32 %s1002, 4
    %1064 = dma.done %s650, %s1063
    %s1065 = sshll.u32 %s1002, 4
    %1066 = dma.done %s670, %s1065
    %s1067 = sshll.u32 %s1002, 4
    %1068 = dma.done %s690, %s1067
    %s1069 = sshll.u32 %s1002, 4
    %1070 = dma.done %s710, %s1069
    %s1071 = sshll.u32 %s1002, 4
    %1072 = dma.done %s730, %s1071
    %s1073 = sshll.u32 %s1002, 4
    %1074 = dma.done %s750, %s1073
    %s1075 = sshll.u32 %s1002, 4
    %1076 = dma.done %s770, %s1075
    %s1077 = sshll.u32 %s1002, 4
    %1078 = dma.done %s790, %s1077
    %s1079 = sshll.u32 %s1002, 4
    %1080 = dma.done %s810, %s1079
    %s1081 = sshll.u32 %s1002, 4
    %1082 = dma.done %s830, %s1081
    %s1083 = sshll.u32 %s1002, 4
    %1084 = dma.done %s850, %s1083
    %s1085 = sshll.u32 %s1002, 4
    %1086 = dma.done %s870, %s1085
    %s1087 = sshll.u32 %s1002, 4
    %1088 = dma.done %s890, %s1087
    %s1089 = sshll.u32 %s1002, 4
    %1090 = dma.done %s910, %s1089
    %s1091 = sshll.u32 %s1002, 4
    %1092 = dma.done %s930, %s1091
    %s1093 = sshll.u32 %s1002, 4
    %1094 = dma.done %s950, %s1093
    %s1095 = sshll.u32 %s1002, 4
    %1096 = dma.done %s970, %s1095
    %s1097 = sshll.u32 %s1002, 4
    %1098 = dma.done %s990, %s1097
    // Predicated region
    $region210: #{tpu_custom_call.1} parent=1 // pred_check
      _
    $region211: #{tpu_custom_call.1} parent=1 // pred_check_branch
      %1100 = sbr.rel (0) target = $region213
    $region212: #{tpu_custom_call.1} parent=1 // pred_region
      %s1102 = ssub.s32 1536, 1536
      %1103 = vsyncadd [#allocation5], %s1102
      %s1104 = sshll.u32 [#allocation8], 4
      %s1105 = int_to_ptr.vmem [resolvable:$true] %s1104
      %1110 = dma.vmem_to_hbm [thread:$0]  %s1105, 1536, %s3, [#allocation5], 128, 128, 8
    $region213: #{tpu_custom_call.1} parent=1 // pred_fallthru
      _
    // Predicated region
    $region214: #{tpu_custom_call.1} parent=1 // pred_check
      _
    $region215: #{tpu_custom_call.1} parent=1 // pred_check_branch
      %1112 = sbr.rel (0) target = $region217
    $region216: #{tpu_custom_call.1} parent=1 // pred_region
      %1113 = dma.done [#allocation5], 1536
    $region217: #{tpu_custom_call.1} parent=1 // pred_fallthru
      _
    %1114 = vsyncpa [#allocation4], 1
    %1115 = vsyncpa [#allocation5], 1
    %1116 = vsyncpa [#allocation6], 1
  %1117 = vsyncmov [#allocation2]
  %s1118 = vpop.sfrf %1117
  %p1119 = scmp.eq.s32.totalorder %s1118, 0
  %p1120 = pneg %p1119
  %1122 = shalt.err (%p1120)
  %s1123 = scalar_lea.sflag [#allocation2], 1
  %1124 = vsyncmov %s1123
  %s1125 = vpop.sfrf %1124
  %p1126 = scmp.eq.s32.totalorder %s1125, 0
  %p1127 = pneg %p1126
  %1129 = shalt.err (%p1127)
  %s1130 = scalar_lea.sflag [#allocation2], 2
  %1131 = vsyncmov %s1130
  %s1132 = vpop.sfrf %1131
  %p1133 = scmp.eq.s32.totalorder %s1132, 0
  %p1134 = pneg %p1133
  %1136 = shalt.err (%p1134)
  %s1137 = scalar_lea.sflag [#allocation2], 3
  %1138 = vsyncmov %s1137
  %s1139 = vpop.sfrf %1138
  %p1140 = scmp.eq.s32.totalorder %s1139, 0
  %p1141 = pneg %p1140
  %1143 = shalt.err (%p1141)
  %s1144 = scalar_lea.sflag [#allocation2], 4
  %1145 = vsyncmov %s1144
  %s1146 = vpop.sfrf %1145
  %p1147 = scmp.eq.s32.totalorder %s1146, 0
  %p1148 = pneg %p1147
  %1150 = shalt.err (%p1148)
  %s1151 = scalar_lea.sflag [#allocation2], 5
  %1152 = vsyncmov %s1151
  %s1153 = vpop.sfrf %1152
  %p1154 = scmp.eq.s32.totalorder %s1153, 0
  %p1155 = pneg %p1154
  %1157 = shalt.err (%p1155)
  %s1158 = scalar_lea.sflag [#allocation2], 6
  %1159 = vsyncmov %s1158
  %s1160 = vpop.sfrf %1159
  %p1161 = scmp.eq.s32.totalorder %s1160, 0
  %p1162 = pneg %p1161
  %1164 = shalt.err (%p1162)
  %s1165 = scalar_lea.sflag [#allocation2], 7
  %1166 = vsyncmov %s1165
  %s1167 = vpop.sfrf %1166
  %p1168 = scmp.eq.s32.totalorder %s1167, 0
  %p1169 = pneg %p1168
  %1171 = shalt.err (%p1169)
  %s1172 = scalar_lea.sflag [#allocation2], 8
  %1173 = vsyncmov %s1172
  %s1174 = vpop.sfrf %1173
  %p1175 = scmp.eq.s32.totalorder %s1174, 0
  %p1176 = pneg %p1175
  %1178 = shalt.err (%p1176)
  %s1179 = scalar_lea.sflag [#allocation2], 9
  %1180 = vsyncmov %s1179
  %s1181 = vpop.sfrf %1180
  %p1182 = scmp.eq.s32.totalorder %s1181, 0
  %p1183 = pneg %p1182
  %1185 = shalt.err (%p1183)
  %s1186 = scalar_lea.sflag [#allocation2], 10
  %1187 = vsyncmov %s1186
  %s1188 = vpop.sfrf %1187
  %p1189 = scmp.eq.s32.totalorder %s1188, 0
  %p1190 = pneg %p1189
  %1192 = shalt.err (%p1190)
  %s1193 = scalar_lea.sflag [#allocation2], 11
  %1194 = vsyncmov %s1193
  %s1195 = vpop.sfrf %1194
  %p1196 = scmp.eq.s32.totalorder %s1195, 0
  %p1197 = pneg %p1196
  %1199 = shalt.err (%p1197)
  %s1200 = scalar_lea.sflag [#allocation2], 12
  %1201 = vsyncmov %s1200
  %s1202 = vpop.sfrf %1201
  %p1203 = scmp.eq.s32.totalorder %s1202, 0
  %p1204 = pneg %p1203
  %1206 = shalt.err (%p1204)
  %s1207 = scalar_lea.sflag [#allocation2], 13
  %1208 = vsyncmov %s1207
  %s1209 = vpop.sfrf %1208
  %p1210 = scmp.eq.s32.totalorder %s1209, 0
  %p1211 = pneg %p1210
  %1213 = shalt.err (%p1211)
  %s1214 = scalar_lea.sflag [#allocation2], 14
  %1215 = vsyncmov %s1214
  %s1216 = vpop.sfrf %1215
  %p1217 = scmp.eq.s32.totalorder %s1216, 0
  %p1218 = pneg %p1217
  %1220 = shalt.err (%p1218)
  %s1221 = scalar_lea.sflag [#allocation2], 15
  %1222 = vsyncmov %s1221
  %s1223 = vpop.sfrf %1222
  %p1224 = scmp.eq.s32.totalorder %s1223, 0
  %p1225 = pneg %p1224
  %1227 = shalt.err (%p1225)
  %s1228 = scalar_lea.sflag [#allocation2], 16
  %1229 = vsyncmov %s1228
  %s1230 = vpop.sfrf %1229
  %p1231 = scmp.eq.s32.totalorder %s1230, 0
  %p1232 = pneg %p1231
  %1234 = shalt.err (%p1232)
  %s1235 = scalar_lea.sflag [#allocation2], 17
  %1236 = vsyncmov %s1235
  %s1237 = vpop.sfrf %1236
  %p1238 = scmp.eq.s32.totalorder %s1237, 0
  %p1239 = pneg %p1238
  %1241 = shalt.err (%p1239)
  %s1242 = scalar_lea.sflag [#allocation2], 18
  %1243 = vsyncmov %s1242
  %s1244 = vpop.sfrf %1243
  %p1245 = scmp.eq.s32.totalorder %s1244, 0
  %p1246 = pneg %p1245
  %1248 = shalt.err (%p1246)
  %s1249 = scalar_lea.sflag [#allocation2], 19
  %1250 = vsyncmov %s1249
  %s1251 = vpop.sfrf %1250
  %p1252 = scmp.eq.s32.totalorder %s1251, 0
  %p1253 = pneg %p1252
  %1255 = shalt.err (%p1253)
  %s1256 = scalar_lea.sflag [#allocation2], 20
  %1257 = vsyncmov %s1256
  %s1258 = vpop.sfrf %1257
  %p1259 = scmp.eq.s32.totalorder %s1258, 0
  %p1260 = pneg %p1259
  %1262 = shalt.err (%p1260)
  %s1263 = scalar_lea.sflag [#allocation2], 21
  %1264 = vsyncmov %s1263
  %s1265 = vpop.sfrf %1264
  %p1266 = scmp.eq.s32.totalorder %s1265, 0
  %p1267 = pneg %p1266
  %1269 = shalt.err (%p1267)
  %s1270 = scalar_lea.sflag [#allocation2], 22
  %1271 = vsyncmov %s1270
  %s1272 = vpop.sfrf %1271
  %p1273 = scmp.eq.s32.totalorder %s1272, 0
  %p1274 = pneg %p1273
  %1276 = shalt.err (%p1274)
  %s1277 = scalar_lea.sflag [#allocation2], 23
  %1278 = vsyncmov %s1277
  %s1279 = vpop.sfrf %1278
  %p1280 = scmp.eq.s32.totalorder %s1279, 0
  %p1281 = pneg %p1280
  %1283 = shalt.err (%p1281)
  %s1284 = scalar_lea.sflag [#allocation2], 24
  %1285 = vsyncmov %s1284
  %s1286 = vpop.sfrf %1285
  %p1287 = scmp.eq.s32.totalorder %s1286, 0
  %p1288 = pneg %p1287
  %1290 = shalt.err (%p1288)
  %s1291 = scalar_lea.sflag [#allocation2], 25
  %1292 = vsyncmov %s1291
  %s1293 = vpop.sfrf %1292
  %p1294 = scmp.eq.s32.totalorder %s1293, 0
  %p1295 = pneg %p1294
  %1297 = shalt.err (%p1295)
  %s1298 = scalar_lea.sflag [#allocation2], 26
  %1299 = vsyncmov %s1298
  %s1300 = vpop.sfrf %1299
  %p1301 = scmp.eq.s32.totalorder %s1300, 0
  %p1302 = pneg %p1301
  %1304 = shalt.err (%p1302)
  %s1305 = scalar_lea.sflag [#allocation2], 27
  %1306 = vsyncmov %s1305
  %s1307 = vpop.sfrf %1306
  %p1308 = scmp.eq.s32.totalorder %s1307, 0
  %p1309 = pneg %p1308
  %1311 = shalt.err (%p1309)
  %s1312 = scalar_lea.sflag [#allocation2], 28
  %1313 = vsyncmov %s1312
  %s1314 = vpop.sfrf %1313
  %p1315 = scmp.eq.s32.totalorder %s1314, 0
  %p1316 = pneg %p1315
  %1318 = shalt.err (%p1316)
  %s1319 = scalar_lea.sflag [#allocation2], 29
  %1320 = vsyncmov %s1319
  %s1321 = vpop.sfrf %1320
  %p1322 = scmp.eq.s32.totalorder %s1321, 0
  %p1323 = pneg %p1322
  %1325 = shalt.err (%p1323)
  %s1326 = scalar_lea.sflag [#allocation2], 30
  %1327 = vsyncmov %s1326
  %s1328 = vpop.sfrf %1327
  %p1329 = scmp.eq.s32.totalorder %s1328, 0
  %p1330 = pneg %p1329
  %1332 = shalt.err (%p1330)
  %s1333 = scalar_lea.sflag [#allocation2], 31
  %1334 = vsyncmov %s1333
  %s1335 = vpop.sfrf %1334
  %p1336 = scmp.eq.s32.totalorder %s1335, 0
  %p1337 = pneg %p1336
  %1339 = shalt.err (%p1337)
  %s1340 = scalar_lea.sflag [#allocation2], 32
  %1341 = vsyncmov %s1340
  %s1342 = vpop.sfrf %1341
  %p1343 = scmp.eq.s32.totalorder %s1342, 0
  %p1344 = pneg %p1343
  %1346 = shalt.err (%p1344)
  %s1347 = scalar_lea.sflag [#allocation2], 33
  %1348 = vsyncmov %s1347
  %s1349 = vpop.sfrf %1348
  %p1350 = scmp.eq.s32.totalorder %s1349, 0
  %p1351 = pneg %p1350
  %1353 = shalt.err (%p1351)
  %s1354 = scalar_lea.sflag [#allocation2], 34
  %1355 = vsyncmov %s1354
  %s1356 = vpop.sfrf %1355
  %p1357 = scmp.eq.s32.totalorder %s1356, 0
  %p1358 = pneg %p1357
  %1360 = shalt.err (%p1358)
  %s1361 = scalar_lea.sflag [#allocation2], 35
  %1362 = vsyncmov %s1361
  %s1363 = vpop.sfrf %1362
  %p1364 = scmp.eq.s32.totalorder %s1363, 0
  %p1365 = pneg %p1364
  %1367 = shalt.err (%p1365)
  %s1368 = scalar_lea.sflag [#allocation2], 36
  %1369 = vsyncmov %s1368
  %s1370 = vpop.sfrf %1369
  %p1371 = scmp.eq.s32.totalorder %s1370, 0
  %p1372 = pneg %p1371
  %1374 = shalt.err (%p1372)
  %s1375 = scalar_lea.sflag [#allocation2], 37
  %1376 = vsyncmov %s1375
  %s1377 = vpop.sfrf %1376
  %p1378 = scmp.eq.s32.totalorder %s1377, 0
  %p1379 = pneg %p1378
  %1381 = shalt.err (%p1379)
  %s1382 = scalar_lea.sflag [#allocation2], 38
  %1383 = vsyncmov %s1382
  %s1384 = vpop.sfrf %1383
  %p1385 = scmp.eq.s32.totalorder %s1384, 0
  %p1386 = pneg %p1385
  %1388 = shalt.err (%p1386)
  %s1389 = scalar_lea.sflag [#allocation2], 39
  %1390 = vsyncmov %s1389
  %s1391 = vpop.sfrf %1390
  %p1392 = scmp.eq.s32.totalorder %s1391, 0
  %p1393 = pneg %p1392
  %1395 = shalt.err (%p1393)
  %s1396 = scalar_lea.sflag [#allocation2], 40
  %1397 = vsyncmov %s1396
  %s1398 = vpop.sfrf %1397
  %p1399 = scmp.eq.s32.totalorder %s1398, 0
  %p1400 = pneg %p1399
  %1402 = shalt.err (%p1400)
  %s1403 = scalar_lea.sflag [#allocation2], 41
  %1404 = vsyncmov %s1403
  %s1405 = vpop.sfrf %1404
  %p1406 = scmp.eq.s32.totalorder %s1405, 0
  %p1407 = pneg %p1406
  %1409 = shalt.err (%p1407)
  %s1410 = scalar_lea.sflag [#allocation2], 42
  %1411 = vsyncmov %s1410
  %s1412 = vpop.sfrf %1411
  %p1413 = scmp.eq.s32.totalorder %s1412, 0
  %p1414 = pneg %p1413
  %1416 = shalt.err (%p1414)
  %s1417 = scalar_lea.sflag [#allocation2], 43
  %1418 = vsyncmov %s1417
  %s1419 = vpop.sfrf %1418
  %p1420 = scmp.eq.s32.totalorder %s1419, 0
  %p1421 = pneg %p1420
  %1423 = shalt.err (%p1421)
  %s1424 = scalar_lea.sflag [#allocation2], 44
  %1425 = vsyncmov %s1424
  %s1426 = vpop.sfrf %1425
  %p1427 = scmp.eq.s32.totalorder %s1426, 0
  %p1428 = pneg %p1427
  %1430 = shalt.err (%p1428)
  %s1431 = scalar_lea.sflag [#allocation2], 45
  %1432 = vsyncmov %s1431
  %s1433 = vpop.sfrf %1432
  %p1434 = scmp.eq.s32.totalorder %s1433, 0
  %p1435 = pneg %p1434
  %1437 = shalt.err (%p1435)
  %s1438 = scalar_lea.sflag [#allocation2], 46
  %1439 = vsyncmov %s1438
  %s1440 = vpop.sfrf %1439
  %p1441 = scmp.eq.s32.totalorder %s1440, 0
  %p1442 = pneg %p1441
  %1444 = shalt.err (%p1442)
  %s1445 = scalar_lea.sflag [#allocation2], 47
  %1446 = vsyncmov %s1445
  %s1447 = vpop.sfrf %1446
  %p1448 = scmp.eq.s32.totalorder %s1447, 0
  %p1449 = pneg %p1448
  %1451 = shalt.err (%p1449)

</llo_original>
